<compile_context>
chip_gen: v6e
topology: v6e:2x2x1
jax: 0.10.0
libtpu: 0.0.40
codegen_flags: <defaults>
</compile_context>

<pallas_src>
import jax
import jax.numpy as jnp
from jax.experimental import pallas as pl
from jax.experimental.pallas import tpu as pltpu

IN_FEATURES = 28 * 28       # 784
HIDDEN = 400
HIDDEN_PAD = 512            # lane/MXU aligned hidden width (zero padded)
OUT_FEATURES = 10
OUT_PAD = 128               # lane-dense fc2 output width
NEG_PAD_LOGIT = -1e30       # padded logits: exact no-op for max / logsumexp


def _bnn_forward_kernel(
    x_ref,                    # (B, 784)        f32  (cast to bf16 in-kernel)
    w1mu_ref, w1s2_ref,       # (784, 512)      bf16 (mu, sigma^2)
    b1mu_ref, b1s2_ref,       # (1, 512)        f32
    w2mu_ref, w2s2_ref,       # (512, 128)      bf16
    b2mu_ref, b2s2_ref,       # (1, 128)        f32
    eps1_ref,                 # (B, 512)        f32
    eps2_ref,                 # (B, 128)        f32
    out_ref,                  # (B, 128)        f32
):
    # --- fc1 via local reparameterization ---------------------------------
    x = x_ref[...].astype(jnp.bfloat16)            # free VPU cast, halves x HBM traffic
    xsq = x * x

    h_mu = jnp.dot(x, w1mu_ref[...], preferred_element_type=jnp.float32) + b1mu_ref[...]
    h_var = jnp.dot(xsq, w1s2_ref[...], preferred_element_type=jnp.float32) + b1s2_ref[...]
    h_var = jnp.maximum(h_var, 0.0)                # guard against tiny negative round-off
    h = h_mu + jnp.sqrt(h_var) * eps1_ref[...]
    # padded hidden cols: mu = sigma^2 = 0 -> h = 0 -> relu(0) = 0 -> exact no-op in fc2
    h = jnp.maximum(h, 0.0).astype(jnp.bfloat16)
    hsq = h * h

    # --- fc2 via local reparameterization ---------------------------------
    z_mu = jnp.dot(h, w2mu_ref[...], preferred_element_type=jnp.float32) + b2mu_ref[...]
    z_var = jnp.dot(hsq, w2s2_ref[...], preferred_element_type=jnp.float32) + b2s2_ref[...]
    z_var = jnp.maximum(z_var, 0.0)
    z = z_mu + jnp.sqrt(z_var) * eps2_ref[...]
    # padded output cols: mu = -1e30, var = 0 -> z = -1e30 exactly (ignored by softmax)

    # --- numerically stable log_softmax over dim=1 (f32) -------------------
    m = jnp.max(z, axis=1, keepdims=True)
    lse = jnp.log(jnp.sum(jnp.exp(z - m), axis=1, keepdims=True)) + m
    out_ref[...] = z - lse


def init_params(key):
    """Deterministic init matching BayesianNetwork.__init__ shapes/distributions
    (PyTorch layout: weights are (out_features, in_features))."""
    ks = jax.random.split(key, 4)
    return {
        "fc1_weight_mu": 0.01 * jax.random.normal(ks[0], (HIDDEN, IN_FEATURES), jnp.float32),
        "fc1_weight_logsigma": jnp.full((HIDDEN, IN_FEATURES), -5.0, jnp.float32),
        "fc1_bias_mu": 0.01 * jax.random.normal(ks[1], (HIDDEN,), jnp.float32),
        "fc1_bias_logsigma": jnp.full((HIDDEN,), -5.0, jnp.float32),
        "fc2_weight_mu": 0.01 * jax.random.normal(ks[2], (OUT_FEATURES, HIDDEN), jnp.float32),
        "fc2_weight_logsigma": jnp.full((OUT_FEATURES, HIDDEN), -5.0, jnp.float32),
        "fc2_bias_mu": 0.01 * jax.random.normal(ks[3], (OUT_FEATURES,), jnp.float32),
        "fc2_bias_logsigma": jnp.full((OUT_FEATURES,), -5.0, jnp.float32),
    }


def prepare_inference_params(params):
    """One-time prep (NOT in the per-call path):
       * transpose to (in, out) so the kernel does plain x @ W,
       * sigma^2 = exp(2*logsigma) precomputed (local reparameterization needs variance),
       * zero-pad hidden dim 400 -> 512 (mu = sigma^2 = 0 in the pad -> exact no-op),
       * pad fc2 output 10 -> 128 lanes (mu = -1e30, sigma^2 = 0 -> exact under softmax),
       * matmul operands cast to bf16 (MXU-native, halves weight HBM traffic),
         biases / variances of biases kept f32."""
    pad_h = HIDDEN_PAD - HIDDEN
    pad_o = OUT_PAD - OUT_FEATURES

    w1_mu = jnp.pad(params["fc1_weight_mu"].T, ((0, 0), (0, pad_h)))
    w1_s2 = jnp.pad(jnp.exp(2.0 * params["fc1_weight_logsigma"].T), ((0, 0), (0, pad_h)))
    b1_mu = jnp.pad(params["fc1_bias_mu"].reshape(1, -1), ((0, 0), (0, pad_h)))
    b1_s2 = jnp.pad(jnp.exp(2.0 * params["fc1_bias_logsigma"]).reshape(1, -1),
                    ((0, 0), (0, pad_h)))

    w2_mu = jnp.pad(params["fc2_weight_mu"].T, ((0, pad_h), (0, pad_o)))
    w2_s2 = jnp.pad(jnp.exp(2.0 * params["fc2_weight_logsigma"].T), ((0, pad_h), (0, pad_o)))
    b2_mu = jnp.pad(params["fc2_bias_mu"].reshape(1, -1), ((0, 0), (0, pad_o)),
                    constant_values=NEG_PAD_LOGIT)
    b2_s2 = jnp.pad(jnp.exp(2.0 * params["fc2_bias_logsigma"]).reshape(1, -1),
                    ((0, 0), (0, pad_o)))

    return {
        "w1_mu": w1_mu.astype(jnp.bfloat16),       # (784, 512)
        "w1_sigma2": w1_s2.astype(jnp.bfloat16),   # (784, 512)
        "b1_mu": b1_mu.astype(jnp.float32),        # (1, 512)
        "b1_sigma2": b1_s2.astype(jnp.float32),    # (1, 512)
        "w2_mu": w2_mu.astype(jnp.bfloat16),       # (512, 128)
        "w2_sigma2": w2_s2.astype(jnp.bfloat16),   # (512, 128)
        "b2_mu": b2_mu.astype(jnp.float32),        # (1, 128)
        "b2_sigma2": b2_s2.astype(jnp.float32),    # (1, 128)
    }


def _draw_eps(key, batch):
    """Activation-space noise for the local reparameterization trick.
    Only B*(512+128) normals instead of a ~400K-element weight-noise tensor."""
    k1, k2 = jax.random.split(key)
    eps1 = jax.random.normal(k1, (batch, HIDDEN_PAD), jnp.float32)
    eps2 = jax.random.normal(k2, (batch, OUT_PAD), jnp.float32)
    return eps1, eps2


def bayesian_network_forward(x, prepped, key):
    """x: (B, 784) float32 flattened images. prepped: prepare_inference_params output.
    key: jax PRNG key for this forward pass's noise sample. Returns (B, 10) log-probs."""
    B = x.shape[0]
    eps1, eps2 = _draw_eps(key, B)

    vmem = pl.BlockSpec(memory_space=pltpu.MemorySpace.VMEM)

    out_pad = pl.pallas_call(
        _bnn_forward_kernel,
        out_shape=jax.ShapeDtypeStruct((B, OUT_PAD), jnp.float32),
        in_specs=[vmem] * 11,
        out_specs=vmem,
    )(
        x.astype(jnp.float32),
        prepped["w1_mu"], prepped["w1_sigma2"],
        prepped["b1_mu"], prepped["b1_sigma2"],
        prepped["w2_mu"], prepped["w2_sigma2"],
        prepped["b2_mu"], prepped["b2_sigma2"],
        eps1, eps2,
    )
    return out_pad[:, :OUT_FEATURES]


def _reference_forward(x, params, eps1, eps2):
    """Pure-JAX f32 reference using the same local-reparameterization noise."""
    w1_mu = params["fc1_weight_mu"].T
    w1_s2 = jnp.exp(2.0 * params["fc1_weight_logsigma"]).T
    b1_mu = params["fc1_bias_mu"]
    b1_s2 = jnp.exp(2.0 * params["fc1_bias_logsigma"])
    h_mu = x @ w1_mu + b1_mu
    h_std = jnp.sqrt((x * x) @ w1_s2 + b1_s2)
    h = jax.nn.relu(h_mu + h_std * eps1[:, :HIDDEN])

    w2_mu = params["fc2_weight_mu"].T
    w2_s2 = jnp.exp(2.0 * params["fc2_weight_logsigma"]).T
    b2_mu = params["fc2_bias_mu"]
    b2_s2 = jnp.exp(2.0 * params["fc2_bias_logsigma"])
    z_mu = h @ w2_mu + b2_mu
    z_std = jnp.sqrt((h * h) @ w2_s2 + b2_s2)
    z = z_mu + z_std * eps2[:, :OUT_FEATURES]
    return jax.nn.log_softmax(z, axis=1)


if __name__ == "__main__":
    root_key = jax.random.PRNGKey(0)
    pkey, xkey, ekey = jax.random.split(root_key, 3)

    params = init_params(pkey)
    prepped = prepare_inference_params(params)     # one-time, not per call

    B = 2
    x = jax.random.normal(xkey, (B, IN_FEATURES), jnp.float32)  # flattened 28x28 images

    out = bayesian_network_forward(x, prepped, ekey)
    out = jax.block_until_ready(out)

    # Sanity checks: shape, finite, log_softmax rows sum to ~1 in prob space.
    assert out.shape == (B, OUT_FEATURES)
    assert bool(jnp.all(jnp.isfinite(out)))
    row_prob_sums = jnp.sum(jnp.exp(out), axis=1)
    assert bool(jnp.all(jnp.abs(row_prob_sums - 1.0) < 1e-4))

    # Cross-check against the pure-JAX f32 reference with identical noise
    # (bf16 matmul operands -> loose tolerance).
    eps1, eps2 = _draw_eps(ekey, B)
    ref = _reference_forward(x, params, eps1, eps2)
    assert bool(jnp.all(jnp.abs(out - ref) < 5e-2))

    print("KERNEL_OK")
</pallas_src>

<mosaic_0001>
module attributes {stable_mosaic.version = 11 : i64} {
  func.func @_bnn_forward_kernel(%arg0: memref<2x784xf32, #tpu.memory_space<vmem>>, %arg1: memref<784x512xbf16, #tpu.memory_space<vmem>>, %arg2: memref<784x512xbf16, #tpu.memory_space<vmem>>, %arg3: memref<1x512xf32, #tpu.memory_space<vmem>>, %arg4: memref<1x512xf32, #tpu.memory_space<vmem>>, %arg5: memref<512x128xbf16, #tpu.memory_space<vmem>>, %arg6: memref<512x128xbf16, #tpu.memory_space<vmem>>, %arg7: memref<1x128xf32, #tpu.memory_space<vmem>>, %arg8: memref<1x128xf32, #tpu.memory_space<vmem>>, %arg9: memref<2x512xf32, #tpu.memory_space<vmem>>, %arg10: memref<2x128xf32, #tpu.memory_space<vmem>>, %arg11: memref<2x128xf32, #tpu.memory_space<vmem>>) attributes {dimension_semantics = [], scalar_prefetch = 0 : i64, scratch_operands = 0 : i64, tpu.core_type = #tpu.core_type<tc>} {
    %c0 = arith.constant 0 : index
    %c0_0 = arith.constant 0 : index
    %0 = vector.load %arg0[%c0, %c0_0] : memref<2x784xf32, #tpu.memory_space<vmem>>, vector<2x784xf32>
    %1 = arith.truncf %0 : vector<2x784xf32> to vector<2x784xbf16>
    %2 = arith.mulf %1, %1 : vector<2x784xbf16>
    %c0_1 = arith.constant 0 : index
    %c0_2 = arith.constant 0 : index
    %3 = vector.load %arg1[%c0_1, %c0_2] : memref<784x512xbf16, #tpu.memory_space<vmem>>, vector<784x512xbf16>
    %cst = arith.constant dense<0.000000e+00> : vector<2x512xf32>
    %4 = tpu.matmul %1, %3, %cst {dimension_numbers = #tpu.dot_dimension_numbers<[1], [0], [0], [1], [0, 0, 1, 1], [], []>} : vector<2x784xbf16>, vector<784x512xbf16>, vector<2x512xf32> -> vector<2x512xf32>
    %c0_3 = arith.constant 0 : index
    %c0_4 = arith.constant 0 : index
    %5 = vector.load %arg3[%c0_3, %c0_4] : memref<1x512xf32, #tpu.memory_space<vmem>>, vector<1x512xf32>
    %6 = vector.broadcast %5 : vector<1x512xf32> to vector<2x512xf32>
    %7 = arith.addf %4, %6 : vector<2x512xf32>
    %c0_5 = arith.constant 0 : index
    %c0_6 = arith.constant 0 : index
    %8 = vector.load %arg2[%c0_5, %c0_6] : memref<784x512xbf16, #tpu.memory_space<vmem>>, vector<784x512xbf16>
    %cst_7 = arith.constant dense<0.000000e+00> : vector<2x512xf32>
    %9 = tpu.matmul %2, %8, %cst_7 {dimension_numbers = #tpu.dot_dimension_numbers<[1], [0], [0], [1], [0, 0, 1, 1], [], []>} : vector<2x784xbf16>, vector<784x512xbf16>, vector<2x512xf32> -> vector<2x512xf32>
    %c0_8 = arith.constant 0 : index
    %c0_9 = arith.constant 0 : index
    %10 = vector.load %arg4[%c0_8, %c0_9] : memref<1x512xf32, #tpu.memory_space<vmem>>, vector<1x512xf32>
    %11 = vector.broadcast %10 : vector<1x512xf32> to vector<2x512xf32>
    %12 = arith.addf %9, %11 : vector<2x512xf32>
    %cst_10 = arith.constant 0.000000e+00 : f32
    %13 = vector.broadcast %cst_10 : f32 to vector<2x512xf32>
    %14 = arith.maximumf %12, %13 : vector<2x512xf32>
    %15 = math.sqrt %14 : vector<2x512xf32>
    %c0_11 = arith.constant 0 : index
    %c0_12 = arith.constant 0 : index
    %16 = vector.load %arg9[%c0_11, %c0_12] : memref<2x512xf32, #tpu.memory_space<vmem>>, vector<2x512xf32>
    %17 = arith.mulf %15, %16 : vector<2x512xf32>
    %18 = arith.addf %7, %17 : vector<2x512xf32>
    %cst_13 = arith.constant 0.000000e+00 : f32
    %19 = vector.broadcast %cst_13 : f32 to vector<2x512xf32>
    %20 = arith.maximumf %18, %19 : vector<2x512xf32>
    %21 = arith.truncf %20 : vector<2x512xf32> to vector<2x512xbf16>
    %22 = arith.mulf %21, %21 : vector<2x512xbf16>
    %c0_14 = arith.constant 0 : index
    %c0_15 = arith.constant 0 : index
    %23 = vector.load %arg5[%c0_14, %c0_15] : memref<512x128xbf16, #tpu.memory_space<vmem>>, vector<512x128xbf16>
    %cst_16 = arith.constant dense<0.000000e+00> : vector<2x128xf32>
    %24 = tpu.matmul %21, %23, %cst_16 {dimension_numbers = #tpu.dot_dimension_numbers<[1], [0], [0], [1], [0, 0, 1, 1], [], []>} : vector<2x512xbf16>, vector<512x128xbf16>, vector<2x128xf32> -> vector<2x128xf32>
    %c0_17 = arith.constant 0 : index
    %c0_18 = arith.constant 0 : index
    %25 = vector.load %arg7[%c0_17, %c0_18] : memref<1x128xf32, #tpu.memory_space<vmem>>, vector<1x128xf32>
    %26 = vector.broadcast %25 : vector<1x128xf32> to vector<2x128xf32>
    %27 = arith.addf %24, %26 : vector<2x128xf32>
    %c0_19 = arith.constant 0 : index
    %c0_20 = arith.constant 0 : index
    %28 = vector.load %arg6[%c0_19, %c0_20] : memref<512x128xbf16, #tpu.memory_space<vmem>>, vector<512x128xbf16>
    %cst_21 = arith.constant dense<0.000000e+00> : vector<2x128xf32>
    %29 = tpu.matmul %22, %28, %cst_21 {dimension_numbers = #tpu.dot_dimension_numbers<[1], [0], [0], [1], [0, 0, 1, 1], [], []>} : vector<2x512xbf16>, vector<512x128xbf16>, vector<2x128xf32> -> vector<2x128xf32>
    %c0_22 = arith.constant 0 : index
    %c0_23 = arith.constant 0 : index
    %30 = vector.load %arg8[%c0_22, %c0_23] : memref<1x128xf32, #tpu.memory_space<vmem>>, vector<1x128xf32>
    %31 = vector.broadcast %30 : vector<1x128xf32> to vector<2x128xf32>
    %32 = arith.addf %29, %31 : vector<2x128xf32>
    %cst_24 = arith.constant 0.000000e+00 : f32
    %33 = vector.broadcast %cst_24 : f32 to vector<2x128xf32>
    %34 = arith.maximumf %32, %33 : vector<2x128xf32>
    %35 = math.sqrt %34 : vector<2x128xf32>
    %c0_25 = arith.constant 0 : index
    %c0_26 = arith.constant 0 : index
    %36 = vector.load %arg10[%c0_25, %c0_26] : memref<2x128xf32, #tpu.memory_space<vmem>>, vector<2x128xf32>
    %37 = arith.mulf %35, %36 : vector<2x128xf32>
    %38 = arith.addf %27, %37 : vector<2x128xf32>
    %cst_27 = arith.constant dense<0xFF800000> : vector<2xf32>
    %39 = vector.multi_reduction <maximumf>, %38, %cst_27 [1] : vector<2x128xf32> to vector<2xf32>
    %40 = vector.shape_cast %39 : vector<2xf32> to vector<2x1xf32>
    %41 = vector.broadcast %40 : vector<2x1xf32> to vector<2x128xf32>
    %42 = arith.subf %38, %41 : vector<2x128xf32>
    %43 = math.exp %42 : vector<2x128xf32>
    %cst_28 = arith.constant dense<0.000000e+00> : vector<2xf32>
    %44 = vector.multi_reduction <add>, %43, %cst_28 [1] : vector<2x128xf32> to vector<2xf32>
    %45 = vector.shape_cast %44 : vector<2xf32> to vector<2x1xf32>
    %46 = math.log %45 : vector<2x1xf32>
    %47 = arith.addf %46, %40 : vector<2x1xf32>
    %48 = vector.broadcast %47 : vector<2x1xf32> to vector<2x128xf32>
    %49 = arith.subf %38, %48 : vector<2x128xf32>
    %c0_29 = arith.constant 0 : index
    %c0_30 = arith.constant 0 : index
    %50 = vector.load %arg11[%c0_29, %c0_30] : memref<2x128xf32, #tpu.memory_space<vmem>>, vector<2x128xf32>
    tpu.vector_store %arg11[%c0_29, %c0_30], %49 {strides = array<i32>} : memref<2x128xf32, #tpu.memory_space<vmem>>, vector<2x128xf32>,
    return
  }
}

</mosaic_0001>

<llo_original>
// kernel: tpu_custom_call.1
$region0: #{tpu_custom_call.1}
  #allocation0 [shape = 'u32[]', space=smem, size = 0x4, offset = 0x4, fixed_abs, tag = 'smem constant byte address 0x4 - core index']
  #allocation1 [shape = 'u32[144,128]{1,0:T(1,128)}', space=vmem, size = 0x12000, scoped, tag = 'internal scratch']
  %s0 = inlined_call_operand.hbm [shape: f32[2,784], index: 0, kind: input, shape index: {}]
  %s1 = inlined_call_operand.hbm [shape: bf16[784,512], index: 1, kind: input, shape index: {}]
  %s2 = inlined_call_operand.hbm [shape: bf16[784,512], index: 2, kind: input, shape index: {}]
  %s3 = inlined_call_operand.vmem [shape: f32[1,512], index: 3, kind: input, shape index: {}]
  %s4 = inlined_call_operand.hbm [shape: f32[1,512], index: 4, kind: input, shape index: {}]
  %s5 = inlined_call_operand.hbm [shape: bf16[512,128], index: 5, kind: input, shape index: {}]
  %s6 = inlined_call_operand.hbm [shape: bf16[512,128], index: 6, kind: input, shape index: {}]
  %s7 = inlined_call_operand.vmem [shape: f32[1,128], index: 7, kind: input, shape index: {}]
  %s8 = inlined_call_operand.vmem [shape: f32[1,128], index: 8, kind: input, shape index: {}]
  %s9 = inlined_call_operand.vmem [shape: f32[2,512], index: 9, kind: input, shape index: {}]
  %s10 = inlined_call_operand.vmem [shape: f32[2,128], index: 10, kind: input, shape index: {}]
  %s11 = inlined_call_operand.hbm [shape: f32[2,128], index: 11, kind: output, shape index: {}]
  %s12 = sld [smem:[#allocation0]]
  $region78: #{tpu_custom_call.1} parent=0
    _
  %s14 = ssub.s32 1, %s12
  %s15 = scalar_select 0, %s14, %s12
  $region1: #{tpu_custom_call.1} parent=0
    #allocation2 [shape = 'u8[7168]{0}', space=vmem, size = 0x1c00, scoped, tag = 'input window, operand 0, single buffered']
    #allocation3 [shape = 's32[1]{0}', space=sflag, size = 0x4, scoped, tag = 'scoped memory for tpu_custom_call.1']
    #allocation4 [shape = 's32[1]{0}', space=sflag, size = 0x4, scoped, tag = 'scoped memory for tpu_custom_call.1']
    #allocation5 [shape = 'u8[802816]{0}', space=vmem, size = 0xc4000, scoped, tag = 'input window, operand 1, single buffered']
    #allocation6 [shape = 's32[1]{0}', space=sflag, size = 0x4, scoped, tag = 'scoped memory for tpu_custom_call.1']
    #allocation7 [shape = 'u8[802816]{0}', space=vmem, size = 0xc4000, scoped, tag = 'input window, operand 2, single buffered']
    #allocation8 [shape = 'u8[2048]{0}', space=vmem, size = 0x800, scoped, tag = 'input window, operand 4, single buffered']
    #allocation9 [shape = 's32[1]{0}', space=sflag, size = 0x4, scoped, tag = 'scoped memory for tpu_custom_call.1']
    #allocation10 [shape = 'u8[131072]{0}', space=vmem, size = 0x20000, scoped, tag = 'input window, operand 5, single buffered']
    #allocation11 [shape = 'u8[131072]{0}', space=vmem, size = 0x20000, scoped, tag = 'input window, operand 6, single buffered']
    #allocation12 [shape = 's32[1]{0}', space=sflag, size = 0x4, scoped, tag = 'scoped memory for tpu_custom_call.1']
    #allocation13 [shape = 'u8[1024]{0}', space=vmem, size = 0x400, scoped, tag = 'output window, operand 0, single buffered']
    %16 = vsyncpa [#allocation3], 0
    %17 = vsyncpa [#allocation6], 0
    %18 = vsyncpa [#allocation9], 0
    %19 = vsyncpa [#allocation12], 0
    %20 = vsyncpa [#allocation4], 0
    // Predicated region
    $region2: #{tpu_custom_call.1} parent=1 // pred_check
      _
    $region3: #{tpu_custom_call.1} parent=1 // pred_check_branch
      %22 = sbr.rel (0) target = $region5
    $region4: #{tpu_custom_call.1} parent=1 // pred_region
      %s24 = ssub.s32 224, 224
      %25 = vsyncadd [#allocation3], %s24
      %s27 = sshll.u32 [#allocation2], 4
      %s28 = int_to_ptr.vmem [resolvable:$true] %s27
      %30 = dma.hbm_to_vmem [thread:$0]  %s0, 224, %s28, [#allocation3]
    $region5: #{tpu_custom_call.1} parent=1 // pred_fallthru
      _
    // Predicated region
    $region6: #{tpu_custom_call.1} parent=1 // pred_check
      _
    $region7: #{tpu_custom_call.1} parent=1 // pred_check_branch
      %32 = sbr.rel (0) target = $region9
    $region8: #{tpu_custom_call.1} parent=1 // pred_region
      %s34 = ssub.s32 25088, 25088
      %35 = vsyncadd [#allocation6], %s34
      %s36 = sshll.u32 [#allocation5], 4
      %s37 = int_to_ptr.vmem [resolvable:$true] %s36
      %42 = dma.hbm_to_vmem [thread:$0]  %s1, 25088, %s37, [#allocation6], 256, 256, 16
    $region9: #{tpu_custom_call.1} parent=1 // pred_fallthru
      _
    // Predicated region
    $region10: #{tpu_custom_call.1} parent=1 // pred_check
      _
    $region11: #{tpu_custom_call.1} parent=1 // pred_check_branch
      %44 = sbr.rel (0) target = $region13
    $region12: #{tpu_custom_call.1} parent=1 // pred_region
      %s46 = ssub.s32 25088, 25088
      %47 = vsyncadd [#allocation6], %s46
      %s48 = sshll.u32 [#allocation7], 4
      %s49 = int_to_ptr.vmem [resolvable:$true] %s48
      %54 = dma.hbm_to_vmem [thread:$0]  %s2, 25088, %s49, [#allocation6], 256, 256, 16
    $region13: #{tpu_custom_call.1} parent=1 // pred_fallthru
      _
    // Predicated region
    $region14: #{tpu_custom_call.1} parent=1 // pred_check
      _
    $region15: #{tpu_custom_call.1} parent=1 // pred_check_branch
      %56 = sbr.rel (0) target = $region17
    $region16: #{tpu_custom_call.1} parent=1 // pred_region
      _
    $region17: #{tpu_custom_call.1} parent=1 // pred_fallthru
      _
    // Predicated region
    $region18: #{tpu_custom_call.1} parent=1 // pred_check
      _
    $region19: #{tpu_custom_call.1} parent=1 // pred_check_branch
      %58 = sbr.rel (0) target = $region21
    $region20: #{tpu_custom_call.1} parent=1 // pred_region
      %s60 = ssub.s32 64, 64
      %61 = vsyncadd [#allocation9], %s60
      %s63 = sshll.u32 [#allocation8], 4
      %s64 = int_to_ptr.vmem [resolvable:$true] %s63
      %66 = dma.hbm_to_vmem [thread:$0]  %s4, 64, %s64, [#allocation9]
    $region21: #{tpu_custom_call.1} parent=1 // pred_fallthru
      _
    // Predicated region
    $region22: #{tpu_custom_call.1} parent=1 // pred_check
      _
    $region23: #{tpu_custom_call.1} parent=1 // pred_check_branch
      %68 = sbr.rel (0) target = $region25
    $region24: #{tpu_custom_call.1} parent=1 // pred_region
      %s70 = ssub.s32 4096, 4096
      %71 = vsyncadd [#allocation9], %s70
      %s72 = sshll.u32 [#allocation10], 4
      %s73 = int_to_ptr.vmem [resolvable:$true] %s72
      %78 = dma.hbm_to_vmem [thread:$0]  %s5, 4096, %s73, [#allocation9], 64, 64, 4
    $region25: #{tpu_custom_call.1} parent=1 // pred_fallthru
      _
    // Predicated region
    $region26: #{tpu_custom_call.1} parent=1 // pred_check
      _
    $region27: #{tpu_custom_call.1} parent=1 // pred_check_branch
      %80 = sbr.rel (0) target = $region29
    $region28: #{tpu_custom_call.1} parent=1 // pred_region
      %s82 = ssub.s32 4096, 4096
      %83 = vsyncadd [#allocation12], %s82
      %s84 = sshll.u32 [#allocation11], 4
      %s85 = int_to_ptr.vmem [resolvable:$true] %s84
      %90 = dma.hbm_to_vmem [thread:$0]  %s6, 4096, %s85, [#allocation12], 64, 64, 4
    $region29: #{tpu_custom_call.1} parent=1 // pred_fallthru
      _
    // Predicated region
    $region30: #{tpu_custom_call.1} parent=1 // pred_check
      _
    $region31: #{tpu_custom_call.1} parent=1 // pred_check_branch
      %92 = sbr.rel (0) target = $region33
    $region32: #{tpu_custom_call.1} parent=1 // pred_region
      _
    $region33: #{tpu_custom_call.1} parent=1 // pred_fallthru
      _
    // Predicated region
    $region34: #{tpu_custom_call.1} parent=1 // pred_check
      _
    $region35: #{tpu_custom_call.1} parent=1 // pred_check_branch
      %94 = sbr.rel (0) target = $region37
    $region36: #{tpu_custom_call.1} parent=1 // pred_region
      _
    $region37: #{tpu_custom_call.1} parent=1 // pred_fallthru
      _
    // Predicated region
    $region38: #{tpu_custom_call.1} parent=1 // pred_check
      _
    $region39: #{tpu_custom_call.1} parent=1 // pred_check_branch
      %96 = sbr.rel (0) target = $region41
    $region40: #{tpu_custom_call.1} parent=1 // pred_region
      _
    $region41: #{tpu_custom_call.1} parent=1 // pred_fallthru
      _
    // Predicated region
    $region42: #{tpu_custom_call.1} parent=1 // pred_check
      _
    $region43: #{tpu_custom_call.1} parent=1 // pred_check_branch
      %98 = sbr.rel (0) target = $region45
    $region44: #{tpu_custom_call.1} parent=1 // pred_region
      _
    $region45: #{tpu_custom_call.1} parent=1 // pred_fallthru
      _
    // Predicated region
    $region46: #{tpu_custom_call.1} parent=1 // pred_check
      _
    $region47: #{tpu_custom_call.1} parent=1 // pred_check_branch
      %100 = sbr.rel (0) target = $region49
    $region48: #{tpu_custom_call.1} parent=1 // pred_region
      %101 = dma.done [#allocation3], 224
    $region49: #{tpu_custom_call.1} parent=1 // pred_fallthru
      _
    // Predicated region
    $region50: #{tpu_custom_call.1} parent=1 // pred_check
      _
    $region51: #{tpu_custom_call.1} parent=1 // pred_check_branch
      %103 = sbr.rel (0) target = $region53
    $region52: #{tpu_custom_call.1} parent=1 // pred_region
      %104 = dma.done [#allocation6], 25088
    $region53: #{tpu_custom_call.1} parent=1 // pred_fallthru
      _
    // Predicated region
    $region54: #{tpu_custom_call.1} parent=1 // pred_check
      _
    $region55: #{tpu_custom_call.1} parent=1 // pred_check_branch
      %106 = sbr.rel (0) target = $region57
    $region56: #{tpu_custom_call.1} parent=1 // pred_region
      %107 = dma.done [#allocation6], 25088
    $region57: #{tpu_custom_call.1} parent=1 // pred_fallthru
      _
    // Predicated region
    $region58: #{tpu_custom_call.1} parent=1 // pred_check
      _
    $region59: #{tpu_custom_call.1} parent=1 // pred_check_branch
      %109 = sbr.rel (0) target = $region61
    $region60: #{tpu_custom_call.1} parent=1 // pred_region
      %110 = dma.done [#allocation9], 64
    $region61: #{tpu_custom_call.1} parent=1 // pred_fallthru
      _
    // Predicated region
    $region62: #{tpu_custom_call.1} parent=1 // pred_check
      _
    $region63: #{tpu_custom_call.1} parent=1 // pred_check_branch
      %112 = sbr.rel (0) target = $region65
    $region64: #{tpu_custom_call.1} parent=1 // pred_region
      %113 = dma.done [#allocation9], 4096
    $region65: #{tpu_custom_call.1} parent=1 // pred_fallthru
      _
    // Predicated region
    $region66: #{tpu_custom_call.1} parent=1 // pred_check
      _
    $region67: #{tpu_custom_call.1} parent=1 // pred_check_branch
      %115 = sbr.rel (0) target = $region69
    $region68: #{tpu_custom_call.1} parent=1 // pred_region
      %116 = dma.done [#allocation12], 4096
    $region69: #{tpu_custom_call.1} parent=1 // pred_fallthru
      _
    %v118 = vld [vmem:[#allocation2] sm:$0xff]
    %v119 = vld [vmem:[#allocation2 + $0x8] sm:$0x3f]
    %v122 = vcombine.high %v118, %v118
    %v124 = vunpack.c.l.s4 1983009808
    %v125 = vunpack.c.0.s8 %v124
    %v126 = vlaneseq
    %v127 = vshrl.u32 %v126, 7
    %v128 = vsub.s32 %v125, %v127
    %v129 = vrot.slane %v118, %v128
    %v131 = vunpack.c.l.s4 1983009808
    %v132 = vunpack.c.0.s8 %v131
    %v133 = vlaneseq
    %v134 = vshrl.u32 %v133, 7
    %v135 = vsub.s32 %v132, %v134
    %v136 = vrot.slane %v122, %v135
    %v137 = vcombine.high %v129, %v129
    %v138 = vcombine.high %v136, %v136
    %v139 = vcombine.high %v119, %v119
    %v141 = vunpack.c.l.s4 1983009808
    %v142 = vunpack.c.0.s8 %v141
    %v143 = vlaneseq
    %v144 = vshrl.u32 %v143, 7
    %v145 = vsub.s32 %v142, %v144
    %v146 = vrot.slane %v119, %v145
    %v148 = vunpack.c.l.s4 1983009808
    %v149 = vunpack.c.0.s8 %v148
    %v150 = vlaneseq
    %v151 = vshrl.u32 %v150, 7
    %v152 = vsub.s32 %v149, %v151
    %v153 = vrot.slane %v139, %v152
    %v154 = vcombine.high %v146, %v146
    %v162 = vpack.c.bf16 %v129, %v129
    %v163 = vpack.c.bf16 %v137, %v137
    %v164 = vpack.c.bf16 %v136, %v136
    %v165 = vpack.c.bf16 %v138, %v138
    %v166 = vpack.c.bf16 %v146, %v146
    %v167 = vpack.c.bf16 %v154, %v154
    %v168 = vpack.c.bf16 %v153, %v153
    %v169 = vmul.bf16 %v162, %v162
    %v170 = vmul.bf16 %v163, %v163
    %v171 = vmul.bf16 %v164, %v164
    %v172 = vmul.bf16 %v165, %v165
    %v173 = vmul.bf16 %v166, %v166
    %v174 = vmul.bf16 %v167, %v167
    %v175 = vmul.bf16 %v168, %v168
    %v176 = vld [vmem:[#allocation5] sm:$0xff]
    %v177 = vld [vmem:[#allocation5 + $0x8] sm:$0xff]
    %v178 = vld [vmem:[#allocation5 + $0x10] sm:$0xff]
    %v179 = vld [vmem:[#allocation5 + $0x18] sm:$0xff]
    %v180 = vld [vmem:[#allocation5 + $0x20] sm:$0xff]
    %v181 = vld [vmem:[#allocation5 + $0x28] sm:$0xff]
    %v182 = vld [vmem:[#allocation5 + $0x30] sm:$0xff]
    %v183 = vld [vmem:[#allocation5 + $0x38] sm:$0xff]
    %v184 = vld [vmem:[#allocation5 + $0x40] sm:$0xff]
    %v185 = vld [vmem:[#allocation5 + $0x48] sm:$0xff]
    %v186 = vld [vmem:[#allocation5 + $0x50] sm:$0xff]
    %v187 = vld [vmem:[#allocation5 + $0x58] sm:$0xff]
    %v188 = vld [vmem:[#allocation5 + $0x60] sm:$0xff]
    %v189 = vld [vmem:[#allocation5 + $0x68] sm:$0xff]
    %v190 = vld [vmem:[#allocation5 + $0x70] sm:$0xff]
    %v191 = vld [vmem:[#allocation5 + $0x78] sm:$0xff]
    %v192 = vld [vmem:[#allocation5 + $0x80] sm:$0xff]
    %v193 = vld [vmem:[#allocation5 + $0x88] sm:$0xff]
    %v194 = vld [vmem:[#allocation5 + $0x90] sm:$0xff]
    %v195 = vld [vmem:[#allocation5 + $0x98] sm:$0xff]
    %v196 = vld [vmem:[#allocation5 + $0xa0] sm:$0xff]
    %v197 = vld [vmem:[#allocation5 + $0xa8] sm:$0xff]
    %v198 = vld [vmem:[#allocation5 + $0xb0] sm:$0xff]
    %v199 = vld [vmem:[#allocation5 + $0xb8] sm:$0xff]
    %v200 = vld [vmem:[#allocation5 + $0xc0] sm:$0xff]
    %v201 = vld [vmem:[#allocation5 + $0xc8] sm:$0xff]
    %v202 = vld [vmem:[#allocation5 + $0xd0] sm:$0xff]
    %v203 = vld [vmem:[#allocation5 + $0xd8] sm:$0xff]
    %v204 = vld [vmem:[#allocation5 + $0xe0] sm:$0xff]
    %v205 = vld [vmem:[#allocation5 + $0xe8] sm:$0xff]
    %v206 = vld [vmem:[#allocation5 + $0xf0] sm:$0xff]
    %v207 = vld [vmem:[#allocation5 + $0xf8] sm:$0xff]
    %v208 = vld [vmem:[#allocation5 + $0x100] sm:$0xff]
    %v209 = vld [vmem:[#allocation5 + $0x108] sm:$0xff]
    %v210 = vld [vmem:[#allocation5 + $0x110] sm:$0xff]
    %v211 = vld [vmem:[#allocation5 + $0x118] sm:$0xff]
    %v212 = vld [vmem:[#allocation5 + $0x120] sm:$0xff]
    %v213 = vld [vmem:[#allocation5 + $0x128] sm:$0xff]
    %v214 = vld [vmem:[#allocation5 + $0x130] sm:$0xff]
    %v215 = vld [vmem:[#allocation5 + $0x138] sm:$0xff]
    %v216 = vld [vmem:[#allocation5 + $0x140] sm:$0xff]
    %v217 = vld [vmem:[#allocation5 + $0x148] sm:$0xff]
    %v218 = vld [vmem:[#allocation5 + $0x150] sm:$0xff]
    %v219 = vld [vmem:[#allocation5 + $0x158] sm:$0xff]
    %v220 = vld [vmem:[#allocation5 + $0x160] sm:$0xff]
    %v221 = vld [vmem:[#allocation5 + $0x168] sm:$0xff]
    %v222 = vld [vmem:[#allocation5 + $0x170] sm:$0xff]
    %v223 = vld [vmem:[#allocation5 + $0x178] sm:$0xff]
    %v224 = vld [vmem:[#allocation5 + $0x180] sm:$0xff]
    %v225 = vld [vmem:[#allocation5 + $0x188] sm:$0xff]
    %v226 = vld [vmem:[#allocation5 + $0x190] sm:$0xff]
    %v227 = vld [vmem:[#allocation5 + $0x198] sm:$0xff]
    %v228 = vld [vmem:[#allocation5 + $0x1a0] sm:$0xff]
    %v229 = vld [vmem:[#allocation5 + $0x1a8] sm:$0xff]
    %v230 = vld [vmem:[#allocation5 + $0x1b0] sm:$0xff]
    %v231 = vld [vmem:[#allocation5 + $0x1b8] sm:$0xff]
    %v232 = vld [vmem:[#allocation5 + $0x1c0] sm:$0xff]
    %v233 = vld [vmem:[#allocation5 + $0x1c8] sm:$0xff]
    %v234 = vld [vmem:[#allocation5 + $0x1d0] sm:$0xff]
    %v235 = vld [vmem:[#allocation5 + $0x1d8] sm:$0xff]
    %v236 = vld [vmem:[#allocation5 + $0x1e0] sm:$0xff]
    %v237 = vld [vmem:[#allocation5 + $0x1e8] sm:$0xff]
    %v238 = vld [vmem:[#allocation5 + $0x1f0] sm:$0xff]
    %v239 = vld [vmem:[#allocation5 + $0x1f8] sm:$0xff]
    %v240 = vld [vmem:[#allocation5 + $0x200] sm:$0xff]
    %v241 = vld [vmem:[#allocation5 + $0x208] sm:$0xff]
    %v242 = vld [vmem:[#allocation5 + $0x210] sm:$0xff]
    %v243 = vld [vmem:[#allocation5 + $0x218] sm:$0xff]
    %v244 = vld [vmem:[#allocation5 + $0x220] sm:$0xff]
    %v245 = vld [vmem:[#allocation5 + $0x228] sm:$0xff]
    %v246 = vld [vmem:[#allocation5 + $0x230] sm:$0xff]
    %v247 = vld [vmem:[#allocation5 + $0x238] sm:$0xff]
    %v248 = vld [vmem:[#allocation5 + $0x240] sm:$0xff]
    %v249 = vld [vmem:[#allocation5 + $0x248] sm:$0xff]
    %v250 = vld [vmem:[#allocation5 + $0x250] sm:$0xff]
    %v251 = vld [vmem:[#allocation5 + $0x258] sm:$0xff]
    %v252 = vld [vmem:[#allocation5 + $0x260] sm:$0xff]
    %v253 = vld [vmem:[#allocation5 + $0x268] sm:$0xff]
    %v254 = vld [vmem:[#allocation5 + $0x270] sm:$0xff]
    %v255 = vld [vmem:[#allocation5 + $0x278] sm:$0xff]
    %v256 = vld [vmem:[#allocation5 + $0x280] sm:$0xff]
    %v257 = vld [vmem:[#allocation5 + $0x288] sm:$0xff]
    %v258 = vld [vmem:[#allocation5 + $0x290] sm:$0xff]
    %v259 = vld [vmem:[#allocation5 + $0x298] sm:$0xff]
    %v260 = vld [vmem:[#allocation5 + $0x2a0] sm:$0xff]
    %v261 = vld [vmem:[#allocation5 + $0x2a8] sm:$0xff]
    %v262 = vld [vmem:[#allocation5 + $0x2b0] sm:$0xff]
    %v263 = vld [vmem:[#allocation5 + $0x2b8] sm:$0xff]
    %v264 = vld [vmem:[#allocation5 + $0x2c0] sm:$0xff]
    %v265 = vld [vmem:[#allocation5 + $0x2c8] sm:$0xff]
    %v266 = vld [vmem:[#allocation5 + $0x2d0] sm:$0xff]
    %v267 = vld [vmem:[#allocation5 + $0x2d8] sm:$0xff]
    %v268 = vld [vmem:[#allocation5 + $0x2e0] sm:$0xff]
    %v269 = vld [vmem:[#allocation5 + $0x2e8] sm:$0xff]
    %v270 = vld [vmem:[#allocation5 + $0x2f0] sm:$0xff]
    %v271 = vld [vmem:[#allocation5 + $0x2f8] sm:$0xff]
    %v272 = vld [vmem:[#allocation5 + $0x300] sm:$0xff]
    %v273 = vld [vmem:[#allocation5 + $0x308] sm:$0xff]
    %v274 = vld [vmem:[#allocation5 + $0x310] sm:$0xff]
    %v275 = vld [vmem:[#allocation5 + $0x318] sm:$0xff]
    %v276 = vld [vmem:[#allocation5 + $0x320] sm:$0xff]
    %v277 = vld [vmem:[#allocation5 + $0x328] sm:$0xff]
    %v278 = vld [vmem:[#allocation5 + $0x330] sm:$0xff]
    %v279 = vld [vmem:[#allocation5 + $0x338] sm:$0xff]
    %v280 = vld [vmem:[#allocation5 + $0x340] sm:$0xff]
    %v281 = vld [vmem:[#allocation5 + $0x348] sm:$0xff]
    %v282 = vld [vmem:[#allocation5 + $0x350] sm:$0xff]
    %v283 = vld [vmem:[#allocation5 + $0x358] sm:$0xff]
    %v284 = vld [vmem:[#allocation5 + $0x360] sm:$0xff]
    %v285 = vld [vmem:[#allocation5 + $0x368] sm:$0xff]
    %v286 = vld [vmem:[#allocation5 + $0x370] sm:$0xff]
    %v287 = vld [vmem:[#allocation5 + $0x378] sm:$0xff]
    %v288 = vld [vmem:[#allocation5 + $0x380] sm:$0xff]
    %v289 = vld [vmem:[#allocation5 + $0x388] sm:$0xff]
    %v290 = vld [vmem:[#allocation5 + $0x390] sm:$0xff]
    %v291 = vld [vmem:[#allocation5 + $0x398] sm:$0xff]
    %v292 = vld [vmem:[#allocation5 + $0x3a0] sm:$0xff]
    %v293 = vld [vmem:[#allocation5 + $0x3a8] sm:$0xff]
    %v294 = vld [vmem:[#allocation5 + $0x3b0] sm:$0xff]
    %v295 = vld [vmem:[#allocation5 + $0x3b8] sm:$0xff]
    %v296 = vld [vmem:[#allocation5 + $0x3c0] sm:$0xff]
    %v297 = vld [vmem:[#allocation5 + $0x3c8] sm:$0xff]
    %v298 = vld [vmem:[#allocation5 + $0x3d0] sm:$0xff]
    %v299 = vld [vmem:[#allocation5 + $0x3d8] sm:$0xff]
    %v300 = vld [vmem:[#allocation5 + $0x3e0] sm:$0xff]
    %v301 = vld [vmem:[#allocation5 + $0x3e8] sm:$0xff]
    %v302 = vld [vmem:[#allocation5 + $0x3f0] sm:$0xff]
    %v303 = vld [vmem:[#allocation5 + $0x3f8] sm:$0xff]
    %v304 = vld [vmem:[#allocation5 + $0x400] sm:$0xff]
    %v305 = vld [vmem:[#allocation5 + $0x408] sm:$0xff]
    %v306 = vld [vmem:[#allocation5 + $0x410] sm:$0xff]
    %v307 = vld [vmem:[#allocation5 + $0x418] sm:$0xff]
    %v308 = vld [vmem:[#allocation5 + $0x420] sm:$0xff]
    %v309 = vld [vmem:[#allocation5 + $0x428] sm:$0xff]
    %v310 = vld [vmem:[#allocation5 + $0x430] sm:$0xff]
    %v311 = vld [vmem:[#allocation5 + $0x438] sm:$0xff]
    %v312 = vld [vmem:[#allocation5 + $0x440] sm:$0xff]
    %v313 = vld [vmem:[#allocation5 + $0x448] sm:$0xff]
    %v314 = vld [vmem:[#allocation5 + $0x450] sm:$0xff]
    %v315 = vld [vmem:[#allocation5 + $0x458] sm:$0xff]
    %v316 = vld [vmem:[#allocation5 + $0x460] sm:$0xff]
    %v317 = vld [vmem:[#allocation5 + $0x468] sm:$0xff]
    %v318 = vld [vmem:[#allocation5 + $0x470] sm:$0xff]
    %v319 = vld [vmem:[#allocation5 + $0x478] sm:$0xff]
    %v320 = vld [vmem:[#allocation5 + $0x480] sm:$0xff]
    %v321 = vld [vmem:[#allocation5 + $0x488] sm:$0xff]
    %v322 = vld [vmem:[#allocation5 + $0x490] sm:$0xff]
    %v323 = vld [vmem:[#allocation5 + $0x498] sm:$0xff]
    %v324 = vld [vmem:[#allocation5 + $0x4a0] sm:$0xff]
    %v325 = vld [vmem:[#allocation5 + $0x4a8] sm:$0xff]
    %v326 = vld [vmem:[#allocation5 + $0x4b0] sm:$0xff]
    %v327 = vld [vmem:[#allocation5 + $0x4b8] sm:$0xff]
    %v328 = vld [vmem:[#allocation5 + $0x4c0] sm:$0xff]
    %v329 = vld [vmem:[#allocation5 + $0x4c8] sm:$0xff]
    %v330 = vld [vmem:[#allocation5 + $0x4d0] sm:$0xff]
    %v331 = vld [vmem:[#allocation5 + $0x4d8] sm:$0xff]
    %v332 = vld [vmem:[#allocation5 + $0x4e0] sm:$0xff]
    %v333 = vld [vmem:[#allocation5 + $0x4e8] sm:$0xff]
    %v334 = vld [vmem:[#allocation5 + $0x4f0] sm:$0xff]
    %v335 = vld [vmem:[#allocation5 + $0x4f8] sm:$0xff]
    %v336 = vld [vmem:[#allocation5 + $0x500] sm:$0xff]
    %v337 = vld [vmem:[#allocation5 + $0x508] sm:$0xff]
    %v338 = vld [vmem:[#allocation5 + $0x510] sm:$0xff]
    %v339 = vld [vmem:[#allocation5 + $0x518] sm:$0xff]
    %v340 = vld [vmem:[#allocation5 + $0x520] sm:$0xff]
    %v341 = vld [vmem:[#allocation5 + $0x528] sm:$0xff]
    %v342 = vld [vmem:[#allocation5 + $0x530] sm:$0xff]
    %v343 = vld [vmem:[#allocation5 + $0x538] sm:$0xff]
    %v344 = vld [vmem:[#allocation5 + $0x540] sm:$0xff]
    %v345 = vld [vmem:[#allocation5 + $0x548] sm:$0xff]
    %v346 = vld [vmem:[#allocation5 + $0x550] sm:$0xff]
    %v347 = vld [vmem:[#allocation5 + $0x558] sm:$0xff]
    %v348 = vld [vmem:[#allocation5 + $0x560] sm:$0xff]
    %v349 = vld [vmem:[#allocation5 + $0x568] sm:$0xff]
    %v350 = vld [vmem:[#allocation5 + $0x570] sm:$0xff]
    %v351 = vld [vmem:[#allocation5 + $0x578] sm:$0xff]
    %v352 = vld [vmem:[#allocation5 + $0x580] sm:$0xff]
    %v353 = vld [vmem:[#allocation5 + $0x588] sm:$0xff]
    %v354 = vld [vmem:[#allocation5 + $0x590] sm:$0xff]
    %v355 = vld [vmem:[#allocation5 + $0x598] sm:$0xff]
    %v356 = vld [vmem:[#allocation5 + $0x5a0] sm:$0xff]
    %v357 = vld [vmem:[#allocation5 + $0x5a8] sm:$0xff]
    %v358 = vld [vmem:[#allocation5 + $0x5b0] sm:$0xff]
    %v359 = vld [vmem:[#allocation5 + $0x5b8] sm:$0xff]
    %v360 = vld [vmem:[#allocation5 + $0x5c0] sm:$0xff]
    %v361 = vld [vmem:[#allocation5 + $0x5c8] sm:$0xff]
    %v362 = vld [vmem:[#allocation5 + $0x5d0] sm:$0xff]
    %v363 = vld [vmem:[#allocation5 + $0x5d8] sm:$0xff]
    %v364 = vld [vmem:[#allocation5 + $0x5e0] sm:$0xff]
    %v365 = vld [vmem:[#allocation5 + $0x5e8] sm:$0xff]
    %v366 = vld [vmem:[#allocation5 + $0x5f0] sm:$0xff]
    %v367 = vld [vmem:[#allocation5 + $0x5f8] sm:$0xff]
    %v368 = vld [vmem:[#allocation5 + $0x600] sm:$0xff]
    %v369 = vld [vmem:[#allocation5 + $0x608] sm:$0xff]
    %v370 = vld [vmem:[#allocation5 + $0x610] sm:$0xff]
    %v371 = vld [vmem:[#allocation5 + $0x618] sm:$0xff]
    %v372 = vld [vmem:[%s3] sm:$0xf]
    %v374 = vlaneseq
    %v375 = vshrl.u32 %v374, 7
    %v376 = vsub.s32 0, %v375
    %v377 = vrot.slane %v372, %v376
    %v378 = vlaneseq
    %v379 = vshrl.u32 %v378, 7
    %v380 = vsub.s32 1, %v379
    %v381 = vrot.slane %v372, %v380
    %v382 = vlaneseq
    %v383 = vshrl.u32 %v382, 7
    %v384 = vsub.s32 2, %v383
    %v385 = vrot.slane %v372, %v384
    %v386 = vlaneseq
    %v387 = vshrl.u32 %v386, 7
    %v388 = vsub.s32 3, %v387
    %v389 = vrot.slane %v372, %v388
    %v590 = vunpack.c.l.b16 %v176
    %v591 = vunpack.c.h.b16 %v176
    %v592 = vunpack.c.l.b16 %v177
    %v593 = vunpack.c.h.b16 %v177
    %v594 = vunpack.c.l.b16 %v178
    %v595 = vunpack.c.h.b16 %v178
    %v596 = vunpack.c.l.b16 %v179
    %v597 = vunpack.c.h.b16 %v179
    %v598 = vunpack.c.l.b16 %v180
    %v599 = vunpack.c.h.b16 %v180
    %v600 = vunpack.c.l.b16 %v181
    %v601 = vunpack.c.h.b16 %v181
    %v602 = vunpack.c.l.b16 %v182
    %v603 = vunpack.c.h.b16 %v182
    %v604 = vunpack.c.l.b16 %v183
    %v605 = vunpack.c.h.b16 %v183
    %v606 = vunpack.c.l.b16 %v184
    %v607 = vunpack.c.h.b16 %v184
    %v608 = vunpack.c.l.b16 %v185
    %v609 = vunpack.c.h.b16 %v185
    %v610 = vunpack.c.l.b16 %v186
    %v611 = vunpack.c.h.b16 %v186
    %v612 = vunpack.c.l.b16 %v187
    %v613 = vunpack.c.h.b16 %v187
    %v614 = vunpack.c.l.b16 %v188
    %v615 = vunpack.c.h.b16 %v188
    %v616 = vunpack.c.l.b16 %v189
    %v617 = vunpack.c.h.b16 %v189
    %v618 = vunpack.c.l.b16 %v190
    %v619 = vunpack.c.h.b16 %v190
    %v620 = vunpack.c.l.b16 %v191
    %v621 = vunpack.c.h.b16 %v191
    %v622 = vunpack.c.l.b16 %v192
    %v623 = vunpack.c.h.b16 %v192
    %v624 = vunpack.c.l.b16 %v193
    %v625 = vunpack.c.h.b16 %v193
    %v626 = vunpack.c.l.b16 %v194
    %v627 = vunpack.c.h.b16 %v194
    %v628 = vunpack.c.l.b16 %v195
    %v629 = vunpack.c.h.b16 %v195
    %v630 = vunpack.c.l.b16 %v196
    %v631 = vunpack.c.h.b16 %v196
    %v632 = vunpack.c.l.b16 %v197
    %v633 = vunpack.c.h.b16 %v197
    %v634 = vunpack.c.l.b16 %v198
    %v635 = vunpack.c.h.b16 %v198
    %v636 = vunpack.c.l.b16 %v199
    %v637 = vunpack.c.h.b16 %v199
    %v638 = vunpack.c.l.b16 %v200
    %v639 = vunpack.c.h.b16 %v200
    %v640 = vunpack.c.l.b16 %v201
    %v641 = vunpack.c.h.b16 %v201
    %v642 = vunpack.c.l.b16 %v202
    %v643 = vunpack.c.h.b16 %v202
    %v644 = vunpack.c.l.b16 %v203
    %v645 = vunpack.c.h.b16 %v203
    %v646 = vunpack.c.l.b16 %v204
    %v647 = vunpack.c.h.b16 %v204
    %v648 = vunpack.c.l.b16 %v205
    %v649 = vunpack.c.h.b16 %v205
    %v650 = vunpack.c.l.b16 %v206
    %v651 = vunpack.c.h.b16 %v206
    %v652 = vunpack.c.l.b16 %v207
    %v653 = vunpack.c.h.b16 %v207
    %v654 = vunpack.c.l.b16 %v208
    %v655 = vunpack.c.h.b16 %v208
    %v656 = vunpack.c.l.b16 %v209
    %v657 = vunpack.c.h.b16 %v209
    %v658 = vunpack.c.l.b16 %v210
    %v659 = vunpack.c.h.b16 %v210
    %v660 = vunpack.c.l.b16 %v211
    %v661 = vunpack.c.h.b16 %v211
    %v662 = vunpack.c.l.b16 %v212
    %v663 = vunpack.c.h.b16 %v212
    %v664 = vunpack.c.l.b16 %v213
    %v665 = vunpack.c.h.b16 %v213
    %v666 = vunpack.c.l.b16 %v214
    %v667 = vunpack.c.h.b16 %v214
    %v668 = vunpack.c.l.b16 %v215
    %v669 = vunpack.c.h.b16 %v215
    %v670 = vunpack.c.l.b16 %v216
    %v671 = vunpack.c.h.b16 %v216
    %v672 = vunpack.c.l.b16 %v217
    %v673 = vunpack.c.h.b16 %v217
    %v674 = vunpack.c.l.b16 %v218
    %v675 = vunpack.c.h.b16 %v218
    %v676 = vunpack.c.l.b16 %v219
    %v677 = vunpack.c.h.b16 %v219
    %v678 = vunpack.c.l.b16 %v220
    %v679 = vunpack.c.h.b16 %v220
    %v680 = vunpack.c.l.b16 %v221
    %v681 = vunpack.c.h.b16 %v221
    %v682 = vunpack.c.l.b16 %v222
    %v683 = vunpack.c.h.b16 %v222
    %v684 = vunpack.c.l.b16 %v223
    %v685 = vunpack.c.h.b16 %v223
    %v686 = vunpack.c.l.b16 %v224
    %v687 = vunpack.c.h.b16 %v224
    %v688 = vunpack.c.l.b16 %v225
    %v689 = vunpack.c.h.b16 %v225
    %v690 = vunpack.c.l.b16 %v226
    %v691 = vunpack.c.h.b16 %v226
    %v692 = vunpack.c.l.b16 %v227
    %v693 = vunpack.c.h.b16 %v227
    %v694 = vunpack.c.l.b16 %v228
    %v695 = vunpack.c.h.b16 %v228
    %v696 = vunpack.c.l.b16 %v229
    %v697 = vunpack.c.h.b16 %v229
    %v698 = vunpack.c.l.b16 %v230
    %v699 = vunpack.c.h.b16 %v230
    %v700 = vunpack.c.l.b16 %v231
    %v701 = vunpack.c.h.b16 %v231
    %v702 = vunpack.c.l.b16 %v232
    %v703 = vunpack.c.h.b16 %v232
    %v704 = vunpack.c.l.b16 %v233
    %v705 = vunpack.c.h.b16 %v233
    %v706 = vunpack.c.l.b16 %v234
    %v707 = vunpack.c.h.b16 %v234
    %v708 = vunpack.c.l.b16 %v235
    %v709 = vunpack.c.h.b16 %v235
    %v710 = vunpack.c.l.b16 %v236
    %v711 = vunpack.c.h.b16 %v236
    %v712 = vunpack.c.l.b16 %v237
    %v713 = vunpack.c.h.b16 %v237
    %v714 = vunpack.c.l.b16 %v238
    %v715 = vunpack.c.h.b16 %v238
    %v716 = vunpack.c.l.b16 %v239
    %v717 = vunpack.c.h.b16 %v239
    %v718 = vunpack.c.l.b16 %v240
    %v719 = vunpack.c.h.b16 %v240
    %v720 = vunpack.c.l.b16 %v241
    %v721 = vunpack.c.h.b16 %v241
    %v722 = vunpack.c.l.b16 %v242
    %v723 = vunpack.c.h.b16 %v242
    %v724 = vunpack.c.l.b16 %v243
    %v725 = vunpack.c.h.b16 %v243
    %v726 = vunpack.c.l.b16 %v244
    %v727 = vunpack.c.h.b16 %v244
    %v728 = vunpack.c.l.b16 %v245
    %v729 = vunpack.c.h.b16 %v245
    %v730 = vunpack.c.l.b16 %v246
    %v731 = vunpack.c.h.b16 %v246
    %v732 = vunpack.c.l.b16 %v247
    %v733 = vunpack.c.h.b16 %v247
    %v734 = vunpack.c.l.b16 %v248
    %v735 = vunpack.c.h.b16 %v248
    %v736 = vunpack.c.l.b16 %v249
    %v737 = vunpack.c.h.b16 %v249
    %v738 = vunpack.c.l.b16 %v250
    %v739 = vunpack.c.h.b16 %v250
    %v740 = vunpack.c.l.b16 %v251
    %v741 = vunpack.c.h.b16 %v251
    %v742 = vunpack.c.l.b16 %v252
    %v743 = vunpack.c.h.b16 %v252
    %v744 = vunpack.c.l.b16 %v253
    %v745 = vunpack.c.h.b16 %v253
    %v746 = vunpack.c.l.b16 %v254
    %v747 = vunpack.c.h.b16 %v254
    %v748 = vunpack.c.l.b16 %v255
    %v749 = vunpack.c.h.b16 %v255
    %v750 = vunpack.c.l.b16 %v256
    %v751 = vunpack.c.h.b16 %v256
    %v752 = vunpack.c.l.b16 %v257
    %v753 = vunpack.c.h.b16 %v257
    %v754 = vunpack.c.l.b16 %v258
    %v755 = vunpack.c.h.b16 %v258
    %v756 = vunpack.c.l.b16 %v259
    %v757 = vunpack.c.h.b16 %v259
    %v758 = vunpack.c.l.b16 %v260
    %v759 = vunpack.c.h.b16 %v260
    %v760 = vunpack.c.l.b16 %v261
    %v761 = vunpack.c.h.b16 %v261
    %v762 = vunpack.c.l.b16 %v262
    %v763 = vunpack.c.h.b16 %v262
    %v764 = vunpack.c.l.b16 %v263
    %v765 = vunpack.c.h.b16 %v263
    %v766 = vunpack.c.l.b16 %v264
    %v767 = vunpack.c.h.b16 %v264
    %v768 = vunpack.c.l.b16 %v265
    %v769 = vunpack.c.h.b16 %v265
    %v770 = vunpack.c.l.b16 %v266
    %v771 = vunpack.c.h.b16 %v266
    %v772 = vunpack.c.l.b16 %v267
    %v773 = vunpack.c.h.b16 %v267
    %v774 = vunpack.c.l.b16 %v268
    %v775 = vunpack.c.h.b16 %v268
    %v776 = vunpack.c.l.b16 %v269
    %v777 = vunpack.c.h.b16 %v269
    %v778 = vunpack.c.l.b16 %v270
    %v779 = vunpack.c.h.b16 %v270
    %v780 = vunpack.c.l.b16 %v271
    %v781 = vunpack.c.h.b16 %v271
    %v782 = vunpack.c.l.b16 %v272
    %v783 = vunpack.c.h.b16 %v272
    %v784 = vunpack.c.l.b16 %v273
    %v785 = vunpack.c.h.b16 %v273
    %v786 = vunpack.c.l.b16 %v274
    %v787 = vunpack.c.h.b16 %v274
    %v788 = vunpack.c.l.b16 %v275
    %v789 = vunpack.c.h.b16 %v275
    %v790 = vunpack.c.l.b16 %v276
    %v791 = vunpack.c.h.b16 %v276
    %v792 = vunpack.c.l.b16 %v277
    %v793 = vunpack.c.h.b16 %v277
    %v794 = vunpack.c.l.b16 %v278
    %v795 = vunpack.c.h.b16 %v278
    %v796 = vunpack.c.l.b16 %v279
    %v797 = vunpack.c.h.b16 %v279
    %v798 = vunpack.c.l.b16 %v280
    %v799 = vunpack.c.h.b16 %v280
    %v800 = vunpack.c.l.b16 %v281
    %v801 = vunpack.c.h.b16 %v281
    %v802 = vunpack.c.l.b16 %v282
    %v803 = vunpack.c.h.b16 %v282
    %v804 = vunpack.c.l.b16 %v283
    %v805 = vunpack.c.h.b16 %v283
    %v806 = vunpack.c.l.b16 %v284
    %v807 = vunpack.c.h.b16 %v284
    %v808 = vunpack.c.l.b16 %v285
    %v809 = vunpack.c.h.b16 %v285
    %v810 = vunpack.c.l.b16 %v286
    %v811 = vunpack.c.h.b16 %v286
    %v812 = vunpack.c.l.b16 %v287
    %v813 = vunpack.c.h.b16 %v287
    %v814 = vunpack.c.l.b16 %v288
    %v815 = vunpack.c.h.b16 %v288
    %v816 = vunpack.c.l.b16 %v289
    %v817 = vunpack.c.h.b16 %v289
    %v818 = vunpack.c.l.b16 %v290
    %v819 = vunpack.c.h.b16 %v290
    %v820 = vunpack.c.l.b16 %v291
    %v821 = vunpack.c.h.b16 %v291
    %v822 = vunpack.c.l.b16 %v292
    %v823 = vunpack.c.h.b16 %v292
    %v824 = vunpack.c.l.b16 %v293
    %v825 = vunpack.c.h.b16 %v293
    %v826 = vunpack.c.l.b16 %v294
    %v827 = vunpack.c.h.b16 %v294
    %v828 = vunpack.c.l.b16 %v295
    %v829 = vunpack.c.h.b16 %v295
    %v830 = vunpack.c.l.b16 %v296
    %v831 = vunpack.c.h.b16 %v296
    %v832 = vunpack.c.l.b16 %v297
    %v833 = vunpack.c.h.b16 %v297
    %v834 = vunpack.c.l.b16 %v298
    %v835 = vunpack.c.h.b16 %v298
    %v836 = vunpack.c.l.b16 %v299
    %v837 = vunpack.c.h.b16 %v299
    %v838 = vunpack.c.l.b16 %v300
    %v839 = vunpack.c.h.b16 %v300
    %v840 = vunpack.c.l.b16 %v301
    %v841 = vunpack.c.h.b16 %v301
    %v842 = vunpack.c.l.b16 %v302
    %v843 = vunpack.c.h.b16 %v302
    %v844 = vunpack.c.l.b16 %v303
    %v845 = vunpack.c.h.b16 %v303
    %v846 = vunpack.c.l.b16 %v304
    %v847 = vunpack.c.h.b16 %v304
    %v848 = vunpack.c.l.b16 %v305
    %v849 = vunpack.c.h.b16 %v305
    %v850 = vunpack.c.l.b16 %v306
    %v851 = vunpack.c.h.b16 %v306
    %v852 = vunpack.c.l.b16 %v307
    %v853 = vunpack.c.h.b16 %v307
    %v854 = vunpack.c.l.b16 %v308
    %v855 = vunpack.c.h.b16 %v308
    %v856 = vunpack.c.l.b16 %v309
    %v857 = vunpack.c.h.b16 %v309
    %v858 = vunpack.c.l.b16 %v310
    %v859 = vunpack.c.h.b16 %v310
    %v860 = vunpack.c.l.b16 %v311
    %v861 = vunpack.c.h.b16 %v311
    %v862 = vunpack.c.l.b16 %v312
    %v863 = vunpack.c.h.b16 %v312
    %v864 = vunpack.c.l.b16 %v313
    %v865 = vunpack.c.h.b16 %v313
    %v866 = vunpack.c.l.b16 %v314
    %v867 = vunpack.c.h.b16 %v314
    %v868 = vunpack.c.l.b16 %v315
    %v869 = vunpack.c.h.b16 %v315
    %v870 = vunpack.c.l.b16 %v316
    %v871 = vunpack.c.h.b16 %v316
    %v872 = vunpack.c.l.b16 %v317
    %v873 = vunpack.c.h.b16 %v317
    %v874 = vunpack.c.l.b16 %v318
    %v875 = vunpack.c.h.b16 %v318
    %v876 = vunpack.c.l.b16 %v319
    %v877 = vunpack.c.h.b16 %v319
    %v878 = vunpack.c.l.b16 %v320
    %v879 = vunpack.c.h.b16 %v320
    %v880 = vunpack.c.l.b16 %v321
    %v881 = vunpack.c.h.b16 %v321
    %v882 = vunpack.c.l.b16 %v322
    %v883 = vunpack.c.h.b16 %v322
    %v884 = vunpack.c.l.b16 %v323
    %v885 = vunpack.c.h.b16 %v323
    %v886 = vunpack.c.l.b16 %v324
    %v887 = vunpack.c.h.b16 %v324
    %v888 = vunpack.c.l.b16 %v325
    %v889 = vunpack.c.h.b16 %v325
    %v890 = vunpack.c.l.b16 %v326
    %v891 = vunpack.c.h.b16 %v326
    %v892 = vunpack.c.l.b16 %v327
    %v893 = vunpack.c.h.b16 %v327
    %v894 = vunpack.c.l.b16 %v328
    %v895 = vunpack.c.h.b16 %v328
    %v896 = vunpack.c.l.b16 %v329
    %v897 = vunpack.c.h.b16 %v329
    %v898 = vunpack.c.l.b16 %v330
    %v899 = vunpack.c.h.b16 %v330
    %v900 = vunpack.c.l.b16 %v331
    %v901 = vunpack.c.h.b16 %v331
    %v902 = vunpack.c.l.b16 %v332
    %v903 = vunpack.c.h.b16 %v332
    %v904 = vunpack.c.l.b16 %v333
    %v905 = vunpack.c.h.b16 %v333
    %v906 = vunpack.c.l.b16 %v334
    %v907 = vunpack.c.h.b16 %v334
    %v908 = vunpack.c.l.b16 %v335
    %v909 = vunpack.c.h.b16 %v335
    %v910 = vunpack.c.l.b16 %v336
    %v911 = vunpack.c.h.b16 %v336
    %v912 = vunpack.c.l.b16 %v337
    %v913 = vunpack.c.h.b16 %v337
    %v914 = vunpack.c.l.b16 %v338
    %v915 = vunpack.c.h.b16 %v338
    %v916 = vunpack.c.l.b16 %v339
    %v917 = vunpack.c.h.b16 %v339
    %v918 = vunpack.c.l.b16 %v340
    %v919 = vunpack.c.h.b16 %v340
    %v920 = vunpack.c.l.b16 %v341
    %v921 = vunpack.c.h.b16 %v341
    %v922 = vunpack.c.l.b16 %v342
    %v923 = vunpack.c.h.b16 %v342
    %v924 = vunpack.c.l.b16 %v343
    %v925 = vunpack.c.h.b16 %v343
    %v926 = vunpack.c.l.b16 %v344
    %v927 = vunpack.c.h.b16 %v344
    %v928 = vunpack.c.l.b16 %v345
    %v929 = vunpack.c.h.b16 %v345
    %v930 = vunpack.c.l.b16 %v346
    %v931 = vunpack.c.h.b16 %v346
    %v932 = vunpack.c.l.b16 %v347
    %v933 = vunpack.c.h.b16 %v347
    %v934 = vunpack.c.l.b16 %v348
    %v935 = vunpack.c.h.b16 %v348
    %v936 = vunpack.c.l.b16 %v349
    %v937 = vunpack.c.h.b16 %v349
    %v938 = vunpack.c.l.b16 %v350
    %v939 = vunpack.c.h.b16 %v350
    %v940 = vunpack.c.l.b16 %v351
    %v941 = vunpack.c.h.b16 %v351
    %v942 = vunpack.c.l.b16 %v352
    %v943 = vunpack.c.h.b16 %v352
    %v944 = vunpack.c.l.b16 %v353
    %v945 = vunpack.c.h.b16 %v353
    %v946 = vunpack.c.l.b16 %v354
    %v947 = vunpack.c.h.b16 %v354
    %v948 = vunpack.c.l.b16 %v355
    %v949 = vunpack.c.h.b16 %v355
    %v950 = vunpack.c.l.b16 %v356
    %v951 = vunpack.c.h.b16 %v356
    %v952 = vunpack.c.l.b16 %v357
    %v953 = vunpack.c.h.b16 %v357
    %v954 = vunpack.c.l.b16 %v358
    %v955 = vunpack.c.h.b16 %v358
    %v956 = vunpack.c.l.b16 %v359
    %v957 = vunpack.c.h.b16 %v359
    %v958 = vunpack.c.l.b16 %v360
    %v959 = vunpack.c.h.b16 %v360
    %v960 = vunpack.c.l.b16 %v361
    %v961 = vunpack.c.h.b16 %v361
    %v962 = vunpack.c.l.b16 %v362
    %v963 = vunpack.c.h.b16 %v362
    %v964 = vunpack.c.l.b16 %v363
    %v965 = vunpack.c.h.b16 %v363
    %v966 = vunpack.c.l.b16 %v364
    %v967 = vunpack.c.h.b16 %v364
    %v968 = vunpack.c.l.b16 %v365
    %v969 = vunpack.c.h.b16 %v365
    %v970 = vunpack.c.l.b16 %v366
    %v971 = vunpack.c.h.b16 %v366
    %v972 = vunpack.c.l.b16 %v367
    %v973 = vunpack.c.h.b16 %v367
    %v974 = vunpack.c.l.b16 %v368
    %v975 = vunpack.c.h.b16 %v368
    %v976 = vunpack.c.l.b16 %v369
    %v977 = vunpack.c.h.b16 %v369
    %v978 = vunpack.c.l.b16 %v370
    %v979 = vunpack.c.h.b16 %v370
    %v980 = vunpack.c.l.b16 %v371
    %v981 = vunpack.c.h.b16 %v371
    %v982 = vpack.c.b16 %v594, %v590
    %v983 = vpack.c.b16 %v595, %v591
    %v984 = vpack.c.b16 %v596, %v592
    %v985 = vpack.c.b16 %v597, %v593
    %v986 = vpack.c.b16 %v602, %v598
    %v987 = vpack.c.b16 %v603, %v599
    %v988 = vpack.c.b16 %v604, %v600
    %v989 = vpack.c.b16 %v605, %v601
    %v990 = vpack.c.b16 %v610, %v606
    %v991 = vpack.c.b16 %v611, %v607
    %v992 = vpack.c.b16 %v612, %v608
    %v993 = vpack.c.b16 %v613, %v609
    %v994 = vpack.c.b16 %v618, %v614
    %v995 = vpack.c.b16 %v619, %v615
    %v996 = vpack.c.b16 %v620, %v616
    %v997 = vpack.c.b16 %v621, %v617
    %v998 = vpack.c.b16 %v626, %v622
    %v999 = vpack.c.b16 %v627, %v623
    %v1000 = vpack.c.b16 %v628, %v624
    %v1001 = vpack.c.b16 %v629, %v625
    %v1002 = vpack.c.b16 %v634, %v630
    %v1003 = vpack.c.b16 %v635, %v631
    %v1004 = vpack.c.b16 %v636, %v632
    %v1005 = vpack.c.b16 %v637, %v633
    %v1006 = vpack.c.b16 %v642, %v638
    %v1007 = vpack.c.b16 %v643, %v639
    %v1008 = vpack.c.b16 %v644, %v640
    %v1009 = vpack.c.b16 %v645, %v641
    %v1010 = vpack.c.b16 %v650, %v646
    %v1011 = vpack.c.b16 %v651, %v647
    %v1012 = vpack.c.b16 %v652, %v648
    %v1013 = vpack.c.b16 %v653, %v649
    %v1014 = vpack.c.b16 %v658, %v654
    %v1015 = vpack.c.b16 %v659, %v655
    %v1016 = vpack.c.b16 %v660, %v656
    %v1017 = vpack.c.b16 %v661, %v657
    %v1018 = vpack.c.b16 %v666, %v662
    %v1019 = vpack.c.b16 %v667, %v663
    %v1020 = vpack.c.b16 %v668, %v664
    %v1021 = vpack.c.b16 %v669, %v665
    %v1022 = vpack.c.b16 %v674, %v670
    %v1023 = vpack.c.b16 %v675, %v671
    %v1024 = vpack.c.b16 %v676, %v672
    %v1025 = vpack.c.b16 %v677, %v673
    %v1026 = vpack.c.b16 %v682, %v678
    %v1027 = vpack.c.b16 %v683, %v679
    %v1028 = vpack.c.b16 %v684, %v680
    %v1029 = vpack.c.b16 %v685, %v681
    %v1030 = vpack.c.b16 %v690, %v686
    %v1031 = vpack.c.b16 %v691, %v687
    %v1032 = vpack.c.b16 %v692, %v688
    %v1033 = vpack.c.b16 %v693, %v689
    %v1034 = vpack.c.b16 %v698, %v694
    %v1035 = vpack.c.b16 %v699, %v695
    %v1036 = vpack.c.b16 %v700, %v696
    %v1037 = vpack.c.b16 %v701, %v697
    %v1038 = vpack.c.b16 %v706, %v702
    %v1039 = vpack.c.b16 %v707, %v703
    %v1040 = vpack.c.b16 %v708, %v704
    %v1041 = vpack.c.b16 %v709, %v705
    %v1042 = vpack.c.b16 %v714, %v710
    %v1043 = vpack.c.b16 %v715, %v711
    %v1044 = vpack.c.b16 %v716, %v712
    %v1045 = vpack.c.b16 %v717, %v713
    %v1046 = vpack.c.b16 %v722, %v718
    %v1047 = vpack.c.b16 %v723, %v719
    %v1048 = vpack.c.b16 %v724, %v720
    %v1049 = vpack.c.b16 %v725, %v721
    %v1050 = vpack.c.b16 %v730, %v726
    %v1051 = vpack.c.b16 %v731, %v727
    %v1052 = vpack.c.b16 %v732, %v728
    %v1053 = vpack.c.b16 %v733, %v729
    %v1054 = vpack.c.b16 %v738, %v734
    %v1055 = vpack.c.b16 %v739, %v735
    %v1056 = vpack.c.b16 %v740, %v736
    %v1057 = vpack.c.b16 %v741, %v737
    %v1058 = vpack.c.b16 %v746, %v742
    %v1059 = vpack.c.b16 %v747, %v743
    %v1060 = vpack.c.b16 %v748, %v744
    %v1061 = vpack.c.b16 %v749, %v745
    %v1062 = vpack.c.b16 %v754, %v750
    %v1063 = vpack.c.b16 %v755, %v751
    %v1064 = vpack.c.b16 %v756, %v752
    %v1065 = vpack.c.b16 %v757, %v753
    %v1066 = vpack.c.b16 %v762, %v758
    %v1067 = vpack.c.b16 %v763, %v759
    %v1068 = vpack.c.b16 %v764, %v760
    %v1069 = vpack.c.b16 %v765, %v761
    %v1070 = vpack.c.b16 %v770, %v766
    %v1071 = vpack.c.b16 %v771, %v767
    %v1072 = vpack.c.b16 %v772, %v768
    %v1073 = vpack.c.b16 %v773, %v769
    %v1074 = vpack.c.b16 %v778, %v774
    %v1075 = vpack.c.b16 %v779, %v775
    %v1076 = vpack.c.b16 %v780, %v776
    %v1077 = vpack.c.b16 %v781, %v777
    %v1078 = vpack.c.b16 %v786, %v782
    %v1079 = vpack.c.b16 %v787, %v783
    %v1080 = vpack.c.b16 %v788, %v784
    %v1081 = vpack.c.b16 %v789, %v785
    %v1082 = vpack.c.b16 %v794, %v790
    %v1083 = vpack.c.b16 %v795, %v791
    %v1084 = vpack.c.b16 %v796, %v792
    %v1085 = vpack.c.b16 %v797, %v793
    %v1086 = vpack.c.b16 %v802, %v798
    %v1087 = vpack.c.b16 %v803, %v799
    %v1088 = vpack.c.b16 %v804, %v800
    %v1089 = vpack.c.b16 %v805, %v801
    %v1090 = vpack.c.b16 %v810, %v806
    %v1091 = vpack.c.b16 %v811, %v807
    %v1092 = vpack.c.b16 %v812, %v808
    %v1093 = vpack.c.b16 %v813, %v809
    %v1094 = vpack.c.b16 %v818, %v814
    %v1095 = vpack.c.b16 %v819, %v815
    %v1096 = vpack.c.b16 %v820, %v816
    %v1097 = vpack.c.b16 %v821, %v817
    %v1098 = vpack.c.b16 %v826, %v822
    %v1099 = vpack.c.b16 %v827, %v823
    %v1100 = vpack.c.b16 %v828, %v824
    %v1101 = vpack.c.b16 %v829, %v825
    %v1102 = vpack.c.b16 %v834, %v830
    %v1103 = vpack.c.b16 %v835, %v831
    %v1104 = vpack.c.b16 %v836, %v832
    %v1105 = vpack.c.b16 %v837, %v833
    %v1106 = vpack.c.b16 %v842, %v838
    %v1107 = vpack.c.b16 %v843, %v839
    %v1108 = vpack.c.b16 %v844, %v840
    %v1109 = vpack.c.b16 %v845, %v841
    %v1110 = vpack.c.b16 %v850, %v846
    %v1111 = vpack.c.b16 %v851, %v847
    %v1112 = vpack.c.b16 %v852, %v848
    %v1113 = vpack.c.b16 %v853, %v849
    %v1114 = vpack.c.b16 %v858, %v854
    %v1115 = vpack.c.b16 %v859, %v855
    %v1116 = vpack.c.b16 %v860, %v856
    %v1117 = vpack.c.b16 %v861, %v857
    %v1118 = vpack.c.b16 %v866, %v862
    %v1119 = vpack.c.b16 %v867, %v863
    %v1120 = vpack.c.b16 %v868, %v864
    %v1121 = vpack.c.b16 %v869, %v865
    %v1122 = vpack.c.b16 %v874, %v870
    %v1123 = vpack.c.b16 %v875, %v871
    %v1124 = vpack.c.b16 %v876, %v872
    %v1125 = vpack.c.b16 %v877, %v873
    %v1126 = vpack.c.b16 %v882, %v878
    %v1127 = vpack.c.b16 %v883, %v879
    %v1128 = vpack.c.b16 %v884, %v880
    %v1129 = vpack.c.b16 %v885, %v881
    %v1130 = vpack.c.b16 %v890, %v886
    %v1131 = vpack.c.b16 %v891, %v887
    %v1132 = vpack.c.b16 %v892, %v888
    %v1133 = vpack.c.b16 %v893, %v889
    %v1134 = vpack.c.b16 %v898, %v894
    %v1135 = vpack.c.b16 %v899, %v895
    %v1136 = vpack.c.b16 %v900, %v896
    %v1137 = vpack.c.b16 %v901, %v897
    %v1138 = vpack.c.b16 %v906, %v902
    %v1139 = vpack.c.b16 %v907, %v903
    %v1140 = vpack.c.b16 %v908, %v904
    %v1141 = vpack.c.b16 %v909, %v905
    %v1142 = vpack.c.b16 %v914, %v910
    %v1143 = vpack.c.b16 %v915, %v911
    %v1144 = vpack.c.b16 %v916, %v912
    %v1145 = vpack.c.b16 %v917, %v913
    %v1146 = vpack.c.b16 %v922, %v918
    %v1147 = vpack.c.b16 %v923, %v919
    %v1148 = vpack.c.b16 %v924, %v920
    %v1149 = vpack.c.b16 %v925, %v921
    %v1150 = vpack.c.b16 %v930, %v926
    %v1151 = vpack.c.b16 %v931, %v927
    %v1152 = vpack.c.b16 %v932, %v928
    %v1153 = vpack.c.b16 %v933, %v929
    %v1154 = vpack.c.b16 %v938, %v934
    %v1155 = vpack.c.b16 %v939, %v935
    %v1156 = vpack.c.b16 %v940, %v936
    %v1157 = vpack.c.b16 %v941, %v937
    %v1158 = vpack.c.b16 %v946, %v942
    %v1159 = vpack.c.b16 %v947, %v943
    %v1160 = vpack.c.b16 %v948, %v944
    %v1161 = vpack.c.b16 %v949, %v945
    %v1162 = vpack.c.b16 %v954, %v950
    %v1163 = vpack.c.b16 %v955, %v951
    %v1164 = vpack.c.b16 %v956, %v952
    %v1165 = vpack.c.b16 %v957, %v953
    %v1166 = vpack.c.b16 %v962, %v958
    %v1167 = vpack.c.b16 %v963, %v959
    %v1168 = vpack.c.b16 %v964, %v960
    %v1169 = vpack.c.b16 %v965, %v961
    %v1170 = vpack.c.b16 %v970, %v966
    %v1171 = vpack.c.b16 %v971, %v967
    %v1172 = vpack.c.b16 %v972, %v968
    %v1173 = vpack.c.b16 %v973, %v969
    %v1174 = vpack.c.b16 %v978, %v974
    %v1175 = vpack.c.b16 %v979, %v975
    %v1176 = vpack.c.b16 %v980, %v976
    %v1177 = vpack.c.b16 %v981, %v977
    %vm1374 = vcmask 130048
    %v1376 = vsel %vm1374, %v168, 0
    %1378 = vmatprep.subr.bf16.mxu0 %v1011
    %1379 = vmatpush1.bf16.msra.mxu0 %v1010
    %1380 = vmatprep.subr.bf16.mxu0 %v1007
    %1381 = vmatpush1.bf16.msra.mxu0 %v1006
    %1382 = vmatprep.subr.bf16.mxu0 %v1003
    %1383 = vmatpush1.bf16.msra.mxu0 %v1002
    %1384 = vmatprep.subr.bf16.mxu0 %v999
    %1385 = vmatpush1.bf16.msra.mxu0 %v998
    %1386 = vmatprep.subr.bf16.mxu0 %v995
    %1387 = vmatpush1.bf16.msra.mxu0 %v994
    %1388 = vmatprep.subr.bf16.mxu0 %v991
    %1389 = vmatpush1.bf16.msra.mxu0 %v990
    %1390 = vmatprep.subr.bf16.mxu0 %v987
    %1391 = vmatpush1.bf16.msra.mxu0 %v986
    %1392 = vmatprep.subr.bf16.mxu0 %v983
    %1393 = vmatpush1.bf16.msra.mxu0 %v982
    %1394 = vmatprep.subr.bf16.mxu0 %v1043
    %1395 = vmatpush2.bf16.msra.mxu0 %v1042
    %1396 = vmatprep.subr.bf16.mxu0 %v1039
    %1397 = vmatpush2.bf16.msra.mxu0 %v1038
    %1398 = vmatprep.subr.bf16.mxu0 %v1035
    %1399 = vmatpush2.bf16.msra.mxu0 %v1034
    %1400 = vmatprep.subr.bf16.mxu0 %v1031
    %1401 = vmatpush2.bf16.msra.mxu0 %v1030
    %1402 = vmatprep.subr.bf16.mxu0 %v1027
    %1403 = vmatpush2.bf16.msra.mxu0 %v1026
    %1404 = vmatprep.subr.bf16.mxu0 %v1023
    %1405 = vmatpush2.bf16.msra.mxu0 %v1022
    %1406 = vmatprep.subr.bf16.mxu0 %v1019
    %1407 = vmatpush2.bf16.msra.mxu0 %v1018
    %1408 = vmatprep.subr.bf16.mxu0 %v1015
    %1409 = vmatpush2.bf16.msra.mxu0 %v1014
    %1410 = vmatprep.mubr.bf16.mxu0 %v163
    %1411 = vmatmul.mubr.bf16.gmra.mxu0 %v162
    %v1412 = vpop.f32.mrf.mxu0
    %v1413 = vadd.f32 %v377, %v1412
    %v1414 = vpop.f32.mrf.mxu0
    %v1415 = vadd.f32 %v381, %v1414
    %v1416 = vpop.f32.mrf.mxu0
    %v1417 = vpop.f32.mrf.mxu0
    %1418 = vdwg.mxu0
    %1419 = vmatprep.subr.bf16.mxu0 %v1075
    %1420 = vmatpush1.bf16.msra.mxu0 %v1074
    %1421 = vmatprep.subr.bf16.mxu0 %v1071
    %1422 = vmatpush1.bf16.msra.mxu0 %v1070
    %1423 = vmatprep.subr.bf16.mxu0 %v1067
    %1424 = vmatpush1.bf16.msra.mxu0 %v1066
    %1425 = vmatprep.subr.bf16.mxu0 %v1063
    %1426 = vmatpush1.bf16.msra.mxu0 %v1062
    %1427 = vmatprep.subr.bf16.mxu0 %v1059
    %1428 = vmatpush1.bf16.msra.mxu0 %v1058
    %1429 = vmatprep.subr.bf16.mxu0 %v1055
    %1430 = vmatpush1.bf16.msra.mxu0 %v1054
    %1431 = vmatprep.subr.bf16.mxu0 %v1051
    %1432 = vmatpush1.bf16.msra.mxu0 %v1050
    %1433 = vmatprep.subr.bf16.mxu0 %v1047
    %1434 = vmatpush1.bf16.msra.mxu0 %v1046
    %1435 = vmatprep.subr.bf16.mxu0 %v1107
    %1436 = vmatpush2.bf16.msra.mxu0 %v1106
    %1437 = vmatprep.subr.bf16.mxu0 %v1103
    %1438 = vmatpush2.bf16.msra.mxu0 %v1102
    %1439 = vmatprep.subr.bf16.mxu0 %v1099
    %1440 = vmatpush2.bf16.msra.mxu0 %v1098
    %1441 = vmatprep.subr.bf16.mxu0 %v1095
    %1442 = vmatpush2.bf16.msra.mxu0 %v1094
    %1443 = vmatprep.subr.bf16.mxu0 %v1091
    %1444 = vmatpush2.bf16.msra.mxu0 %v1090
    %1445 = vmatprep.subr.bf16.mxu0 %v1087
    %1446 = vmatpush2.bf16.msra.mxu0 %v1086
    %1447 = vmatprep.subr.bf16.mxu0 %v1083
    %1448 = vmatpush2.bf16.msra.mxu0 %v1082
    %1449 = vmatprep.subr.bf16.mxu0 %v1079
    %1450 = vmatpush2.bf16.msra.mxu0 %v1078
    %1451 = vmatprep.mubr.bf16.mxu0 %v165
    %1452 = vmatmul.mubr.bf16.gmra.mxu0 %v164
    %v1453 = vpop.f32.mrf.mxu0
    %v1454 = vadd.f32 %v1413, %v1453
    %v1455 = vpop.f32.mrf.mxu0
    %v1456 = vadd.f32 %v1415, %v1455
    %v1457 = vpop.f32.mrf.mxu0
    %v1458 = vpop.f32.mrf.mxu0
    %1459 = vdwg.mxu0
    %1460 = vmatprep.subr.bf16.mxu0 %v1139
    %1461 = vmatpush1.bf16.msra.mxu0 %v1138
    %1462 = vmatprep.subr.bf16.mxu0 %v1135
    %1463 = vmatpush1.bf16.msra.mxu0 %v1134
    %1464 = vmatprep.subr.bf16.mxu0 %v1131
    %1465 = vmatpush1.bf16.msra.mxu0 %v1130
    %1466 = vmatprep.subr.bf16.mxu0 %v1127
    %1467 = vmatpush1.bf16.msra.mxu0 %v1126
    %1468 = vmatprep.subr.bf16.mxu0 %v1123
    %1469 = vmatpush1.bf16.msra.mxu0 %v1122
    %1470 = vmatprep.subr.bf16.mxu0 %v1119
    %1471 = vmatpush1.bf16.msra.mxu0 %v1118
    %1472 = vmatprep.subr.bf16.mxu0 %v1115
    %1473 = vmatpush1.bf16.msra.mxu0 %v1114
    %1474 = vmatprep.subr.bf16.mxu0 %v1111
    %1475 = vmatpush1.bf16.msra.mxu0 %v1110
    %1476 = vmatprep.subr.bf16.mxu0 %v1171
    %1477 = vmatpush2.bf16.msra.mxu0 %v1170
    %1478 = vmatprep.subr.bf16.mxu0 %v1167
    %1479 = vmatpush2.bf16.msra.mxu0 %v1166
    %1480 = vmatprep.subr.bf16.mxu0 %v1163
    %1481 = vmatpush2.bf16.msra.mxu0 %v1162
    %1482 = vmatprep.subr.bf16.mxu0 %v1159
    %1483 = vmatpush2.bf16.msra.mxu0 %v1158
    %1484 = vmatprep.subr.bf16.mxu0 %v1155
    %1485 = vmatpush2.bf16.msra.mxu0 %v1154
    %1486 = vmatprep.subr.bf16.mxu0 %v1151
    %1487 = vmatpush2.bf16.msra.mxu0 %v1150
    %1488 = vmatprep.subr.bf16.mxu0 %v1147
    %1489 = vmatpush2.bf16.msra.mxu0 %v1146
    %1490 = vmatprep.subr.bf16.mxu0 %v1143
    %1491 = vmatpush2.bf16.msra.mxu0 %v1142
    %1492 = vmatprep.mubr.bf16.mxu0 %v167
    %1493 = vmatmul.mubr.bf16.gmra.mxu0 %v166
    %v1494 = vpop.f32.mrf.mxu0
    %v1495 = vadd.f32 %v1454, %v1494
    %v1496 = vpop.f32.mrf.mxu0
    %v1497 = vadd.f32 %v1456, %v1496
    %v1498 = vpop.f32.mrf.mxu0
    %v1499 = vpop.f32.mrf.mxu0
    %1500 = vdwg.mxu0
    %1501 = vmatprep.subr.bf16.mxu0 0
    %1502 = vmatpush1.bf16.msra.mxu0 0
    %1503 = vmatprep.subr.bf16.mxu0 0
    %1504 = vmatpush1.bf16.msra.mxu0 0
    %1505 = vmatprep.subr.bf16.mxu0 0
    %1506 = vmatpush1.bf16.msra.mxu0 0
    %1507 = vmatprep.subr.bf16.mxu0 0
    %1508 = vmatpush1.bf16.msra.mxu0 0
    %1509 = vmatprep.subr.bf16.mxu0 0
    %1510 = vmatpush1.bf16.msra.mxu0 0
    %1511 = vmatprep.subr.bf16.mxu0 0
    %1512 = vmatpush1.bf16.msra.mxu0 0
    %1513 = vmatprep.subr.bf16.mxu0 0
    %1514 = vmatpush1.bf16.msra.mxu0 0
    %1515 = vmatprep.subr.bf16.mxu0 %v1175
    %1516 = vmatpush1.bf16.msra.mxu0 %v1174
    %1517 = vmatprep.subr.bf16.mxu0 0
    %1518 = vmatpush2.bf16.msra.mxu0 0
    %1519 = vmatprep.subr.bf16.mxu0 0
    %1520 = vmatpush2.bf16.msra.mxu0 0
    %1521 = vmatprep.subr.bf16.mxu0 0
    %1522 = vmatpush2.bf16.msra.mxu0 0
    %1523 = vmatprep.subr.bf16.mxu0 0
    %1524 = vmatpush2.bf16.msra.mxu0 0
    %1525 = vmatprep.subr.bf16.mxu0 0
    %1526 = vmatpush2.bf16.msra.mxu0 0
    %1527 = vmatprep.subr.bf16.mxu0 0
    %1528 = vmatpush2.bf16.msra.mxu0 0
    %1529 = vmatprep.subr.bf16.mxu0 0
    %1530 = vmatpush2.bf16.msra.mxu0 0
    %1531 = vmatprep.subr.bf16.mxu0 0
    %1532 = vmatpush2.bf16.msra.mxu0 0
    %1533 = vmatprep.mubr.bf16.mxu0 0
    %1534 = vmatmul.mubr.bf16.gmra.mxu0 %v1376
    %v1535 = vpop.f32.mrf.mxu0
    %v1536 = vadd.f32 %v1495, %v1535
    %v1537 = vpop.f32.mrf.mxu0
    %v1538 = vadd.f32 %v1497, %v1537
    %v1539 = vpop.f32.mrf.mxu0
    %v1540 = vpop.f32.mrf.mxu0
    %1541 = vdwg.mxu0
    %1542 = vmatprep.subr.bf16.mxu0 %v1013
    %1543 = vmatpush1.bf16.msra.mxu0 %v1012
    %1544 = vmatprep.subr.bf16.mxu0 %v1009
    %1545 = vmatpush1.bf16.msra.mxu0 %v1008
    %1546 = vmatprep.subr.bf16.mxu0 %v1005
    %1547 = vmatpush1.bf16.msra.mxu0 %v1004
    %1548 = vmatprep.subr.bf16.mxu0 %v1001
    %1549 = vmatpush1.bf16.msra.mxu0 %v1000
    %1550 = vmatprep.subr.bf16.mxu0 %v997
    %1551 = vmatpush1.bf16.msra.mxu0 %v996
    %1552 = vmatprep.subr.bf16.mxu0 %v993
    %1553 = vmatpush1.bf16.msra.mxu0 %v992
    %1554 = vmatprep.subr.bf16.mxu0 %v989
    %1555 = vmatpush1.bf16.msra.mxu0 %v988
    %1556 = vmatprep.subr.bf16.mxu0 %v985
    %1557 = vmatpush1.bf16.msra.mxu0 %v984
    %1558 = vmatprep.subr.bf16.mxu0 %v1045
    %1559 = vmatpush2.bf16.msra.mxu0 %v1044
    %1560 = vmatprep.subr.bf16.mxu0 %v1041
    %1561 = vmatpush2.bf16.msra.mxu0 %v1040
    %1562 = vmatprep.subr.bf16.mxu0 %v1037
    %1563 = vmatpush2.bf16.msra.mxu0 %v1036
    %1564 = vmatprep.subr.bf16.mxu0 %v1033
    %1565 = vmatpush2.bf16.msra.mxu0 %v1032
    %1566 = vmatprep.subr.bf16.mxu0 %v1029
    %1567 = vmatpush2.bf16.msra.mxu0 %v1028
    %1568 = vmatprep.subr.bf16.mxu0 %v1025
    %1569 = vmatpush2.bf16.msra.mxu0 %v1024
    %1570 = vmatprep.subr.bf16.mxu0 %v1021
    %1571 = vmatpush2.bf16.msra.mxu0 %v1020
    %1572 = vmatprep.subr.bf16.mxu0 %v1017
    %1573 = vmatpush2.bf16.msra.mxu0 %v1016
    %1574 = vmatprep.mubr.bf16.mxu0 %v163
    %1575 = vmatmul.mubr.bf16.gmra.mxu0 %v162
    %v1576 = vpop.f32.mrf.mxu0
    %v1577 = vadd.f32 %v385, %v1576
    %v1578 = vpop.f32.mrf.mxu0
    %v1579 = vadd.f32 %v389, %v1578
    %v1580 = vpop.f32.mrf.mxu0
    %v1581 = vpop.f32.mrf.mxu0
    %1582 = vdwg.mxu0
    %1583 = vmatprep.subr.bf16.mxu0 %v1077
    %1584 = vmatpush1.bf16.msra.mxu0 %v1076
    %1585 = vmatprep.subr.bf16.mxu0 %v1073
    %1586 = vmatpush1.bf16.msra.mxu0 %v1072
    %1587 = vmatprep.subr.bf16.mxu0 %v1069
    %1588 = vmatpush1.bf16.msra.mxu0 %v1068
    %1589 = vmatprep.subr.bf16.mxu0 %v1065
    %1590 = vmatpush1.bf16.msra.mxu0 %v1064
    %1591 = vmatprep.subr.bf16.mxu0 %v1061
    %1592 = vmatpush1.bf16.msra.mxu0 %v1060
    %1593 = vmatprep.subr.bf16.mxu0 %v1057
    %1594 = vmatpush1.bf16.msra.mxu0 %v1056
    %1595 = vmatprep.subr.bf16.mxu0 %v1053
    %1596 = vmatpush1.bf16.msra.mxu0 %v1052
    %1597 = vmatprep.subr.bf16.mxu0 %v1049
    %1598 = vmatpush1.bf16.msra.mxu0 %v1048
    %1599 = vmatprep.subr.bf16.mxu0 %v1109
    %1600 = vmatpush2.bf16.msra.mxu0 %v1108
    %1601 = vmatprep.subr.bf16.mxu0 %v1105
    %1602 = vmatpush2.bf16.msra.mxu0 %v1104
    %1603 = vmatprep.subr.bf16.mxu0 %v1101
    %1604 = vmatpush2.bf16.msra.mxu0 %v1100
    %1605 = vmatprep.subr.bf16.mxu0 %v1097
    %1606 = vmatpush2.bf16.msra.mxu0 %v1096
    %1607 = vmatprep.subr.bf16.mxu0 %v1093
    %1608 = vmatpush2.bf16.msra.mxu0 %v1092
    %1609 = vmatprep.subr.bf16.mxu0 %v1089
    %1610 = vmatpush2.bf16.msra.mxu0 %v1088
    %1611 = vmatprep.subr.bf16.mxu0 %v1085
    %1612 = vmatpush2.bf16.msra.mxu0 %v1084
    %1613 = vmatprep.subr.bf16.mxu0 %v1081
    %1614 = vmatpush2.bf16.msra.mxu0 %v1080
    %1615 = vmatprep.mubr.bf16.mxu0 %v165
    %1616 = vmatmul.mubr.bf16.gmra.mxu0 %v164
    %v1617 = vpop.f32.mrf.mxu0
    %v1618 = vadd.f32 %v1577, %v1617
    %v1619 = vpop.f32.mrf.mxu0
    %v1620 = vadd.f32 %v1579, %v1619
    %v1621 = vpop.f32.mrf.mxu0
    %v1622 = vpop.f32.mrf.mxu0
    %1623 = vdwg.mxu0
    %1624 = vmatprep.subr.bf16.mxu0 %v1141
    %1625 = vmatpush1.bf16.msra.mxu0 %v1140
    %1626 = vmatprep.subr.bf16.mxu0 %v1137
    %1627 = vmatpush1.bf16.msra.mxu0 %v1136
    %1628 = vmatprep.subr.bf16.mxu0 %v1133
    %1629 = vmatpush1.bf16.msra.mxu0 %v1132
    %1630 = vmatprep.subr.bf16.mxu0 %v1129
    %1631 = vmatpush1.bf16.msra.mxu0 %v1128
    %1632 = vmatprep.subr.bf16.mxu0 %v1125
    %1633 = vmatpush1.bf16.msra.mxu0 %v1124
    %1634 = vmatprep.subr.bf16.mxu0 %v1121
    %1635 = vmatpush1.bf16.msra.mxu0 %v1120
    %1636 = vmatprep.subr.bf16.mxu0 %v1117
    %1637 = vmatpush1.bf16.msra.mxu0 %v1116
    %1638 = vmatprep.subr.bf16.mxu0 %v1113
    %1639 = vmatpush1.bf16.msra.mxu0 %v1112
    %1640 = vmatprep.subr.bf16.mxu0 %v1173
    %1641 = vmatpush2.bf16.msra.mxu0 %v1172
    %1642 = vmatprep.subr.bf16.mxu0 %v1169
    %1643 = vmatpush2.bf16.msra.mxu0 %v1168
    %1644 = vmatprep.subr.bf16.mxu0 %v1165
    %1645 = vmatpush2.bf16.msra.mxu0 %v1164
    %1646 = vmatprep.subr.bf16.mxu0 %v1161
    %1647 = vmatpush2.bf16.msra.mxu0 %v1160
    %1648 = vmatprep.subr.bf16.mxu0 %v1157
    %1649 = vmatpush2.bf16.msra.mxu0 %v1156
    %1650 = vmatprep.subr.bf16.mxu0 %v1153
    %1651 = vmatpush2.bf16.msra.mxu0 %v1152
    %1652 = vmatprep.subr.bf16.mxu0 %v1149
    %1653 = vmatpush2.bf16.msra.mxu0 %v1148
    %1654 = vmatprep.subr.bf16.mxu0 %v1145
    %1655 = vmatpush2.bf16.msra.mxu0 %v1144
    %1656 = vmatprep.mubr.bf16.mxu0 %v167
    %1657 = vmatmul.mubr.bf16.gmra.mxu0 %v166
    %v1658 = vpop.f32.mrf.mxu0
    %v1659 = vadd.f32 %v1618, %v1658
    %v1660 = vpop.f32.mrf.mxu0
    %v1661 = vadd.f32 %v1620, %v1660
    %v1662 = vpop.f32.mrf.mxu0
    %v1663 = vpop.f32.mrf.mxu0
    %1664 = vdwg.mxu0
    %1665 = vmatprep.subr.bf16.mxu0 0
    %1666 = vmatpush1.bf16.msra.mxu0 0
    %1667 = vmatprep.subr.bf16.mxu0 0
    %1668 = vmatpush1.bf16.msra.mxu0 0
    %1669 = vmatprep.subr.bf16.mxu0 0
    %1670 = vmatpush1.bf16.msra.mxu0 0
    %1671 = vmatprep.subr.bf16.mxu0 0
    %1672 = vmatpush1.bf16.msra.mxu0 0
    %1673 = vmatprep.subr.bf16.mxu0 0
    %1674 = vmatpush1.bf16.msra.mxu0 0
    %1675 = vmatprep.subr.bf16.mxu0 0
    %1676 = vmatpush1.bf16.msra.mxu0 0
    %1677 = vmatprep.subr.bf16.mxu0 0
    %1678 = vmatpush1.bf16.msra.mxu0 0
    %1679 = vmatprep.subr.bf16.mxu0 %v1177
    %1680 = vmatpush1.bf16.msra.mxu0 %v1176
    %1681 = vmatprep.subr.bf16.mxu0 0
    %1682 = vmatpush2.bf16.msra.mxu0 0
    %1683 = vmatprep.subr.bf16.mxu0 0
    %1684 = vmatpush2.bf16.msra.mxu0 0
    %1685 = vmatprep.subr.bf16.mxu0 0
    %1686 = vmatpush2.bf16.msra.mxu0 0
    %1687 = vmatprep.subr.bf16.mxu0 0
    %1688 = vmatpush2.bf16.msra.mxu0 0
    %1689 = vmatprep.subr.bf16.mxu0 0
    %1690 = vmatpush2.bf16.msra.mxu0 0
    %1691 = vmatprep.subr.bf16.mxu0 0
    %1692 = vmatpush2.bf16.msra.mxu0 0
    %1693 = vmatprep.subr.bf16.mxu0 0
    %1694 = vmatpush2.bf16.msra.mxu0 0
    %1695 = vmatprep.subr.bf16.mxu0 0
    %1696 = vmatpush2.bf16.msra.mxu0 0
    %1697 = vmatprep.mubr.bf16.mxu0 0
    %1698 = vmatmul.mubr.bf16.gmra.mxu0 %v1376
    %v1699 = vpop.f32.mrf.mxu0
    %v1700 = vadd.f32 %v1659, %v1699
    %v1701 = vpop.f32.mrf.mxu0
    %v1702 = vadd.f32 %v1661, %v1701
    %v1703 = vpop.f32.mrf.mxu0
    %v1704 = vpop.f32.mrf.mxu0
    %1705 = vdwg.mxu0
    %v1706 = vld [vmem:[#allocation7] sm:$0xff]
    %v1707 = vld [vmem:[#allocation7 + $0x8] sm:$0xff]
    %v1708 = vld [vmem:[#allocation7 + $0x10] sm:$0xff]
    %v1709 = vld [vmem:[#allocation7 + $0x18] sm:$0xff]
    %v1710 = vld [vmem:[#allocation7 + $0x20] sm:$0xff]
    %v1711 = vld [vmem:[#allocation7 + $0x28] sm:$0xff]
    %v1712 = vld [vmem:[#allocation7 + $0x30] sm:$0xff]
    %v1713 = vld [vmem:[#allocation7 + $0x38] sm:$0xff]
    %v1714 = vld [vmem:[#allocation7 + $0x40] sm:$0xff]
    %v1715 = vld [vmem:[#allocation7 + $0x48] sm:$0xff]
    %v1716 = vld [vmem:[#allocation7 + $0x50] sm:$0xff]
    %v1717 = vld [vmem:[#allocation7 + $0x58] sm:$0xff]
    %v1718 = vld [vmem:[#allocation7 + $0x60] sm:$0xff]
    %v1719 = vld [vmem:[#allocation7 + $0x68] sm:$0xff]
    %v1720 = vld [vmem:[#allocation7 + $0x70] sm:$0xff]
    %v1721 = vld [vmem:[#allocation7 + $0x78] sm:$0xff]
    %v1722 = vld [vmem:[#allocation7 + $0x80] sm:$0xff]
    %v1723 = vld [vmem:[#allocation7 + $0x88] sm:$0xff]
    %v1724 = vld [vmem:[#allocation7 + $0x90] sm:$0xff]
    %v1725 = vld [vmem:[#allocation7 + $0x98] sm:$0xff]
    %v1726 = vld [vmem:[#allocation7 + $0xa0] sm:$0xff]
    %v1727 = vld [vmem:[#allocation7 + $0xa8] sm:$0xff]
    %v1728 = vld [vmem:[#allocation7 + $0xb0] sm:$0xff]
    %v1729 = vld [vmem:[#allocation7 + $0xb8] sm:$0xff]
    %v1730 = vld [vmem:[#allocation7 + $0xc0] sm:$0xff]
    %v1731 = vld [vmem:[#allocation7 + $0xc8] sm:$0xff]
    %v1732 = vld [vmem:[#allocation7 + $0xd0] sm:$0xff]
    %v1733 = vld [vmem:[#allocation7 + $0xd8] sm:$0xff]
    %v1734 = vld [vmem:[#allocation7 + $0xe0] sm:$0xff]
    %v1735 = vld [vmem:[#allocation7 + $0xe8] sm:$0xff]
    %v1736 = vld [vmem:[#allocation7 + $0xf0] sm:$0xff]
    %v1737 = vld [vmem:[#allocation7 + $0xf8] sm:$0xff]
    %v1738 = vld [vmem:[#allocation7 + $0x100] sm:$0xff]
    %v1739 = vld [vmem:[#allocation7 + $0x108] sm:$0xff]
    %v1740 = vld [vmem:[#allocation7 + $0x110] sm:$0xff]
    %v1741 = vld [vmem:[#allocation7 + $0x118] sm:$0xff]
    %v1742 = vld [vmem:[#allocation7 + $0x120] sm:$0xff]
    %v1743 = vld [vmem:[#allocation7 + $0x128] sm:$0xff]
    %v1744 = vld [vmem:[#allocation7 + $0x130] sm:$0xff]
    %v1745 = vld [vmem:[#allocation7 + $0x138] sm:$0xff]
    %v1746 = vld [vmem:[#allocation7 + $0x140] sm:$0xff]
    %v1747 = vld [vmem:[#allocation7 + $0x148] sm:$0xff]
    %v1748 = vld [vmem:[#allocation7 + $0x150] sm:$0xff]
    %v1749 = vld [vmem:[#allocation7 + $0x158] sm:$0xff]
    %v1750 = vld [vmem:[#allocation7 + $0x160] sm:$0xff]
    %v1751 = vld [vmem:[#allocation7 + $0x168] sm:$0xff]
    %v1752 = vld [vmem:[#allocation7 + $0x170] sm:$0xff]
    %v1753 = vld [vmem:[#allocation7 + $0x178] sm:$0xff]
    %v1754 = vld [vmem:[#allocation7 + $0x180] sm:$0xff]
    %v1755 = vld [vmem:[#allocation7 + $0x188] sm:$0xff]
    %v1756 = vld [vmem:[#allocation7 + $0x190] sm:$0xff]
    %v1757 = vld [vmem:[#allocation7 + $0x198] sm:$0xff]
    %v1758 = vld [vmem:[#allocation7 + $0x1a0] sm:$0xff]
    %v1759 = vld [vmem:[#allocation7 + $0x1a8] sm:$0xff]
    %v1760 = vld [vmem:[#allocation7 + $0x1b0] sm:$0xff]
    %v1761 = vld [vmem:[#allocation7 + $0x1b8] sm:$0xff]
    %v1762 = vld [vmem:[#allocation7 + $0x1c0] sm:$0xff]
    %v1763 = vld [vmem:[#allocation7 + $0x1c8] sm:$0xff]
    %v1764 = vld [vmem:[#allocation7 + $0x1d0] sm:$0xff]
    %v1765 = vld [vmem:[#allocation7 + $0x1d8] sm:$0xff]
    %v1766 = vld [vmem:[#allocation7 + $0x1e0] sm:$0xff]
    %v1767 = vld [vmem:[#allocation7 + $0x1e8] sm:$0xff]
    %v1768 = vld [vmem:[#allocation7 + $0x1f0] sm:$0xff]
    %v1769 = vld [vmem:[#allocation7 + $0x1f8] sm:$0xff]
    %v1770 = vld [vmem:[#allocation7 + $0x200] sm:$0xff]
    %v1771 = vld [vmem:[#allocation7 + $0x208] sm:$0xff]
    %v1772 = vld [vmem:[#allocation7 + $0x210] sm:$0xff]
    %v1773 = vld [vmem:[#allocation7 + $0x218] sm:$0xff]
    %v1774 = vld [vmem:[#allocation7 + $0x220] sm:$0xff]
    %v1775 = vld [vmem:[#allocation7 + $0x228] sm:$0xff]
    %v1776 = vld [vmem:[#allocation7 + $0x230] sm:$0xff]
    %v1777 = vld [vmem:[#allocation7 + $0x238] sm:$0xff]
    %v1778 = vld [vmem:[#allocation7 + $0x240] sm:$0xff]
    %v1779 = vld [vmem:[#allocation7 + $0x248] sm:$0xff]
    %v1780 = vld [vmem:[#allocation7 + $0x250] sm:$0xff]
    %v1781 = vld [vmem:[#allocation7 + $0x258] sm:$0xff]
    %v1782 = vld [vmem:[#allocation7 + $0x260] sm:$0xff]
    %v1783 = vld [vmem:[#allocation7 + $0x268] sm:$0xff]
    %v1784 = vld [vmem:[#allocation7 + $0x270] sm:$0xff]
    %v1785 = vld [vmem:[#allocation7 + $0x278] sm:$0xff]
    %v1786 = vld [vmem:[#allocation7 + $0x280] sm:$0xff]
    %v1787 = vld [vmem:[#allocation7 + $0x288] sm:$0xff]
    %v1788 = vld [vmem:[#allocation7 + $0x290] sm:$0xff]
    %v1789 = vld [vmem:[#allocation7 + $0x298] sm:$0xff]
    %v1790 = vld [vmem:[#allocation7 + $0x2a0] sm:$0xff]
    %v1791 = vld [vmem:[#allocation7 + $0x2a8] sm:$0xff]
    %v1792 = vld [vmem:[#allocation7 + $0x2b0] sm:$0xff]
    %v1793 = vld [vmem:[#allocation7 + $0x2b8] sm:$0xff]
    %v1794 = vld [vmem:[#allocation7 + $0x2c0] sm:$0xff]
    %v1795 = vld [vmem:[#allocation7 + $0x2c8] sm:$0xff]
    %v1796 = vld [vmem:[#allocation7 + $0x2d0] sm:$0xff]
    %v1797 = vld [vmem:[#allocation7 + $0x2d8] sm:$0xff]
    %v1798 = vld [vmem:[#allocation7 + $0x2e0] sm:$0xff]
    %v1799 = vld [vmem:[#allocation7 + $0x2e8] sm:$0xff]
    %v1800 = vld [vmem:[#allocation7 + $0x2f0] sm:$0xff]
    %v1801 = vld [vmem:[#allocation7 + $0x2f8] sm:$0xff]
    %v1802 = vld [vmem:[#allocation7 + $0x300] sm:$0xff]
    %v1803 = vld [vmem:[#allocation7 + $0x308] sm:$0xff]
    %v1804 = vld [vmem:[#allocation7 + $0x310] sm:$0xff]
    %v1805 = vld [vmem:[#allocation7 + $0x318] sm:$0xff]
    %v1806 = vld [vmem:[#allocation7 + $0x320] sm:$0xff]
    %v1807 = vld [vmem:[#allocation7 + $0x328] sm:$0xff]
    %v1808 = vld [vmem:[#allocation7 + $0x330] sm:$0xff]
    %v1809 = vld [vmem:[#allocation7 + $0x338] sm:$0xff]
    %v1810 = vld [vmem:[#allocation7 + $0x340] sm:$0xff]
    %v1811 = vld [vmem:[#allocation7 + $0x348] sm:$0xff]
    %v1812 = vld [vmem:[#allocation7 + $0x350] sm:$0xff]
    %v1813 = vld [vmem:[#allocation7 + $0x358] sm:$0xff]
    %v1814 = vld [vmem:[#allocation7 + $0x360] sm:$0xff]
    %v1815 = vld [vmem:[#allocation7 + $0x368] sm:$0xff]
    %v1816 = vld [vmem:[#allocation7 + $0x370] sm:$0xff]
    %v1817 = vld [vmem:[#allocation7 + $0x378] sm:$0xff]
    %v1818 = vld [vmem:[#allocation7 + $0x380] sm:$0xff]
    %v1819 = vld [vmem:[#allocation7 + $0x388] sm:$0xff]
    %v1820 = vld [vmem:[#allocation7 + $0x390] sm:$0xff]
    %v1821 = vld [vmem:[#allocation7 + $0x398] sm:$0xff]
    %v1822 = vld [vmem:[#allocation7 + $0x3a0] sm:$0xff]
    %v1823 = vld [vmem:[#allocation7 + $0x3a8] sm:$0xff]
    %v1824 = vld [vmem:[#allocation7 + $0x3b0] sm:$0xff]
    %v1825 = vld [vmem:[#allocation7 + $0x3b8] sm:$0xff]
    %v1826 = vld [vmem:[#allocation7 + $0x3c0] sm:$0xff]
    %v1827 = vld [vmem:[#allocation7 + $0x3c8] sm:$0xff]
    %v1828 = vld [vmem:[#allocation7 + $0x3d0] sm:$0xff]
    %v1829 = vld [vmem:[#allocation7 + $0x3d8] sm:$0xff]
    %v1830 = vld [vmem:[#allocation7 + $0x3e0] sm:$0xff]
    %v1831 = vld [vmem:[#allocation7 + $0x3e8] sm:$0xff]
    %v1832 = vld [vmem:[#allocation7 + $0x3f0] sm:$0xff]
    %v1833 = vld [vmem:[#allocation7 + $0x3f8] sm:$0xff]
    %v1834 = vld [vmem:[#allocation7 + $0x400] sm:$0xff]
    %v1835 = vld [vmem:[#allocation7 + $0x408] sm:$0xff]
    %v1836 = vld [vmem:[#allocation7 + $0x410] sm:$0xff]
    %v1837 = vld [vmem:[#allocation7 + $0x418] sm:$0xff]
    %v1838 = vld [vmem:[#allocation7 + $0x420] sm:$0xff]
    %v1839 = vld [vmem:[#allocation7 + $0x428] sm:$0xff]
    %v1840 = vld [vmem:[#allocation7 + $0x430] sm:$0xff]
    %v1841 = vld [vmem:[#allocation7 + $0x438] sm:$0xff]
    %v1842 = vld [vmem:[#allocation7 + $0x440] sm:$0xff]
    %v1843 = vld [vmem:[#allocation7 + $0x448] sm:$0xff]
    %v1844 = vld [vmem:[#allocation7 + $0x450] sm:$0xff]
    %v1845 = vld [vmem:[#allocation7 + $0x458] sm:$0xff]
    %v1846 = vld [vmem:[#allocation7 + $0x460] sm:$0xff]
    %v1847 = vld [vmem:[#allocation7 + $0x468] sm:$0xff]
    %v1848 = vld [vmem:[#allocation7 + $0x470] sm:$0xff]
    %v1849 = vld [vmem:[#allocation7 + $0x478] sm:$0xff]
    %v1850 = vld [vmem:[#allocation7 + $0x480] sm:$0xff]
    %v1851 = vld [vmem:[#allocation7 + $0x488] sm:$0xff]
    %v1852 = vld [vmem:[#allocation7 + $0x490] sm:$0xff]
    %v1853 = vld [vmem:[#allocation7 + $0x498] sm:$0xff]
    %v1854 = vld [vmem:[#allocation7 + $0x4a0] sm:$0xff]
    %v1855 = vld [vmem:[#allocation7 + $0x4a8] sm:$0xff]
    %v1856 = vld [vmem:[#allocation7 + $0x4b0] sm:$0xff]
    %v1857 = vld [vmem:[#allocation7 + $0x4b8] sm:$0xff]
    %v1858 = vld [vmem:[#allocation7 + $0x4c0] sm:$0xff]
    %v1859 = vld [vmem:[#allocation7 + $0x4c8] sm:$0xff]
    %v1860 = vld [vmem:[#allocation7 + $0x4d0] sm:$0xff]
    %v1861 = vld [vmem:[#allocation7 + $0x4d8] sm:$0xff]
    %v1862 = vld [vmem:[#allocation7 + $0x4e0] sm:$0xff]
    %v1863 = vld [vmem:[#allocation7 + $0x4e8] sm:$0xff]
    %v1864 = vld [vmem:[#allocation7 + $0x4f0] sm:$0xff]
    %v1865 = vld [vmem:[#allocation7 + $0x4f8] sm:$0xff]
    %v1866 = vld [vmem:[#allocation7 + $0x500] sm:$0xff]
    %v1867 = vld [vmem:[#allocation7 + $0x508] sm:$0xff]
    %v1868 = vld [vmem:[#allocation7 + $0x510] sm:$0xff]
    %v1869 = vld [vmem:[#allocation7 + $0x518] sm:$0xff]
    %v1870 = vld [vmem:[#allocation7 + $0x520] sm:$0xff]
    %v1871 = vld [vmem:[#allocation7 + $0x528] sm:$0xff]
    %v1872 = vld [vmem:[#allocation7 + $0x530] sm:$0xff]
    %v1873 = vld [vmem:[#allocation7 + $0x538] sm:$0xff]
    %v1874 = vld [vmem:[#allocation7 + $0x540] sm:$0xff]
    %v1875 = vld [vmem:[#allocation7 + $0x548] sm:$0xff]
    %v1876 = vld [vmem:[#allocation7 + $0x550] sm:$0xff]
    %v1877 = vld [vmem:[#allocation7 + $0x558] sm:$0xff]
    %v1878 = vld [vmem:[#allocation7 + $0x560] sm:$0xff]
    %v1879 = vld [vmem:[#allocation7 + $0x568] sm:$0xff]
    %v1880 = vld [vmem:[#allocation7 + $0x570] sm:$0xff]
    %v1881 = vld [vmem:[#allocation7 + $0x578] sm:$0xff]
    %v1882 = vld [vmem:[#allocation7 + $0x580] sm:$0xff]
    %v1883 = vld [vmem:[#allocation7 + $0x588] sm:$0xff]
    %v1884 = vld [vmem:[#allocation7 + $0x590] sm:$0xff]
    %v1885 = vld [vmem:[#allocation7 + $0x598] sm:$0xff]
    %v1886 = vld [vmem:[#allocation7 + $0x5a0] sm:$0xff]
    %v1887 = vld [vmem:[#allocation7 + $0x5a8] sm:$0xff]
    %v1888 = vld [vmem:[#allocation7 + $0x5b0] sm:$0xff]
    %v1889 = vld [vmem:[#allocation7 + $0x5b8] sm:$0xff]
    %v1890 = vld [vmem:[#allocation7 + $0x5c0] sm:$0xff]
    %v1891 = vld [vmem:[#allocation7 + $0x5c8] sm:$0xff]
    %v1892 = vld [vmem:[#allocation7 + $0x5d0] sm:$0xff]
    %v1893 = vld [vmem:[#allocation7 + $0x5d8] sm:$0xff]
    %v1894 = vld [vmem:[#allocation7 + $0x5e0] sm:$0xff]
    %v1895 = vld [vmem:[#allocation7 + $0x5e8] sm:$0xff]
    %v1896 = vld [vmem:[#allocation7 + $0x5f0] sm:$0xff]
    %v1897 = vld [vmem:[#allocation7 + $0x5f8] sm:$0xff]
    %v1898 = vld [vmem:[#allocation7 + $0x600] sm:$0xff]
    %v1899 = vld [vmem:[#allocation7 + $0x608] sm:$0xff]
    %v1900 = vld [vmem:[#allocation7 + $0x610] sm:$0xff]
    %v1901 = vld [vmem:[#allocation7 + $0x618] sm:$0xff]
    %v1902 = vld [vmem:[#allocation8] sm:$0xf]
    %v1904 = vlaneseq
    %v1905 = vshrl.u32 %v1904, 7
    %v1906 = vsub.s32 0, %v1905
    %v1907 = vrot.slane %v1902, %v1906
    %v1908 = vlaneseq
    %v1909 = vshrl.u32 %v1908, 7
    %v1910 = vsub.s32 1, %v1909
    %v1911 = vrot.slane %v1902, %v1910
    %v1912 = vlaneseq
    %v1913 = vshrl.u32 %v1912, 7
    %v1914 = vsub.s32 2, %v1913
    %v1915 = vrot.slane %v1902, %v1914
    %v1916 = vlaneseq
    %v1917 = vshrl.u32 %v1916, 7
    %v1918 = vsub.s32 3, %v1917
    %v1919 = vrot.slane %v1902, %v1918
    %v2120 = vunpack.c.l.b16 %v1706
    %v2121 = vunpack.c.h.b16 %v1706
    %v2122 = vunpack.c.l.b16 %v1707
    %v2123 = vunpack.c.h.b16 %v1707
    %v2124 = vunpack.c.l.b16 %v1708
    %v2125 = vunpack.c.h.b16 %v1708
    %v2126 = vunpack.c.l.b16 %v1709
    %v2127 = vunpack.c.h.b16 %v1709
    %v2128 = vunpack.c.l.b16 %v1710
    %v2129 = vunpack.c.h.b16 %v1710
    %v2130 = vunpack.c.l.b16 %v1711
    %v2131 = vunpack.c.h.b16 %v1711
    %v2132 = vunpack.c.l.b16 %v1712
    %v2133 = vunpack.c.h.b16 %v1712
    %v2134 = vunpack.c.l.b16 %v1713
    %v2135 = vunpack.c.h.b16 %v1713
    %v2136 = vunpack.c.l.b16 %v1714
    %v2137 = vunpack.c.h.b16 %v1714
    %v2138 = vunpack.c.l.b16 %v1715
    %v2139 = vunpack.c.h.b16 %v1715
    %v2140 = vunpack.c.l.b16 %v1716
    %v2141 = vunpack.c.h.b16 %v1716
    %v2142 = vunpack.c.l.b16 %v1717
    %v2143 = vunpack.c.h.b16 %v1717
    %v2144 = vunpack.c.l.b16 %v1718
    %v2145 = vunpack.c.h.b16 %v1718
    %v2146 = vunpack.c.l.b16 %v1719
    %v2147 = vunpack.c.h.b16 %v1719
    %v2148 = vunpack.c.l.b16 %v1720
    %v2149 = vunpack.c.h.b16 %v1720
    %v2150 = vunpack.c.l.b16 %v1721
    %v2151 = vunpack.c.h.b16 %v1721
    %v2152 = vunpack.c.l.b16 %v1722
    %v2153 = vunpack.c.h.b16 %v1722
    %v2154 = vunpack.c.l.b16 %v1723
    %v2155 = vunpack.c.h.b16 %v1723
    %v2156 = vunpack.c.l.b16 %v1724
    %v2157 = vunpack.c.h.b16 %v1724
    %v2158 = vunpack.c.l.b16 %v1725
    %v2159 = vunpack.c.h.b16 %v1725
    %v2160 = vunpack.c.l.b16 %v1726
    %v2161 = vunpack.c.h.b16 %v1726
    %v2162 = vunpack.c.l.b16 %v1727
    %v2163 = vunpack.c.h.b16 %v1727
    %v2164 = vunpack.c.l.b16 %v1728
    %v2165 = vunpack.c.h.b16 %v1728
    %v2166 = vunpack.c.l.b16 %v1729
    %v2167 = vunpack.c.h.b16 %v1729
    %v2168 = vunpack.c.l.b16 %v1730
    %v2169 = vunpack.c.h.b16 %v1730
    %v2170 = vunpack.c.l.b16 %v1731
    %v2171 = vunpack.c.h.b16 %v1731
    %v2172 = vunpack.c.l.b16 %v1732
    %v2173 = vunpack.c.h.b16 %v1732
    %v2174 = vunpack.c.l.b16 %v1733
    %v2175 = vunpack.c.h.b16 %v1733
    %v2176 = vunpack.c.l.b16 %v1734
    %v2177 = vunpack.c.h.b16 %v1734
    %v2178 = vunpack.c.l.b16 %v1735
    %v2179 = vunpack.c.h.b16 %v1735
    %v2180 = vunpack.c.l.b16 %v1736
    %v2181 = vunpack.c.h.b16 %v1736
    %v2182 = vunpack.c.l.b16 %v1737
    %v2183 = vunpack.c.h.b16 %v1737
    %v2184 = vunpack.c.l.b16 %v1738
    %v2185 = vunpack.c.h.b16 %v1738
    %v2186 = vunpack.c.l.b16 %v1739
    %v2187 = vunpack.c.h.b16 %v1739
    %v2188 = vunpack.c.l.b16 %v1740
    %v2189 = vunpack.c.h.b16 %v1740
    %v2190 = vunpack.c.l.b16 %v1741
    %v2191 = vunpack.c.h.b16 %v1741
    %v2192 = vunpack.c.l.b16 %v1742
    %v2193 = vunpack.c.h.b16 %v1742
    %v2194 = vunpack.c.l.b16 %v1743
    %v2195 = vunpack.c.h.b16 %v1743
    %v2196 = vunpack.c.l.b16 %v1744
    %v2197 = vunpack.c.h.b16 %v1744
    %v2198 = vunpack.c.l.b16 %v1745
    %v2199 = vunpack.c.h.b16 %v1745
    %v2200 = vunpack.c.l.b16 %v1746
    %v2201 = vunpack.c.h.b16 %v1746
    %v2202 = vunpack.c.l.b16 %v1747
    %v2203 = vunpack.c.h.b16 %v1747
    %v2204 = vunpack.c.l.b16 %v1748
    %v2205 = vunpack.c.h.b16 %v1748
    %v2206 = vunpack.c.l.b16 %v1749
    %v2207 = vunpack.c.h.b16 %v1749
    %v2208 = vunpack.c.l.b16 %v1750
    %v2209 = vunpack.c.h.b16 %v1750
    %v2210 = vunpack.c.l.b16 %v1751
    %v2211 = vunpack.c.h.b16 %v1751
    %v2212 = vunpack.c.l.b16 %v1752
    %v2213 = vunpack.c.h.b16 %v1752
    %v2214 = vunpack.c.l.b16 %v1753
    %v2215 = vunpack.c.h.b16 %v1753
    %v2216 = vunpack.c.l.b16 %v1754
    %v2217 = vunpack.c.h.b16 %v1754
    %v2218 = vunpack.c.l.b16 %v1755
    %v2219 = vunpack.c.h.b16 %v1755
    %v2220 = vunpack.c.l.b16 %v1756
    %v2221 = vunpack.c.h.b16 %v1756
    %v2222 = vunpack.c.l.b16 %v1757
    %v2223 = vunpack.c.h.b16 %v1757
    %v2224 = vunpack.c.l.b16 %v1758
    %v2225 = vunpack.c.h.b16 %v1758
    %v2226 = vunpack.c.l.b16 %v1759
    %v2227 = vunpack.c.h.b16 %v1759
    %v2228 = vunpack.c.l.b16 %v1760
    %v2229 = vunpack.c.h.b16 %v1760
    %v2230 = vunpack.c.l.b16 %v1761
    %v2231 = vunpack.c.h.b16 %v1761
    %v2232 = vunpack.c.l.b16 %v1762
    %v2233 = vunpack.c.h.b16 %v1762
    %v2234 = vunpack.c.l.b16 %v1763
    %v2235 = vunpack.c.h.b16 %v1763
    %v2236 = vunpack.c.l.b16 %v1764
    %v2237 = vunpack.c.h.b16 %v1764
    %v2238 = vunpack.c.l.b16 %v1765
    %v2239 = vunpack.c.h.b16 %v1765
    %v2240 = vunpack.c.l.b16 %v1766
    %v2241 = vunpack.c.h.b16 %v1766
    %v2242 = vunpack.c.l.b16 %v1767
    %v2243 = vunpack.c.h.b16 %v1767
    %v2244 = vunpack.c.l.b16 %v1768
    %v2245 = vunpack.c.h.b16 %v1768
    %v2246 = vunpack.c.l.b16 %v1769
    %v2247 = vunpack.c.h.b16 %v1769
    %v2248 = vunpack.c.l.b16 %v1770
    %v2249 = vunpack.c.h.b16 %v1770
    %v2250 = vunpack.c.l.b16 %v1771
    %v2251 = vunpack.c.h.b16 %v1771
    %v2252 = vunpack.c.l.b16 %v1772
    %v2253 = vunpack.c.h.b16 %v1772
    %v2254 = vunpack.c.l.b16 %v1773
    %v2255 = vunpack.c.h.b16 %v1773
    %v2256 = vunpack.c.l.b16 %v1774
    %v2257 = vunpack.c.h.b16 %v1774
    %v2258 = vunpack.c.l.b16 %v1775
    %v2259 = vunpack.c.h.b16 %v1775
    %v2260 = vunpack.c.l.b16 %v1776
    %v2261 = vunpack.c.h.b16 %v1776
    %v2262 = vunpack.c.l.b16 %v1777
    %v2263 = vunpack.c.h.b16 %v1777
    %v2264 = vunpack.c.l.b16 %v1778
    %v2265 = vunpack.c.h.b16 %v1778
    %v2266 = vunpack.c.l.b16 %v1779
    %v2267 = vunpack.c.h.b16 %v1779
    %v2268 = vunpack.c.l.b16 %v1780
    %v2269 = vunpack.c.h.b16 %v1780
    %v2270 = vunpack.c.l.b16 %v1781
    %v2271 = vunpack.c.h.b16 %v1781
    %v2272 = vunpack.c.l.b16 %v1782
    %v2273 = vunpack.c.h.b16 %v1782
    %v2274 = vunpack.c.l.b16 %v1783
    %v2275 = vunpack.c.h.b16 %v1783
    %v2276 = vunpack.c.l.b16 %v1784
    %v2277 = vunpack.c.h.b16 %v1784
    %v2278 = vunpack.c.l.b16 %v1785
    %v2279 = vunpack.c.h.b16 %v1785
    %v2280 = vunpack.c.l.b16 %v1786
    %v2281 = vunpack.c.h.b16 %v1786
    %v2282 = vunpack.c.l.b16 %v1787
    %v2283 = vunpack.c.h.b16 %v1787
    %v2284 = vunpack.c.l.b16 %v1788
    %v2285 = vunpack.c.h.b16 %v1788
    %v2286 = vunpack.c.l.b16 %v1789
    %v2287 = vunpack.c.h.b16 %v1789
    %v2288 = vunpack.c.l.b16 %v1790
    %v2289 = vunpack.c.h.b16 %v1790
    %v2290 = vunpack.c.l.b16 %v1791
    %v2291 = vunpack.c.h.b16 %v1791
    %v2292 = vunpack.c.l.b16 %v1792
    %v2293 = vunpack.c.h.b16 %v1792
    %v2294 = vunpack.c.l.b16 %v1793
    %v2295 = vunpack.c.h.b16 %v1793
    %v2296 = vunpack.c.l.b16 %v1794
    %v2297 = vunpack.c.h.b16 %v1794
    %v2298 = vunpack.c.l.b16 %v1795
    %v2299 = vunpack.c.h.b16 %v1795
    %v2300 = vunpack.c.l.b16 %v1796
    %v2301 = vunpack.c.h.b16 %v1796
    %v2302 = vunpack.c.l.b16 %v1797
    %v2303 = vunpack.c.h.b16 %v1797
    %v2304 = vunpack.c.l.b16 %v1798
    %v2305 = vunpack.c.h.b16 %v1798
    %v2306 = vunpack.c.l.b16 %v1799
    %v2307 = vunpack.c.h.b16 %v1799
    %v2308 = vunpack.c.l.b16 %v1800
    %v2309 = vunpack.c.h.b16 %v1800
    %v2310 = vunpack.c.l.b16 %v1801
    %v2311 = vunpack.c.h.b16 %v1801
    %v2312 = vunpack.c.l.b16 %v1802
    %v2313 = vunpack.c.h.b16 %v1802
    %v2314 = vunpack.c.l.b16 %v1803
    %v2315 = vunpack.c.h.b16 %v1803
    %v2316 = vunpack.c.l.b16 %v1804
    %v2317 = vunpack.c.h.b16 %v1804
    %v2318 = vunpack.c.l.b16 %v1805
    %v2319 = vunpack.c.h.b16 %v1805
    %v2320 = vunpack.c.l.b16 %v1806
    %v2321 = vunpack.c.h.b16 %v1806
    %v2322 = vunpack.c.l.b16 %v1807
    %v2323 = vunpack.c.h.b16 %v1807
    %v2324 = vunpack.c.l.b16 %v1808
    %v2325 = vunpack.c.h.b16 %v1808
    %v2326 = vunpack.c.l.b16 %v1809
    %v2327 = vunpack.c.h.b16 %v1809
    %v2328 = vunpack.c.l.b16 %v1810
    %v2329 = vunpack.c.h.b16 %v1810
    %v2330 = vunpack.c.l.b16 %v1811
    %v2331 = vunpack.c.h.b16 %v1811
    %v2332 = vunpack.c.l.b16 %v1812
    %v2333 = vunpack.c.h.b16 %v1812
    %v2334 = vunpack.c.l.b16 %v1813
    %v2335 = vunpack.c.h.b16 %v1813
    %v2336 = vunpack.c.l.b16 %v1814
    %v2337 = vunpack.c.h.b16 %v1814
    %v2338 = vunpack.c.l.b16 %v1815
    %v2339 = vunpack.c.h.b16 %v1815
    %v2340 = vunpack.c.l.b16 %v1816
    %v2341 = vunpack.c.h.b16 %v1816
    %v2342 = vunpack.c.l.b16 %v1817
    %v2343 = vunpack.c.h.b16 %v1817
    %v2344 = vunpack.c.l.b16 %v1818
    %v2345 = vunpack.c.h.b16 %v1818
    %v2346 = vunpack.c.l.b16 %v1819
    %v2347 = vunpack.c.h.b16 %v1819
    %v2348 = vunpack.c.l.b16 %v1820
    %v2349 = vunpack.c.h.b16 %v1820
    %v2350 = vunpack.c.l.b16 %v1821
    %v2351 = vunpack.c.h.b16 %v1821
    %v2352 = vunpack.c.l.b16 %v1822
    %v2353 = vunpack.c.h.b16 %v1822
    %v2354 = vunpack.c.l.b16 %v1823
    %v2355 = vunpack.c.h.b16 %v1823
    %v2356 = vunpack.c.l.b16 %v1824
    %v2357 = vunpack.c.h.b16 %v1824
    %v2358 = vunpack.c.l.b16 %v1825
    %v2359 = vunpack.c.h.b16 %v1825
    %v2360 = vunpack.c.l.b16 %v1826
    %v2361 = vunpack.c.h.b16 %v1826
    %v2362 = vunpack.c.l.b16 %v1827
    %v2363 = vunpack.c.h.b16 %v1827
    %v2364 = vunpack.c.l.b16 %v1828
    %v2365 = vunpack.c.h.b16 %v1828
    %v2366 = vunpack.c.l.b16 %v1829
    %v2367 = vunpack.c.h.b16 %v1829
    %v2368 = vunpack.c.l.b16 %v1830
    %v2369 = vunpack.c.h.b16 %v1830
    %v2370 = vunpack.c.l.b16 %v1831
    %v2371 = vunpack.c.h.b16 %v1831
    %v2372 = vunpack.c.l.b16 %v1832
    %v2373 = vunpack.c.h.b16 %v1832
    %v2374 = vunpack.c.l.b16 %v1833
    %v2375 = vunpack.c.h.b16 %v1833
    %v2376 = vunpack.c.l.b16 %v1834
    %v2377 = vunpack.c.h.b16 %v1834
    %v2378 = vunpack.c.l.b16 %v1835
    %v2379 = vunpack.c.h.b16 %v1835
    %v2380 = vunpack.c.l.b16 %v1836
    %v2381 = vunpack.c.h.b16 %v1836
    %v2382 = vunpack.c.l.b16 %v1837
    %v2383 = vunpack.c.h.b16 %v1837
    %v2384 = vunpack.c.l.b16 %v1838
    %v2385 = vunpack.c.h.b16 %v1838
    %v2386 = vunpack.c.l.b16 %v1839
    %v2387 = vunpack.c.h.b16 %v1839
    %v2388 = vunpack.c.l.b16 %v1840
    %v2389 = vunpack.c.h.b16 %v1840
    %v2390 = vunpack.c.l.b16 %v1841
    %v2391 = vunpack.c.h.b16 %v1841
    %v2392 = vunpack.c.l.b16 %v1842
    %v2393 = vunpack.c.h.b16 %v1842
    %v2394 = vunpack.c.l.b16 %v1843
    %v2395 = vunpack.c.h.b16 %v1843
    %v2396 = vunpack.c.l.b16 %v1844
    %v2397 = vunpack.c.h.b16 %v1844
    %v2398 = vunpack.c.l.b16 %v1845
    %v2399 = vunpack.c.h.b16 %v1845
    %v2400 = vunpack.c.l.b16 %v1846
    %v2401 = vunpack.c.h.b16 %v1846
    %v2402 = vunpack.c.l.b16 %v1847
    %v2403 = vunpack.c.h.b16 %v1847
    %v2404 = vunpack.c.l.b16 %v1848
    %v2405 = vunpack.c.h.b16 %v1848
    %v2406 = vunpack.c.l.b16 %v1849
    %v2407 = vunpack.c.h.b16 %v1849
    %v2408 = vunpack.c.l.b16 %v1850
    %v2409 = vunpack.c.h.b16 %v1850
    %v2410 = vunpack.c.l.b16 %v1851
    %v2411 = vunpack.c.h.b16 %v1851
    %v2412 = vunpack.c.l.b16 %v1852
    %v2413 = vunpack.c.h.b16 %v1852
    %v2414 = vunpack.c.l.b16 %v1853
    %v2415 = vunpack.c.h.b16 %v1853
    %v2416 = vunpack.c.l.b16 %v1854
    %v2417 = vunpack.c.h.b16 %v1854
    %v2418 = vunpack.c.l.b16 %v1855
    %v2419 = vunpack.c.h.b16 %v1855
    %v2420 = vunpack.c.l.b16 %v1856
    %v2421 = vunpack.c.h.b16 %v1856
    %v2422 = vunpack.c.l.b16 %v1857
    %v2423 = vunpack.c.h.b16 %v1857
    %v2424 = vunpack.c.l.b16 %v1858
    %v2425 = vunpack.c.h.b16 %v1858
    %v2426 = vunpack.c.l.b16 %v1859
    %v2427 = vunpack.c.h.b16 %v1859
    %v2428 = vunpack.c.l.b16 %v1860
    %v2429 = vunpack.c.h.b16 %v1860
    %v2430 = vunpack.c.l.b16 %v1861
    %v2431 = vunpack.c.h.b16 %v1861
    %v2432 = vunpack.c.l.b16 %v1862
    %v2433 = vunpack.c.h.b16 %v1862
    %v2434 = vunpack.c.l.b16 %v1863
    %v2435 = vunpack.c.h.b16 %v1863
    %v2436 = vunpack.c.l.b16 %v1864
    %v2437 = vunpack.c.h.b16 %v1864
    %v2438 = vunpack.c.l.b16 %v1865
    %v2439 = vunpack.c.h.b16 %v1865
    %v2440 = vunpack.c.l.b16 %v1866
    %v2441 = vunpack.c.h.b16 %v1866
    %v2442 = vunpack.c.l.b16 %v1867
    %v2443 = vunpack.c.h.b16 %v1867
    %v2444 = vunpack.c.l.b16 %v1868
    %v2445 = vunpack.c.h.b16 %v1868
    %v2446 = vunpack.c.l.b16 %v1869
    %v2447 = vunpack.c.h.b16 %v1869
    %v2448 = vunpack.c.l.b16 %v1870
    %v2449 = vunpack.c.h.b16 %v1870
    %v2450 = vunpack.c.l.b16 %v1871
    %v2451 = vunpack.c.h.b16 %v1871
    %v2452 = vunpack.c.l.b16 %v1872
    %v2453 = vunpack.c.h.b16 %v1872
    %v2454 = vunpack.c.l.b16 %v1873
    %v2455 = vunpack.c.h.b16 %v1873
    %v2456 = vunpack.c.l.b16 %v1874
    %v2457 = vunpack.c.h.b16 %v1874
    %v2458 = vunpack.c.l.b16 %v1875
    %v2459 = vunpack.c.h.b16 %v1875
    %v2460 = vunpack.c.l.b16 %v1876
    %v2461 = vunpack.c.h.b16 %v1876
    %v2462 = vunpack.c.l.b16 %v1877
    %v2463 = vunpack.c.h.b16 %v1877
    %v2464 = vunpack.c.l.b16 %v1878
    %v2465 = vunpack.c.h.b16 %v1878
    %v2466 = vunpack.c.l.b16 %v1879
    %v2467 = vunpack.c.h.b16 %v1879
    %v2468 = vunpack.c.l.b16 %v1880
    %v2469 = vunpack.c.h.b16 %v1880
    %v2470 = vunpack.c.l.b16 %v1881
    %v2471 = vunpack.c.h.b16 %v1881
    %v2472 = vunpack.c.l.b16 %v1882
    %v2473 = vunpack.c.h.b16 %v1882
    %v2474 = vunpack.c.l.b16 %v1883
    %v2475 = vunpack.c.h.b16 %v1883
    %v2476 = vunpack.c.l.b16 %v1884
    %v2477 = vunpack.c.h.b16 %v1884
    %v2478 = vunpack.c.l.b16 %v1885
    %v2479 = vunpack.c.h.b16 %v1885
    %v2480 = vunpack.c.l.b16 %v1886
    %v2481 = vunpack.c.h.b16 %v1886
    %v2482 = vunpack.c.l.b16 %v1887
    %v2483 = vunpack.c.h.b16 %v1887
    %v2484 = vunpack.c.l.b16 %v1888
    %v2485 = vunpack.c.h.b16 %v1888
    %v2486 = vunpack.c.l.b16 %v1889
    %v2487 = vunpack.c.h.b16 %v1889
    %v2488 = vunpack.c.l.b16 %v1890
    %v2489 = vunpack.c.h.b16 %v1890
    %v2490 = vunpack.c.l.b16 %v1891
    %v2491 = vunpack.c.h.b16 %v1891
    %v2492 = vunpack.c.l.b16 %v1892
    %v2493 = vunpack.c.h.b16 %v1892
    %v2494 = vunpack.c.l.b16 %v1893
    %v2495 = vunpack.c.h.b16 %v1893
    %v2496 = vunpack.c.l.b16 %v1894
    %v2497 = vunpack.c.h.b16 %v1894
    %v2498 = vunpack.c.l.b16 %v1895
    %v2499 = vunpack.c.h.b16 %v1895
    %v2500 = vunpack.c.l.b16 %v1896
    %v2501 = vunpack.c.h.b16 %v1896
    %v2502 = vunpack.c.l.b16 %v1897
    %v2503 = vunpack.c.h.b16 %v1897
    %v2504 = vunpack.c.l.b16 %v1898
    %v2505 = vunpack.c.h.b16 %v1898
    %v2506 = vunpack.c.l.b16 %v1899
    %v2507 = vunpack.c.h.b16 %v1899
    %v2508 = vunpack.c.l.b16 %v1900
    %v2509 = vunpack.c.h.b16 %v1900
    %v2510 = vunpack.c.l.b16 %v1901
    %v2511 = vunpack.c.h.b16 %v1901
    %v2512 = vpack.c.b16 %v2124, %v2120
    %v2513 = vpack.c.b16 %v2125, %v2121
    %v2514 = vpack.c.b16 %v2126, %v2122
    %v2515 = vpack.c.b16 %v2127, %v2123
    %v2516 = vpack.c.b16 %v2132, %v2128
    %v2517 = vpack.c.b16 %v2133, %v2129
    %v2518 = vpack.c.b16 %v2134, %v2130
    %v2519 = vpack.c.b16 %v2135, %v2131
    %v2520 = vpack.c.b16 %v2140, %v2136
    %v2521 = vpack.c.b16 %v2141, %v2137
    %v2522 = vpack.c.b16 %v2142, %v2138
    %v2523 = vpack.c.b16 %v2143, %v2139
    %v2524 = vpack.c.b16 %v2148, %v2144
    %v2525 = vpack.c.b16 %v2149, %v2145
    %v2526 = vpack.c.b16 %v2150, %v2146
    %v2527 = vpack.c.b16 %v2151, %v2147
    %v2528 = vpack.c.b16 %v2156, %v2152
    %v2529 = vpack.c.b16 %v2157, %v2153
    %v2530 = vpack.c.b16 %v2158, %v2154
    %v2531 = vpack.c.b16 %v2159, %v2155
    %v2532 = vpack.c.b16 %v2164, %v2160
    %v2533 = vpack.c.b16 %v2165, %v2161
    %v2534 = vpack.c.b16 %v2166, %v2162
    %v2535 = vpack.c.b16 %v2167, %v2163
    %v2536 = vpack.c.b16 %v2172, %v2168
    %v2537 = vpack.c.b16 %v2173, %v2169
    %v2538 = vpack.c.b16 %v2174, %v2170
    %v2539 = vpack.c.b16 %v2175, %v2171
    %v2540 = vpack.c.b16 %v2180, %v2176
    %v2541 = vpack.c.b16 %v2181, %v2177
    %v2542 = vpack.c.b16 %v2182, %v2178
    %v2543 = vpack.c.b16 %v2183, %v2179
    %v2544 = vpack.c.b16 %v2188, %v2184
    %v2545 = vpack.c.b16 %v2189, %v2185
    %v2546 = vpack.c.b16 %v2190, %v2186
    %v2547 = vpack.c.b16 %v2191, %v2187
    %v2548 = vpack.c.b16 %v2196, %v2192
    %v2549 = vpack.c.b16 %v2197, %v2193
    %v2550 = vpack.c.b16 %v2198, %v2194
    %v2551 = vpack.c.b16 %v2199, %v2195
    %v2552 = vpack.c.b16 %v2204, %v2200
    %v2553 = vpack.c.b16 %v2205, %v2201
    %v2554 = vpack.c.b16 %v2206, %v2202
    %v2555 = vpack.c.b16 %v2207, %v2203
    %v2556 = vpack.c.b16 %v2212, %v2208
    %v2557 = vpack.c.b16 %v2213, %v2209
    %v2558 = vpack.c.b16 %v2214, %v2210
    %v2559 = vpack.c.b16 %v2215, %v2211
    %v2560 = vpack.c.b16 %v2220, %v2216
    %v2561 = vpack.c.b16 %v2221, %v2217
    %v2562 = vpack.c.b16 %v2222, %v2218
    %v2563 = vpack.c.b16 %v2223, %v2219
    %v2564 = vpack.c.b16 %v2228, %v2224
    %v2565 = vpack.c.b16 %v2229, %v2225
    %v2566 = vpack.c.b16 %v2230, %v2226
    %v2567 = vpack.c.b16 %v2231, %v2227
    %v2568 = vpack.c.b16 %v2236, %v2232
    %v2569 = vpack.c.b16 %v2237, %v2233
    %v2570 = vpack.c.b16 %v2238, %v2234
    %v2571 = vpack.c.b16 %v2239, %v2235
    %v2572 = vpack.c.b16 %v2244, %v2240
    %v2573 = vpack.c.b16 %v2245, %v2241
    %v2574 = vpack.c.b16 %v2246, %v2242
    %v2575 = vpack.c.b16 %v2247, %v2243
    %v2576 = vpack.c.b16 %v2252, %v2248
    %v2577 = vpack.c.b16 %v2253, %v2249
    %v2578 = vpack.c.b16 %v2254, %v2250
    %v2579 = vpack.c.b16 %v2255, %v2251
    %v2580 = vpack.c.b16 %v2260, %v2256
    %v2581 = vpack.c.b16 %v2261, %v2257
    %v2582 = vpack.c.b16 %v2262, %v2258
    %v2583 = vpack.c.b16 %v2263, %v2259
    %v2584 = vpack.c.b16 %v2268, %v2264
    %v2585 = vpack.c.b16 %v2269, %v2265
    %v2586 = vpack.c.b16 %v2270, %v2266
    %v2587 = vpack.c.b16 %v2271, %v2267
    %v2588 = vpack.c.b16 %v2276, %v2272
    %v2589 = vpack.c.b16 %v2277, %v2273
    %v2590 = vpack.c.b16 %v2278, %v2274
    %v2591 = vpack.c.b16 %v2279, %v2275
    %v2592 = vpack.c.b16 %v2284, %v2280
    %v2593 = vpack.c.b16 %v2285, %v2281
    %v2594 = vpack.c.b16 %v2286, %v2282
    %v2595 = vpack.c.b16 %v2287, %v2283
    %v2596 = vpack.c.b16 %v2292, %v2288
    %v2597 = vpack.c.b16 %v2293, %v2289
    %v2598 = vpack.c.b16 %v2294, %v2290
    %v2599 = vpack.c.b16 %v2295, %v2291
    %v2600 = vpack.c.b16 %v2300, %v2296
    %v2601 = vpack.c.b16 %v2301, %v2297
    %v2602 = vpack.c.b16 %v2302, %v2298
    %v2603 = vpack.c.b16 %v2303, %v2299
    %v2604 = vpack.c.b16 %v2308, %v2304
    %v2605 = vpack.c.b16 %v2309, %v2305
    %v2606 = vpack.c.b16 %v2310, %v2306
    %v2607 = vpack.c.b16 %v2311, %v2307
    %v2608 = vpack.c.b16 %v2316, %v2312
    %v2609 = vpack.c.b16 %v2317, %v2313
    %v2610 = vpack.c.b16 %v2318, %v2314
    %v2611 = vpack.c.b16 %v2319, %v2315
    %v2612 = vpack.c.b16 %v2324, %v2320
    %v2613 = vpack.c.b16 %v2325, %v2321
    %v2614 = vpack.c.b16 %v2326, %v2322
    %v2615 = vpack.c.b16 %v2327, %v2323
    %v2616 = vpack.c.b16 %v2332, %v2328
    %v2617 = vpack.c.b16 %v2333, %v2329
    %v2618 = vpack.c.b16 %v2334, %v2330
    %v2619 = vpack.c.b16 %v2335, %v2331
    %v2620 = vpack.c.b16 %v2340, %v2336
    %v2621 = vpack.c.b16 %v2341, %v2337
    %v2622 = vpack.c.b16 %v2342, %v2338
    %v2623 = vpack.c.b16 %v2343, %v2339
    %v2624 = vpack.c.b16 %v2348, %v2344
    %v2625 = vpack.c.b16 %v2349, %v2345
    %v2626 = vpack.c.b16 %v2350, %v2346
    %v2627 = vpack.c.b16 %v2351, %v2347
    %v2628 = vpack.c.b16 %v2356, %v2352
    %v2629 = vpack.c.b16 %v2357, %v2353
    %v2630 = vpack.c.b16 %v2358, %v2354
    %v2631 = vpack.c.b16 %v2359, %v2355
    %v2632 = vpack.c.b16 %v2364, %v2360
    %v2633 = vpack.c.b16 %v2365, %v2361
    %v2634 = vpack.c.b16 %v2366, %v2362
    %v2635 = vpack.c.b16 %v2367, %v2363
    %v2636 = vpack.c.b16 %v2372, %v2368
    %v2637 = vpack.c.b16 %v2373, %v2369
    %v2638 = vpack.c.b16 %v2374, %v2370
    %v2639 = vpack.c.b16 %v2375, %v2371
    %v2640 = vpack.c.b16 %v2380, %v2376
    %v2641 = vpack.c.b16 %v2381, %v2377
    %v2642 = vpack.c.b16 %v2382, %v2378
    %v2643 = vpack.c.b16 %v2383, %v2379
    %v2644 = vpack.c.b16 %v2388, %v2384
    %v2645 = vpack.c.b16 %v2389, %v2385
    %v2646 = vpack.c.b16 %v2390, %v2386
    %v2647 = vpack.c.b16 %v2391, %v2387
    %v2648 = vpack.c.b16 %v2396, %v2392
    %v2649 = vpack.c.b16 %v2397, %v2393
    %v2650 = vpack.c.b16 %v2398, %v2394
    %v2651 = vpack.c.b16 %v2399, %v2395
    %v2652 = vpack.c.b16 %v2404, %v2400
    %v2653 = vpack.c.b16 %v2405, %v2401
    %v2654 = vpack.c.b16 %v2406, %v2402
    %v2655 = vpack.c.b16 %v2407, %v2403
    %v2656 = vpack.c.b16 %v2412, %v2408
    %v2657 = vpack.c.b16 %v2413, %v2409
    %v2658 = vpack.c.b16 %v2414, %v2410
    %v2659 = vpack.c.b16 %v2415, %v2411
    %v2660 = vpack.c.b16 %v2420, %v2416
    %v2661 = vpack.c.b16 %v2421, %v2417
    %v2662 = vpack.c.b16 %v2422, %v2418
    %v2663 = vpack.c.b16 %v2423, %v2419
    %v2664 = vpack.c.b16 %v2428, %v2424
    %v2665 = vpack.c.b16 %v2429, %v2425
    %v2666 = vpack.c.b16 %v2430, %v2426
    %v2667 = vpack.c.b16 %v2431, %v2427
    %v2668 = vpack.c.b16 %v2436, %v2432
    %v2669 = vpack.c.b16 %v2437, %v2433
    %v2670 = vpack.c.b16 %v2438, %v2434
    %v2671 = vpack.c.b16 %v2439, %v2435
    %v2672 = vpack.c.b16 %v2444, %v2440
    %v2673 = vpack.c.b16 %v2445, %v2441
    %v2674 = vpack.c.b16 %v2446, %v2442
    %v2675 = vpack.c.b16 %v2447, %v2443
    %v2676 = vpack.c.b16 %v2452, %v2448
    %v2677 = vpack.c.b16 %v2453, %v2449
    %v2678 = vpack.c.b16 %v2454, %v2450
    %v2679 = vpack.c.b16 %v2455, %v2451
    %v2680 = vpack.c.b16 %v2460, %v2456
    %v2681 = vpack.c.b16 %v2461, %v2457
    %v2682 = vpack.c.b16 %v2462, %v2458
    %v2683 = vpack.c.b16 %v2463, %v2459
    %v2684 = vpack.c.b16 %v2468, %v2464
    %v2685 = vpack.c.b16 %v2469, %v2465
    %v2686 = vpack.c.b16 %v2470, %v2466
    %v2687 = vpack.c.b16 %v2471, %v2467
    %v2688 = vpack.c.b16 %v2476, %v2472
    %v2689 = vpack.c.b16 %v2477, %v2473
    %v2690 = vpack.c.b16 %v2478, %v2474
    %v2691 = vpack.c.b16 %v2479, %v2475
    %v2692 = vpack.c.b16 %v2484, %v2480
    %v2693 = vpack.c.b16 %v2485, %v2481
    %v2694 = vpack.c.b16 %v2486, %v2482
    %v2695 = vpack.c.b16 %v2487, %v2483
    %v2696 = vpack.c.b16 %v2492, %v2488
    %v2697 = vpack.c.b16 %v2493, %v2489
    %v2698 = vpack.c.b16 %v2494, %v2490
    %v2699 = vpack.c.b16 %v2495, %v2491
    %v2700 = vpack.c.b16 %v2500, %v2496
    %v2701 = vpack.c.b16 %v2501, %v2497
    %v2702 = vpack.c.b16 %v2502, %v2498
    %v2703 = vpack.c.b16 %v2503, %v2499
    %v2704 = vpack.c.b16 %v2508, %v2504
    %v2705 = vpack.c.b16 %v2509, %v2505
    %v2706 = vpack.c.b16 %v2510, %v2506
    %v2707 = vpack.c.b16 %v2511, %v2507
    %v2905 = vsel %vm1374, %v175, 0
    %2907 = vmatprep.subr.bf16.mxu0 %v2541
    %2908 = vmatpush1.bf16.msra.mxu0 %v2540
    %2909 = vmatprep.subr.bf16.mxu0 %v2537
    %2910 = vmatpush1.bf16.msra.mxu0 %v2536
    %2911 = vmatprep.subr.bf16.mxu0 %v2533
    %2912 = vmatpush1.bf16.msra.mxu0 %v2532
    %2913 = vmatprep.subr.bf16.mxu0 %v2529
    %2914 = vmatpush1.bf16.msra.mxu0 %v2528
    %2915 = vmatprep.subr.bf16.mxu0 %v2525
    %2916 = vmatpush1.bf16.msra.mxu0 %v2524
    %2917 = vmatprep.subr.bf16.mxu0 %v2521
    %2918 = vmatpush1.bf16.msra.mxu0 %v2520
    %2919 = vmatprep.subr.bf16.mxu0 %v2517
    %2920 = vmatpush1.bf16.msra.mxu0 %v2516
    %2921 = vmatprep.subr.bf16.mxu0 %v2513
    %2922 = vmatpush1.bf16.msra.mxu0 %v2512
    %2923 = vmatprep.subr.bf16.mxu0 %v2573
    %2924 = vmatpush2.bf16.msra.mxu0 %v2572
    %2925 = vmatprep.subr.bf16.mxu0 %v2569
    %2926 = vmatpush2.bf16.msra.mxu0 %v2568
    %2927 = vmatprep.subr.bf16.mxu0 %v2565
    %2928 = vmatpush2.bf16.msra.mxu0 %v2564
    %2929 = vmatprep.subr.bf16.mxu0 %v2561
    %2930 = vmatpush2.bf16.msra.mxu0 %v2560
    %2931 = vmatprep.subr.bf16.mxu0 %v2557
    %2932 = vmatpush2.bf16.msra.mxu0 %v2556
    %2933 = vmatprep.subr.bf16.mxu0 %v2553
    %2934 = vmatpush2.bf16.msra.mxu0 %v2552
    %2935 = vmatprep.subr.bf16.mxu0 %v2549
    %2936 = vmatpush2.bf16.msra.mxu0 %v2548
    %2937 = vmatprep.subr.bf16.mxu0 %v2545
    %2938 = vmatpush2.bf16.msra.mxu0 %v2544
    %2939 = vmatprep.mubr.bf16.mxu0 %v170
    %2940 = vmatmul.mubr.bf16.gmra.mxu0 %v169
    %v2941 = vpop.f32.mrf.mxu0
    %v2942 = vadd.f32 %v1907, %v2941
    %v2943 = vpop.f32.mrf.mxu0
    %v2944 = vadd.f32 %v1911, %v2943
    %v2945 = vpop.f32.mrf.mxu0
    %v2946 = vpop.f32.mrf.mxu0
    %2947 = vdwg.mxu0
    %2948 = vmatprep.subr.bf16.mxu0 %v2605
    %2949 = vmatpush1.bf16.msra.mxu0 %v2604
    %2950 = vmatprep.subr.bf16.mxu0 %v2601
    %2951 = vmatpush1.bf16.msra.mxu0 %v2600
    %2952 = vmatprep.subr.bf16.mxu0 %v2597
    %2953 = vmatpush1.bf16.msra.mxu0 %v2596
    %2954 = vmatprep.subr.bf16.mxu0 %v2593
    %2955 = vmatpush1.bf16.msra.mxu0 %v2592
    %2956 = vmatprep.subr.bf16.mxu0 %v2589
    %2957 = vmatpush1.bf16.msra.mxu0 %v2588
    %2958 = vmatprep.subr.bf16.mxu0 %v2585
    %2959 = vmatpush1.bf16.msra.mxu0 %v2584
    %2960 = vmatprep.subr.bf16.mxu0 %v2581
    %2961 = vmatpush1.bf16.msra.mxu0 %v2580
    %2962 = vmatprep.subr.bf16.mxu0 %v2577
    %2963 = vmatpush1.bf16.msra.mxu0 %v2576
    %2964 = vmatprep.subr.bf16.mxu0 %v2637
    %2965 = vmatpush2.bf16.msra.mxu0 %v2636
    %2966 = vmatprep.subr.bf16.mxu0 %v2633
    %2967 = vmatpush2.bf16.msra.mxu0 %v2632
    %2968 = vmatprep.subr.bf16.mxu0 %v2629
    %2969 = vmatpush2.bf16.msra.mxu0 %v2628
    %2970 = vmatprep.subr.bf16.mxu0 %v2625
    %2971 = vmatpush2.bf16.msra.mxu0 %v2624
    %2972 = vmatprep.subr.bf16.mxu0 %v2621
    %2973 = vmatpush2.bf16.msra.mxu0 %v2620
    %2974 = vmatprep.subr.bf16.mxu0 %v2617
    %2975 = vmatpush2.bf16.msra.mxu0 %v2616
    %2976 = vmatprep.subr.bf16.mxu0 %v2613
    %2977 = vmatpush2.bf16.msra.mxu0 %v2612
    %2978 = vmatprep.subr.bf16.mxu0 %v2609
    %2979 = vmatpush2.bf16.msra.mxu0 %v2608
    %2980 = vmatprep.mubr.bf16.mxu0 %v172
    %2981 = vmatmul.mubr.bf16.gmra.mxu0 %v171
    %v2982 = vpop.f32.mrf.mxu0
    %v2983 = vadd.f32 %v2942, %v2982
    %v2984 = vpop.f32.mrf.mxu0
    %v2985 = vadd.f32 %v2944, %v2984
    %v2986 = vpop.f32.mrf.mxu0
    %v2987 = vpop.f32.mrf.mxu0
    %2988 = vdwg.mxu0
    %2989 = vmatprep.subr.bf16.mxu0 %v2669
    %2990 = vmatpush1.bf16.msra.mxu0 %v2668
    %2991 = vmatprep.subr.bf16.mxu0 %v2665
    %2992 = vmatpush1.bf16.msra.mxu0 %v2664
    %2993 = vmatprep.subr.bf16.mxu0 %v2661
    %2994 = vmatpush1.bf16.msra.mxu0 %v2660
    %2995 = vmatprep.subr.bf16.mxu0 %v2657
    %2996 = vmatpush1.bf16.msra.mxu0 %v2656
    %2997 = vmatprep.subr.bf16.mxu0 %v2653
    %2998 = vmatpush1.bf16.msra.mxu0 %v2652
    %2999 = vmatprep.subr.bf16.mxu0 %v2649
    %3000 = vmatpush1.bf16.msra.mxu0 %v2648
    %3001 = vmatprep.subr.bf16.mxu0 %v2645
    %3002 = vmatpush1.bf16.msra.mxu0 %v2644
    %3003 = vmatprep.subr.bf16.mxu0 %v2641
    %3004 = vmatpush1.bf16.msra.mxu0 %v2640
    %3005 = vmatprep.subr.bf16.mxu0 %v2701
    %3006 = vmatpush2.bf16.msra.mxu0 %v2700
    %3007 = vmatprep.subr.bf16.mxu0 %v2697
    %3008 = vmatpush2.bf16.msra.mxu0 %v2696
    %3009 = vmatprep.subr.bf16.mxu0 %v2693
    %3010 = vmatpush2.bf16.msra.mxu0 %v2692
    %3011 = vmatprep.subr.bf16.mxu0 %v2689
    %3012 = vmatpush2.bf16.msra.mxu0 %v2688
    %3013 = vmatprep.subr.bf16.mxu0 %v2685
    %3014 = vmatpush2.bf16.msra.mxu0 %v2684
    %3015 = vmatprep.subr.bf16.mxu0 %v2681
    %3016 = vmatpush2.bf16.msra.mxu0 %v2680
    %3017 = vmatprep.subr.bf16.mxu0 %v2677
    %3018 = vmatpush2.bf16.msra.mxu0 %v2676
    %3019 = vmatprep.subr.bf16.mxu0 %v2673
    %3020 = vmatpush2.bf16.msra.mxu0 %v2672
    %3021 = vmatprep.mubr.bf16.mxu0 %v174
    %3022 = vmatmul.mubr.bf16.gmra.mxu0 %v173
    %v3023 = vpop.f32.mrf.mxu0
    %v3024 = vadd.f32 %v2983, %v3023
    %v3025 = vpop.f32.mrf.mxu0
    %v3026 = vadd.f32 %v2985, %v3025
    %v3027 = vpop.f32.mrf.mxu0
    %v3028 = vpop.f32.mrf.mxu0
    %3029 = vdwg.mxu0
    %3030 = vmatprep.subr.bf16.mxu0 0
    %3031 = vmatpush1.bf16.msra.mxu0 0
    %3032 = vmatprep.subr.bf16.mxu0 0
    %3033 = vmatpush1.bf16.msra.mxu0 0
    %3034 = vmatprep.subr.bf16.mxu0 0
    %3035 = vmatpush1.bf16.msra.mxu0 0
    %3036 = vmatprep.subr.bf16.mxu0 0
    %3037 = vmatpush1.bf16.msra.mxu0 0
    %3038 = vmatprep.subr.bf16.mxu0 0
    %3039 = vmatpush1.bf16.msra.mxu0 0
    %3040 = vmatprep.subr.bf16.mxu0 0
    %3041 = vmatpush1.bf16.msra.mxu0 0
    %3042 = vmatprep.subr.bf16.mxu0 0
    %3043 = vmatpush1.bf16.msra.mxu0 0
    %3044 = vmatprep.subr.bf16.mxu0 %v2705
    %3045 = vmatpush1.bf16.msra.mxu0 %v2704
    %3046 = vmatprep.subr.bf16.mxu0 0
    %3047 = vmatpush2.bf16.msra.mxu0 0
    %3048 = vmatprep.subr.bf16.mxu0 0
    %3049 = vmatpush2.bf16.msra.mxu0 0
    %3050 = vmatprep.subr.bf16.mxu0 0
    %3051 = vmatpush2.bf16.msra.mxu0 0
    %3052 = vmatprep.subr.bf16.mxu0 0
    %3053 = vmatpush2.bf16.msra.mxu0 0
    %3054 = vmatprep.subr.bf16.mxu0 0
    %3055 = vmatpush2.bf16.msra.mxu0 0
    %3056 = vmatprep.subr.bf16.mxu0 0
    %3057 = vmatpush2.bf16.msra.mxu0 0
    %3058 = vmatprep.subr.bf16.mxu0 0
    %3059 = vmatpush2.bf16.msra.mxu0 0
    %3060 = vmatprep.subr.bf16.mxu0 0
    %3061 = vmatpush2.bf16.msra.mxu0 0
    %3062 = vmatprep.mubr.bf16.mxu0 0
    %3063 = vmatmul.mubr.bf16.gmra.mxu0 %v2905
    %v3064 = vpop.f32.mrf.mxu0
    %v3065 = vadd.f32 %v3024, %v3064
    %v3066 = vpop.f32.mrf.mxu0
    %v3067 = vadd.f32 %v3026, %v3066
    %v3068 = vpop.f32.mrf.mxu0
    %v3069 = vpop.f32.mrf.mxu0
    %3070 = vdwg.mxu0
    %3071 = vmatprep.subr.bf16.mxu0 %v2543
    %3072 = vmatpush1.bf16.msra.mxu0 %v2542
    %3073 = vmatprep.subr.bf16.mxu0 %v2539
    %3074 = vmatpush1.bf16.msra.mxu0 %v2538
    %3075 = vmatprep.subr.bf16.mxu0 %v2535
    %3076 = vmatpush1.bf16.msra.mxu0 %v2534
    %3077 = vmatprep.subr.bf16.mxu0 %v2531
    %3078 = vmatpush1.bf16.msra.mxu0 %v2530
    %3079 = vmatprep.subr.bf16.mxu0 %v2527
    %3080 = vmatpush1.bf16.msra.mxu0 %v2526
    %3081 = vmatprep.subr.bf16.mxu0 %v2523
    %3082 = vmatpush1.bf16.msra.mxu0 %v2522
    %3083 = vmatprep.subr.bf16.mxu0 %v2519
    %3084 = vmatpush1.bf16.msra.mxu0 %v2518
    %3085 = vmatprep.subr.bf16.mxu0 %v2515
    %3086 = vmatpush1.bf16.msra.mxu0 %v2514
    %3087 = vmatprep.subr.bf16.mxu0 %v2575
    %3088 = vmatpush2.bf16.msra.mxu0 %v2574
    %3089 = vmatprep.subr.bf16.mxu0 %v2571
    %3090 = vmatpush2.bf16.msra.mxu0 %v2570
    %3091 = vmatprep.subr.bf16.mxu0 %v2567
    %3092 = vmatpush2.bf16.msra.mxu0 %v2566
    %3093 = vmatprep.subr.bf16.mxu0 %v2563
    %3094 = vmatpush2.bf16.msra.mxu0 %v2562
    %3095 = vmatprep.subr.bf16.mxu0 %v2559
    %3096 = vmatpush2.bf16.msra.mxu0 %v2558
    %3097 = vmatprep.subr.bf16.mxu0 %v2555
    %3098 = vmatpush2.bf16.msra.mxu0 %v2554
    %3099 = vmatprep.subr.bf16.mxu0 %v2551
    %3100 = vmatpush2.bf16.msra.mxu0 %v2550
    %3101 = vmatprep.subr.bf16.mxu0 %v2547
    %3102 = vmatpush2.bf16.msra.mxu0 %v2546
    %3103 = vmatprep.mubr.bf16.mxu0 %v170
    %3104 = vmatmul.mubr.bf16.gmra.mxu0 %v169
    %v3105 = vpop.f32.mrf.mxu0
    %v3106 = vadd.f32 %v1915, %v3105
    %v3107 = vpop.f32.mrf.mxu0
    %v3108 = vadd.f32 %v1919, %v3107
    %v3109 = vpop.f32.mrf.mxu0
    %v3110 = vpop.f32.mrf.mxu0
    %3111 = vdwg.mxu0
    %3112 = vmatprep.subr.bf16.mxu0 %v2607
    %3113 = vmatpush1.bf16.msra.mxu0 %v2606
    %3114 = vmatprep.subr.bf16.mxu0 %v2603
    %3115 = vmatpush1.bf16.msra.mxu0 %v2602
    %3116 = vmatprep.subr.bf16.mxu0 %v2599
    %3117 = vmatpush1.bf16.msra.mxu0 %v2598
    %3118 = vmatprep.subr.bf16.mxu0 %v2595
    %3119 = vmatpush1.bf16.msra.mxu0 %v2594
    %3120 = vmatprep.subr.bf16.mxu0 %v2591
    %3121 = vmatpush1.bf16.msra.mxu0 %v2590
    %3122 = vmatprep.subr.bf16.mxu0 %v2587
    %3123 = vmatpush1.bf16.msra.mxu0 %v2586
    %3124 = vmatprep.subr.bf16.mxu0 %v2583
    %3125 = vmatpush1.bf16.msra.mxu0 %v2582
    %3126 = vmatprep.subr.bf16.mxu0 %v2579
    %3127 = vmatpush1.bf16.msra.mxu0 %v2578
    %3128 = vmatprep.subr.bf16.mxu0 %v2639
    %3129 = vmatpush2.bf16.msra.mxu0 %v2638
    %3130 = vmatprep.subr.bf16.mxu0 %v2635
    %3131 = vmatpush2.bf16.msra.mxu0 %v2634
    %3132 = vmatprep.subr.bf16.mxu0 %v2631
    %3133 = vmatpush2.bf16.msra.mxu0 %v2630
    %3134 = vmatprep.subr.bf16.mxu0 %v2627
    %3135 = vmatpush2.bf16.msra.mxu0 %v2626
    %3136 = vmatprep.subr.bf16.mxu0 %v2623
    %3137 = vmatpush2.bf16.msra.mxu0 %v2622
    %3138 = vmatprep.subr.bf16.mxu0 %v2619
    %3139 = vmatpush2.bf16.msra.mxu0 %v2618
    %3140 = vmatprep.subr.bf16.mxu0 %v2615
    %3141 = vmatpush2.bf16.msra.mxu0 %v2614
    %3142 = vmatprep.subr.bf16.mxu0 %v2611
    %3143 = vmatpush2.bf16.msra.mxu0 %v2610
    %3144 = vmatprep.mubr.bf16.mxu0 %v172
    %3145 = vmatmul.mubr.bf16.gmra.mxu0 %v171
    %v3146 = vpop.f32.mrf.mxu0
    %v3147 = vadd.f32 %v3106, %v3146
    %v3148 = vpop.f32.mrf.mxu0
    %v3149 = vadd.f32 %v3108, %v3148
    %v3150 = vpop.f32.mrf.mxu0
    %v3151 = vpop.f32.mrf.mxu0
    %3152 = vdwg.mxu0
    %3153 = vmatprep.subr.bf16.mxu0 %v2671
    %3154 = vmatpush1.bf16.msra.mxu0 %v2670
    %3155 = vmatprep.subr.bf16.mxu0 %v2667
    %3156 = vmatpush1.bf16.msra.mxu0 %v2666
    %3157 = vmatprep.subr.bf16.mxu0 %v2663
    %3158 = vmatpush1.bf16.msra.mxu0 %v2662
    %3159 = vmatprep.subr.bf16.mxu0 %v2659
    %3160 = vmatpush1.bf16.msra.mxu0 %v2658
    %3161 = vmatprep.subr.bf16.mxu0 %v2655
    %3162 = vmatpush1.bf16.msra.mxu0 %v2654
    %3163 = vmatprep.subr.bf16.mxu0 %v2651
    %3164 = vmatpush1.bf16.msra.mxu0 %v2650
    %3165 = vmatprep.subr.bf16.mxu0 %v2647
    %3166 = vmatpush1.bf16.msra.mxu0 %v2646
    %3167 = vmatprep.subr.bf16.mxu0 %v2643
    %3168 = vmatpush1.bf16.msra.mxu0 %v2642
    %3169 = vmatprep.subr.bf16.mxu0 %v2703
    %3170 = vmatpush2.bf16.msra.mxu0 %v2702
    %3171 = vmatprep.subr.bf16.mxu0 %v2699
    %3172 = vmatpush2.bf16.msra.mxu0 %v2698
    %3173 = vmatprep.subr.bf16.mxu0 %v2695
    %3174 = vmatpush2.bf16.msra.mxu0 %v2694
    %3175 = vmatprep.subr.bf16.mxu0 %v2691
    %3176 = vmatpush2.bf16.msra.mxu0 %v2690
    %3177 = vmatprep.subr.bf16.mxu0 %v2687
    %3178 = vmatpush2.bf16.msra.mxu0 %v2686
    %3179 = vmatprep.subr.bf16.mxu0 %v2683
    %3180 = vmatpush2.bf16.msra.mxu0 %v2682
    %3181 = vmatprep.subr.bf16.mxu0 %v2679
    %3182 = vmatpush2.bf16.msra.mxu0 %v2678
    %3183 = vmatprep.subr.bf16.mxu0 %v2675
    %3184 = vmatpush2.bf16.msra.mxu0 %v2674
    %3185 = vmatprep.mubr.bf16.mxu0 %v174
    %3186 = vmatmul.mubr.bf16.gmra.mxu0 %v173
    %v3187 = vpop.f32.mrf.mxu0
    %v3188 = vadd.f32 %v3147, %v3187
    %v3189 = vpop.f32.mrf.mxu0
    %v3190 = vadd.f32 %v3149, %v3189
    %v3191 = vpop.f32.mrf.mxu0
    %v3192 = vpop.f32.mrf.mxu0
    %3193 = vdwg.mxu0
    %3194 = vmatprep.subr.bf16.mxu0 0
    %3195 = vmatpush1.bf16.msra.mxu0 0
    %3196 = vmatprep.subr.bf16.mxu0 0
    %3197 = vmatpush1.bf16.msra.mxu0 0
    %3198 = vmatprep.subr.bf16.mxu0 0
    %3199 = vmatpush1.bf16.msra.mxu0 0
    %3200 = vmatprep.subr.bf16.mxu0 0
    %3201 = vmatpush1.bf16.msra.mxu0 0
    %3202 = vmatprep.subr.bf16.mxu0 0
    %3203 = vmatpush1.bf16.msra.mxu0 0
    %3204 = vmatprep.subr.bf16.mxu0 0
    %3205 = vmatpush1.bf16.msra.mxu0 0
    %3206 = vmatprep.subr.bf16.mxu0 0
    %3207 = vmatpush1.bf16.msra.mxu0 0
    %3208 = vmatprep.subr.bf16.mxu0 %v2707
    %3209 = vmatpush1.bf16.msra.mxu0 %v2706
    %3210 = vmatprep.subr.bf16.mxu0 0
    %3211 = vmatpush2.bf16.msra.mxu0 0
    %3212 = vmatprep.subr.bf16.mxu0 0
    %3213 = vmatpush2.bf16.msra.mxu0 0
    %3214 = vmatprep.subr.bf16.mxu0 0
    %3215 = vmatpush2.bf16.msra.mxu0 0
    %3216 = vmatprep.subr.bf16.mxu0 0
    %3217 = vmatpush2.bf16.msra.mxu0 0
    %3218 = vmatprep.subr.bf16.mxu0 0
    %3219 = vmatpush2.bf16.msra.mxu0 0
    %3220 = vmatprep.subr.bf16.mxu0 0
    %3221 = vmatpush2.bf16.msra.mxu0 0
    %3222 = vmatprep.subr.bf16.mxu0 0
    %3223 = vmatpush2.bf16.msra.mxu0 0
    %3224 = vmatprep.subr.bf16.mxu0 0
    %3225 = vmatpush2.bf16.msra.mxu0 0
    %3226 = vmatprep.mubr.bf16.mxu0 0
    %3227 = vmatmul.mubr.bf16.gmra.mxu0 %v2905
    %v3228 = vpop.f32.mrf.mxu0
    %v3229 = vadd.f32 %v3188, %v3228
    %v3230 = vpop.f32.mrf.mxu0
    %v3231 = vadd.f32 %v3190, %v3230
    %v3232 = vpop.f32.mrf.mxu0
    %v3233 = vpop.f32.mrf.mxu0
    %3234 = vdwg.mxu0
    %v3235 = vmax.f32 %v3065, 0.0
    %v3236 = vmax.f32 %v3067, 0.0
    %v3237 = vmax.f32 %v3229, 0.0
    %v3238 = vmax.f32 %v3231, 0.0
    %v3239 = vrsqrt.pop %v3235
    %v3240 = vmul.f32 %v3235, %v3239
    %vm3241 = vcmp.eq.f32.partialorder %v3235, inf
    %v3242 = vsel %vm3241, %v3235, %v3240
    %vm3243 = vcmp.eq.f32.partialorder %v3235, 0.0
    %v3244 = vand.u32 %v3235, 2147483648
    %v3245 = vsel %vm3243, %v3244, %v3242
    %v3246 = vrsqrt.pop %v3236
    %v3247 = vmul.f32 %v3236, %v3246
    %vm3248 = vcmp.eq.f32.partialorder %v3236, inf
    %v3249 = vsel %vm3248, %v3236, %v3247
    %vm3250 = vcmp.eq.f32.partialorder %v3236, 0.0
    %v3251 = vand.u32 %v3236, 2147483648
    %v3252 = vsel %vm3250, %v3251, %v3249
    %v3253 = vrsqrt.pop %v3237
    %v3254 = vmul.f32 %v3237, %v3253
    %vm3255 = vcmp.eq.f32.partialorder %v3237, inf
    %v3256 = vsel %vm3255, %v3237, %v3254
    %vm3257 = vcmp.eq.f32.partialorder %v3237, 0.0
    %v3258 = vand.u32 %v3237, 2147483648
    %v3259 = vsel %vm3257, %v3258, %v3256
    %v3260 = vrsqrt.pop %v3238
    %v3261 = vmul.f32 %v3238, %v3260
    %vm3262 = vcmp.eq.f32.partialorder %v3238, inf
    %v3263 = vsel %vm3262, %v3238, %v3261
    %vm3264 = vcmp.eq.f32.partialorder %v3238, 0.0
    %v3265 = vand.u32 %v3238, 2147483648
    %v3266 = vsel %vm3264, %v3265, %v3263
    %v3267 = vld [vmem:[%s9] sm:$0xff]
    %v3269 = vcombine.high %v3267, %v3267
    %v3271 = vunpack.c.l.s4 1983009808
    %v3272 = vunpack.c.0.s8 %v3271
    %v3273 = vlaneseq
    %v3274 = vshrl.u32 %v3273, 7
    %v3275 = vsub.s32 %v3272, %v3274
    %v3276 = vrot.slane %v3267, %v3275
    %v3278 = vunpack.c.l.s4 1983009808
    %v3279 = vunpack.c.0.s8 %v3278
    %v3280 = vlaneseq
    %v3281 = vshrl.u32 %v3280, 7
    %v3282 = vsub.s32 %v3279, %v3281
    %v3283 = vrot.slane %v3269, %v3282
    %v3284 = vcombine.high %v3276, %v3276
    %v3285 = vcombine.high %v3283, %v3283
    %v3290 = vmul.f32 %v3245, %v3276
    %v3291 = vmul.f32 %v3252, %v3284
    %v3292 = vmul.f32 %v3259, %v3283
    %v3293 = vmul.f32 %v3266, %v3285
    %v3294 = vadd.f32 %v1536, %v3290
    %v3295 = vadd.f32 %v1538, %v3291
    %v3296 = vadd.f32 %v1700, %v3292
    %v3297 = vadd.f32 %v1702, %v3293
    %v3298 = vmax.f32 %v3294, 0.0
    %v3299 = vmax.f32 %v3295, 0.0
    %v3300 = vmax.f32 %v3296, 0.0
    %v3301 = vmax.f32 %v3297, 0.0
    %v3302 = vpack.c.bf16 %v3298, %v3298
    %v3303 = vpack.c.bf16 %v3299, %v3299
    %v3304 = vpack.c.bf16 %v3300, %v3300
    %v3305 = vpack.c.bf16 %v3301, %v3301
    %v3306 = vmul.bf16 %v3302, %v3302
    %v3307 = vmul.bf16 %v3303, %v3303
    %v3308 = vmul.bf16 %v3304, %v3304
    %v3309 = vmul.bf16 %v3305, %v3305
    %v3310 = vld [vmem:[#allocation10] sm:$0xf]
    %v3311 = vld [vmem:[#allocation10 + $0x4] sm:$0xf]
    %v3312 = vld [vmem:[#allocation10 + $0x8] sm:$0xf]
    %v3313 = vld [vmem:[#allocation10 + $0xc] sm:$0xf]
    %v3314 = vld [vmem:[#allocation10 + $0x10] sm:$0xf]
    %v3315 = vld [vmem:[#allocation10 + $0x14] sm:$0xf]
    %v3316 = vld [vmem:[#allocation10 + $0x18] sm:$0xf]
    %v3317 = vld [vmem:[#allocation10 + $0x1c] sm:$0xf]
    %v3318 = vld [vmem:[#allocation10 + $0x20] sm:$0xf]
    %v3319 = vld [vmem:[#allocation10 + $0x24] sm:$0xf]
    %v3320 = vld [vmem:[#allocation10 + $0x28] sm:$0xf]
    %v3321 = vld [vmem:[#allocation10 + $0x2c] sm:$0xf]
    %v3322 = vld [vmem:[#allocation10 + $0x30] sm:$0xf]
    %v3323 = vld [vmem:[#allocation10 + $0x34] sm:$0xf]
    %v3324 = vld [vmem:[#allocation10 + $0x38] sm:$0xf]
    %v3325 = vld [vmem:[#allocation10 + $0x3c] sm:$0xf]
    %v3326 = vld [vmem:[#allocation10 + $0x40] sm:$0xf]
    %v3327 = vld [vmem:[#allocation10 + $0x44] sm:$0xf]
    %v3328 = vld [vmem:[#allocation10 + $0x48] sm:$0xf]
    %v3329 = vld [vmem:[#allocation10 + $0x4c] sm:$0xf]
    %v3330 = vld [vmem:[#allocation10 + $0x50] sm:$0xf]
    %v3331 = vld [vmem:[#allocation10 + $0x54] sm:$0xf]
    %v3332 = vld [vmem:[#allocation10 + $0x58] sm:$0xf]
    %v3333 = vld [vmem:[#allocation10 + $0x5c] sm:$0xf]
    %v3334 = vld [vmem:[#allocation10 + $0x60] sm:$0xf]
    %v3335 = vld [vmem:[#allocation10 + $0x64] sm:$0xf]
    %v3336 = vld [vmem:[#allocation10 + $0x68] sm:$0xf]
    %v3337 = vld [vmem:[#allocation10 + $0x6c] sm:$0xf]
    %v3338 = vld [vmem:[#allocation10 + $0x70] sm:$0xf]
    %v3339 = vld [vmem:[#allocation10 + $0x74] sm:$0xf]
    %v3340 = vld [vmem:[#allocation10 + $0x78] sm:$0xf]
    %v3341 = vld [vmem:[#allocation10 + $0x7c] sm:$0xf]
    %v3342 = vld [vmem:[#allocation10 + $0x80] sm:$0xf]
    %v3343 = vld [vmem:[#allocation10 + $0x84] sm:$0xf]
    %v3344 = vld [vmem:[#allocation10 + $0x88] sm:$0xf]
    %v3345 = vld [vmem:[#allocation10 + $0x8c] sm:$0xf]
    %v3346 = vld [vmem:[#allocation10 + $0x90] sm:$0xf]
    %v3347 = vld [vmem:[#allocation10 + $0x94] sm:$0xf]
    %v3348 = vld [vmem:[#allocation10 + $0x98] sm:$0xf]
    %v3349 = vld [vmem:[#allocation10 + $0x9c] sm:$0xf]
    %v3350 = vld [vmem:[#allocation10 + $0xa0] sm:$0xf]
    %v3351 = vld [vmem:[#allocation10 + $0xa4] sm:$0xf]
    %v3352 = vld [vmem:[#allocation10 + $0xa8] sm:$0xf]
    %v3353 = vld [vmem:[#allocation10 + $0xac] sm:$0xf]
    %v3354 = vld [vmem:[#allocation10 + $0xb0] sm:$0xf]
    %v3355 = vld [vmem:[#allocation10 + $0xb4] sm:$0xf]
    %v3356 = vld [vmem:[#allocation10 + $0xb8] sm:$0xf]
    %v3357 = vld [vmem:[#allocation10 + $0xbc] sm:$0xf]
    %v3358 = vld [vmem:[#allocation10 + $0xc0] sm:$0xf]
    %v3359 = vld [vmem:[#allocation10 + $0xc4] sm:$0xf]
    %v3360 = vld [vmem:[#allocation10 + $0xc8] sm:$0xf]
    %v3361 = vld [vmem:[#allocation10 + $0xcc] sm:$0xf]
    %v3362 = vld [vmem:[#allocation10 + $0xd0] sm:$0xf]
    %v3363 = vld [vmem:[#allocation10 + $0xd4] sm:$0xf]
    %v3364 = vld [vmem:[#allocation10 + $0xd8] sm:$0xf]
    %v3365 = vld [vmem:[#allocation10 + $0xdc] sm:$0xf]
    %v3366 = vld [vmem:[#allocation10 + $0xe0] sm:$0xf]
    %v3367 = vld [vmem:[#allocation10 + $0xe4] sm:$0xf]
    %v3368 = vld [vmem:[#allocation10 + $0xe8] sm:$0xf]
    %v3369 = vld [vmem:[#allocation10 + $0xec] sm:$0xf]
    %v3370 = vld [vmem:[#allocation10 + $0xf0] sm:$0xf]
    %v3371 = vld [vmem:[#allocation10 + $0xf4] sm:$0xf]
    %v3372 = vld [vmem:[#allocation10 + $0xf8] sm:$0xf]
    %v3373 = vld [vmem:[#allocation10 + $0xfc] sm:$0xf]
    %v3374 = vld [vmem:[%s7] sm:$0x1]
    %v3376 = vlaneseq
    %v3377 = vshrl.u32 %v3376, 7
    %v3378 = vsub.s32 0, %v3377
    %v3379 = vrot.slane %v3374, %v3378
    %v3445 = vunpack.c.l.b16 %v3310
    %v3446 = vunpack.c.l.b16 %v3311
    %v3447 = vunpack.c.l.b16 %v3312
    %v3448 = vunpack.c.l.b16 %v3313
    %v3449 = vunpack.c.l.b16 %v3314
    %v3450 = vunpack.c.l.b16 %v3315
    %v3451 = vunpack.c.l.b16 %v3316
    %v3452 = vunpack.c.l.b16 %v3317
    %v3453 = vunpack.c.l.b16 %v3318
    %v3454 = vunpack.c.l.b16 %v3319
    %v3455 = vunpack.c.l.b16 %v3320
    %v3456 = vunpack.c.l.b16 %v3321
    %v3457 = vunpack.c.l.b16 %v3322
    %v3458 = vunpack.c.l.b16 %v3323
    %v3459 = vunpack.c.l.b16 %v3324
    %v3460 = vunpack.c.l.b16 %v3325
    %v3461 = vunpack.c.l.b16 %v3326
    %v3462 = vunpack.c.l.b16 %v3327
    %v3463 = vunpack.c.l.b16 %v3328
    %v3464 = vunpack.c.l.b16 %v3329
    %v3465 = vunpack.c.l.b16 %v3330
    %v3466 = vunpack.c.l.b16 %v3331
    %v3467 = vunpack.c.l.b16 %v3332
    %v3468 = vunpack.c.l.b16 %v3333
    %v3469 = vunpack.c.l.b16 %v3334
    %v3470 = vunpack.c.l.b16 %v3335
    %v3471 = vunpack.c.l.b16 %v3336
    %v3472 = vunpack.c.l.b16 %v3337
    %v3473 = vunpack.c.l.b16 %v3338
    %v3474 = vunpack.c.l.b16 %v3339
    %v3475 = vunpack.c.l.b16 %v3340
    %v3476 = vunpack.c.l.b16 %v3341
    %v3477 = vunpack.c.l.b16 %v3342
    %v3478 = vunpack.c.l.b16 %v3343
    %v3479 = vunpack.c.l.b16 %v3344
    %v3480 = vunpack.c.l.b16 %v3345
    %v3481 = vunpack.c.l.b16 %v3346
    %v3482 = vunpack.c.l.b16 %v3347
    %v3483 = vunpack.c.l.b16 %v3348
    %v3484 = vunpack.c.l.b16 %v3349
    %v3485 = vunpack.c.l.b16 %v3350
    %v3486 = vunpack.c.l.b16 %v3351
    %v3487 = vunpack.c.l.b16 %v3352
    %v3488 = vunpack.c.l.b16 %v3353
    %v3489 = vunpack.c.l.b16 %v3354
    %v3490 = vunpack.c.l.b16 %v3355
    %v3491 = vunpack.c.l.b16 %v3356
    %v3492 = vunpack.c.l.b16 %v3357
    %v3493 = vunpack.c.l.b16 %v3358
    %v3494 = vunpack.c.l.b16 %v3359
    %v3495 = vunpack.c.l.b16 %v3360
    %v3496 = vunpack.c.l.b16 %v3361
    %v3497 = vunpack.c.l.b16 %v3362
    %v3498 = vunpack.c.l.b16 %v3363
    %v3499 = vunpack.c.l.b16 %v3364
    %v3500 = vunpack.c.l.b16 %v3365
    %v3501 = vunpack.c.l.b16 %v3366
    %v3502 = vunpack.c.l.b16 %v3367
    %v3503 = vunpack.c.l.b16 %v3368
    %v3504 = vunpack.c.l.b16 %v3369
    %v3505 = vunpack.c.l.b16 %v3370
    %v3506 = vunpack.c.l.b16 %v3371
    %v3507 = vunpack.c.l.b16 %v3372
    %v3508 = vunpack.c.l.b16 %v3373
    %v3509 = vpack.c.b16 %v3446, %v3445
    %v3510 = vpack.c.b16 %v3448, %v3447
    %v3511 = vpack.c.b16 %v3450, %v3449
    %v3512 = vpack.c.b16 %v3452, %v3451
    %v3513 = vpack.c.b16 %v3454, %v3453
    %v3514 = vpack.c.b16 %v3456, %v3455
    %v3515 = vpack.c.b16 %v3458, %v3457
    %v3516 = vpack.c.b16 %v3460, %v3459
    %v3517 = vpack.c.b16 %v3462, %v3461
    %v3518 = vpack.c.b16 %v3464, %v3463
    %v3519 = vpack.c.b16 %v3466, %v3465
    %v3520 = vpack.c.b16 %v3468, %v3467
    %v3521 = vpack.c.b16 %v3470, %v3469
    %v3522 = vpack.c.b16 %v3472, %v3471
    %v3523 = vpack.c.b16 %v3474, %v3473
    %v3524 = vpack.c.b16 %v3476, %v3475
    %v3525 = vpack.c.b16 %v3478, %v3477
    %v3526 = vpack.c.b16 %v3480, %v3479
    %v3527 = vpack.c.b16 %v3482, %v3481
    %v3528 = vpack.c.b16 %v3484, %v3483
    %v3529 = vpack.c.b16 %v3486, %v3485
    %v3530 = vpack.c.b16 %v3488, %v3487
    %v3531 = vpack.c.b16 %v3490, %v3489
    %v3532 = vpack.c.b16 %v3492, %v3491
    %v3533 = vpack.c.b16 %v3494, %v3493
    %v3534 = vpack.c.b16 %v3496, %v3495
    %v3535 = vpack.c.b16 %v3498, %v3497
    %v3536 = vpack.c.b16 %v3500, %v3499
    %v3537 = vpack.c.b16 %v3502, %v3501
    %v3538 = vpack.c.b16 %v3504, %v3503
    %v3539 = vpack.c.b16 %v3506, %v3505
    %v3540 = vpack.c.b16 %v3508, %v3507
    %3573 = vmatprep.subr.bf16.mxu0 0
    %3574 = vmatpush1.bf16.msra.mxu0 %v3516
    %3575 = vmatprep.subr.bf16.mxu0 0
    %3576 = vmatpush1.bf16.msra.mxu0 %v3515
    %3577 = vmatprep.subr.bf16.mxu0 0
    %3578 = vmatpush1.bf16.msra.mxu0 %v3514
    %3579 = vmatprep.subr.bf16.mxu0 0
    %3580 = vmatpush1.bf16.msra.mxu0 %v3513
    %3581 = vmatprep.subr.bf16.mxu0 0
    %3582 = vmatpush1.bf16.msra.mxu0 %v3512
    %3583 = vmatprep.subr.bf16.mxu0 0
    %3584 = vmatpush1.bf16.msra.mxu0 %v3511
    %3585 = vmatprep.subr.bf16.mxu0 0
    %3586 = vmatpush1.bf16.msra.mxu0 %v3510
    %3587 = vmatprep.subr.bf16.mxu0 0
    %3588 = vmatpush1.bf16.msra.mxu0 %v3509
    %3589 = vmatprep.subr.bf16.mxu0 0
    %3590 = vmatpush2.bf16.msra.mxu0 %v3524
    %3591 = vmatprep.subr.bf16.mxu0 0
    %3592 = vmatpush2.bf16.msra.mxu0 %v3523
    %3593 = vmatprep.subr.bf16.mxu0 0
    %3594 = vmatpush2.bf16.msra.mxu0 %v3522
    %3595 = vmatprep.subr.bf16.mxu0 0
    %3596 = vmatpush2.bf16.msra.mxu0 %v3521
    %3597 = vmatprep.subr.bf16.mxu0 0
    %3598 = vmatpush2.bf16.msra.mxu0 %v3520
    %3599 = vmatprep.subr.bf16.mxu0 0
    %3600 = vmatpush2.bf16.msra.mxu0 %v3519
    %3601 = vmatprep.subr.bf16.mxu0 0
    %3602 = vmatpush2.bf16.msra.mxu0 %v3518
    %3603 = vmatprep.subr.bf16.mxu0 0
    %3604 = vmatpush2.bf16.msra.mxu0 %v3517
    %3605 = vmatprep.mubr.bf16.mxu0 %v3303
    %3606 = vmatmul.mubr.bf16.gmra.mxu0 %v3302
    %v3607 = vpop.f32.mrf.mxu0
    %v3608 = vadd.f32 %v3379, %v3607
    %v3609 = vpop.f32.mrf.mxu0
    %v3610 = vpop.f32.mrf.mxu0
    %v3611 = vpop.f32.mrf.mxu0
    %3612 = vdwg.mxu0
    %3613 = vmatprep.subr.bf16.mxu0 0
    %3614 = vmatpush1.bf16.msra.mxu0 %v3532
    %3615 = vmatprep.subr.bf16.mxu0 0
    %3616 = vmatpush1.bf16.msra.mxu0 %v3531
    %3617 = vmatprep.subr.bf16.mxu0 0
    %3618 = vmatpush1.bf16.msra.mxu0 %v3530
    %3619 = vmatprep.subr.bf16.mxu0 0
    %3620 = vmatpush1.bf16.msra.mxu0 %v3529
    %3621 = vmatprep.subr.bf16.mxu0 0
    %3622 = vmatpush1.bf16.msra.mxu0 %v3528
    %3623 = vmatprep.subr.bf16.mxu0 0
    %3624 = vmatpush1.bf16.msra.mxu0 %v3527
    %3625 = vmatprep.subr.bf16.mxu0 0
    %3626 = vmatpush1.bf16.msra.mxu0 %v3526
    %3627 = vmatprep.subr.bf16.mxu0 0
    %3628 = vmatpush1.bf16.msra.mxu0 %v3525
    %3629 = vmatprep.subr.bf16.mxu0 0
    %3630 = vmatpush2.bf16.msra.mxu0 %v3540
    %3631 = vmatprep.subr.bf16.mxu0 0
    %3632 = vmatpush2.bf16.msra.mxu0 %v3539
    %3633 = vmatprep.subr.bf16.mxu0 0
    %3634 = vmatpush2.bf16.msra.mxu0 %v3538
    %3635 = vmatprep.subr.bf16.mxu0 0
    %3636 = vmatpush2.bf16.msra.mxu0 %v3537
    %3637 = vmatprep.subr.bf16.mxu0 0
    %3638 = vmatpush2.bf16.msra.mxu0 %v3536
    %3639 = vmatprep.subr.bf16.mxu0 0
    %3640 = vmatpush2.bf16.msra.mxu0 %v3535
    %3641 = vmatprep.subr.bf16.mxu0 0
    %3642 = vmatpush2.bf16.msra.mxu0 %v3534
    %3643 = vmatprep.subr.bf16.mxu0 0
    %3644 = vmatpush2.bf16.msra.mxu0 %v3533
    %3645 = vmatprep.mubr.bf16.mxu0 %v3305
    %3646 = vmatmul.mubr.bf16.gmra.mxu0 %v3304
    %v3647 = vpop.f32.mrf.mxu0
    %v3648 = vadd.f32 %v3608, %v3647
    %v3649 = vpop.f32.mrf.mxu0
    %v3650 = vpop.f32.mrf.mxu0
    %v3651 = vpop.f32.mrf.mxu0
    %3652 = vdwg.mxu0
    %v3653 = vld [vmem:[#allocation11] sm:$0xf]
    %v3654 = vld [vmem:[#allocation11 + $0x4] sm:$0xf]
    %v3655 = vld [vmem:[#allocation11 + $0x8] sm:$0xf]
    %v3656 = vld [vmem:[#allocation11 + $0xc] sm:$0xf]
    %v3657 = vld [vmem:[#allocation11 + $0x10] sm:$0xf]
    %v3658 = vld [vmem:[#allocation11 + $0x14] sm:$0xf]
    %v3659 = vld [vmem:[#allocation11 + $0x18] sm:$0xf]
    %v3660 = vld [vmem:[#allocation11 + $0x1c] sm:$0xf]
    %v3661 = vld [vmem:[#allocation11 + $0x20] sm:$0xf]
    %v3662 = vld [vmem:[#allocation11 + $0x24] sm:$0xf]
    %v3663 = vld [vmem:[#allocation11 + $0x28] sm:$0xf]
    %v3664 = vld [vmem:[#allocation11 + $0x2c] sm:$0xf]
    %v3665 = vld [vmem:[#allocation11 + $0x30] sm:$0xf]
    %v3666 = vld [vmem:[#allocation11 + $0x34] sm:$0xf]
    %v3667 = vld [vmem:[#allocation11 + $0x38] sm:$0xf]
    %v3668 = vld [vmem:[#allocation11 + $0x3c] sm:$0xf]
    %v3669 = vld [vmem:[#allocation11 + $0x40] sm:$0xf]
    %v3670 = vld [vmem:[#allocation11 + $0x44] sm:$0xf]
    %v3671 = vld [vmem:[#allocation11 + $0x48] sm:$0xf]
    %v3672 = vld [vmem:[#allocation11 + $0x4c] sm:$0xf]
    %v3673 = vld [vmem:[#allocation11 + $0x50] sm:$0xf]
    %v3674 = vld [vmem:[#allocation11 + $0x54] sm:$0xf]
    %v3675 = vld [vmem:[#allocation11 + $0x58] sm:$0xf]
    %v3676 = vld [vmem:[#allocation11 + $0x5c] sm:$0xf]
    %v3677 = vld [vmem:[#allocation11 + $0x60] sm:$0xf]
    %v3678 = vld [vmem:[#allocation11 + $0x64] sm:$0xf]
    %v3679 = vld [vmem:[#allocation11 + $0x68] sm:$0xf]
    %v3680 = vld [vmem:[#allocation11 + $0x6c] sm:$0xf]
    %v3681 = vld [vmem:[#allocation11 + $0x70] sm:$0xf]
    %v3682 = vld [vmem:[#allocation11 + $0x74] sm:$0xf]
    %v3683 = vld [vmem:[#allocation11 + $0x78] sm:$0xf]
    %v3684 = vld [vmem:[#allocation11 + $0x7c] sm:$0xf]
    %v3685 = vld [vmem:[#allocation11 + $0x80] sm:$0xf]
    %v3686 = vld [vmem:[#allocation11 + $0x84] sm:$0xf]
    %v3687 = vld [vmem:[#allocation11 + $0x88] sm:$0xf]
    %v3688 = vld [vmem:[#allocation11 + $0x8c] sm:$0xf]
    %v3689 = vld [vmem:[#allocation11 + $0x90] sm:$0xf]
    %v3690 = vld [vmem:[#allocation11 + $0x94] sm:$0xf]
    %v3691 = vld [vmem:[#allocation11 + $0x98] sm:$0xf]
    %v3692 = vld [vmem:[#allocation11 + $0x9c] sm:$0xf]
    %v3693 = vld [vmem:[#allocation11 + $0xa0] sm:$0xf]
    %v3694 = vld [vmem:[#allocation11 + $0xa4] sm:$0xf]
    %v3695 = vld [vmem:[#allocation11 + $0xa8] sm:$0xf]
    %v3696 = vld [vmem:[#allocation11 + $0xac] sm:$0xf]
    %v3697 = vld [vmem:[#allocation11 + $0xb0] sm:$0xf]
    %v3698 = vld [vmem:[#allocation11 + $0xb4] sm:$0xf]
    %v3699 = vld [vmem:[#allocation11 + $0xb8] sm:$0xf]
    %v3700 = vld [vmem:[#allocation11 + $0xbc] sm:$0xf]
    %v3701 = vld [vmem:[#allocation11 + $0xc0] sm:$0xf]
    %v3702 = vld [vmem:[#allocation11 + $0xc4] sm:$0xf]
    %v3703 = vld [vmem:[#allocation11 + $0xc8] sm:$0xf]
    %v3704 = vld [vmem:[#allocation11 + $0xcc] sm:$0xf]
    %v3705 = vld [vmem:[#allocation11 + $0xd0] sm:$0xf]
    %v3706 = vld [vmem:[#allocation11 + $0xd4] sm:$0xf]
    %v3707 = vld [vmem:[#allocation11 + $0xd8] sm:$0xf]
    %v3708 = vld [vmem:[#allocation11 + $0xdc] sm:$0xf]
    %v3709 = vld [vmem:[#allocation11 + $0xe0] sm:$0xf]
    %v3710 = vld [vmem:[#allocation11 + $0xe4] sm:$0xf]
    %v3711 = vld [vmem:[#allocation11 + $0xe8] sm:$0xf]
    %v3712 = vld [vmem:[#allocation11 + $0xec] sm:$0xf]
    %v3713 = vld [vmem:[#allocation11 + $0xf0] sm:$0xf]
    %v3714 = vld [vmem:[#allocation11 + $0xf4] sm:$0xf]
    %v3715 = vld [vmem:[#allocation11 + $0xf8] sm:$0xf]
    %v3716 = vld [vmem:[#allocation11 + $0xfc] sm:$0xf]
    %v3717 = vld [vmem:[%s8] sm:$0x1]
    %v3719 = vlaneseq
    %v3720 = vshrl.u32 %v3719, 7
    %v3721 = vsub.s32 0, %v3720
    %v3722 = vrot.slane %v3717, %v3721
    %v3788 = vunpack.c.l.b16 %v3653
    %v3789 = vunpack.c.l.b16 %v3654
    %v3790 = vunpack.c.l.b16 %v3655
    %v3791 = vunpack.c.l.b16 %v3656
    %v3792 = vunpack.c.l.b16 %v3657
    %v3793 = vunpack.c.l.b16 %v3658
    %v3794 = vunpack.c.l.b16 %v3659
    %v3795 = vunpack.c.l.b16 %v3660
    %v3796 = vunpack.c.l.b16 %v3661
    %v3797 = vunpack.c.l.b16 %v3662
    %v3798 = vunpack.c.l.b16 %v3663
    %v3799 = vunpack.c.l.b16 %v3664
    %v3800 = vunpack.c.l.b16 %v3665
    %v3801 = vunpack.c.l.b16 %v3666
    %v3802 = vunpack.c.l.b16 %v3667
    %v3803 = vunpack.c.l.b16 %v3668
    %v3804 = vunpack.c.l.b16 %v3669
    %v3805 = vunpack.c.l.b16 %v3670
    %v3806 = vunpack.c.l.b16 %v3671
    %v3807 = vunpack.c.l.b16 %v3672
    %v3808 = vunpack.c.l.b16 %v3673
    %v3809 = vunpack.c.l.b16 %v3674
    %v3810 = vunpack.c.l.b16 %v3675
    %v3811 = vunpack.c.l.b16 %v3676
    %v3812 = vunpack.c.l.b16 %v3677
    %v3813 = vunpack.c.l.b16 %v3678
    %v3814 = vunpack.c.l.b16 %v3679
    %v3815 = vunpack.c.l.b16 %v3680
    %v3816 = vunpack.c.l.b16 %v3681
    %v3817 = vunpack.c.l.b16 %v3682
    %v3818 = vunpack.c.l.b16 %v3683
    %v3819 = vunpack.c.l.b16 %v3684
    %v3820 = vunpack.c.l.b16 %v3685
    %v3821 = vunpack.c.l.b16 %v3686
    %v3822 = vunpack.c.l.b16 %v3687
    %v3823 = vunpack.c.l.b16 %v3688
    %v3824 = vunpack.c.l.b16 %v3689
    %v3825 = vunpack.c.l.b16 %v3690
    %v3826 = vunpack.c.l.b16 %v3691
    %v3827 = vunpack.c.l.b16 %v3692
    %v3828 = vunpack.c.l.b16 %v3693
    %v3829 = vunpack.c.l.b16 %v3694
    %v3830 = vunpack.c.l.b16 %v3695
    %v3831 = vunpack.c.l.b16 %v3696
    %v3832 = vunpack.c.l.b16 %v3697
    %v3833 = vunpack.c.l.b16 %v3698
    %v3834 = vunpack.c.l.b16 %v3699
    %v3835 = vunpack.c.l.b16 %v3700
    %v3836 = vunpack.c.l.b16 %v3701
    %v3837 = vunpack.c.l.b16 %v3702
    %v3838 = vunpack.c.l.b16 %v3703
    %v3839 = vunpack.c.l.b16 %v3704
    %v3840 = vunpack.c.l.b16 %v3705
    %v3841 = vunpack.c.l.b16 %v3706
    %v3842 = vunpack.c.l.b16 %v3707
    %v3843 = vunpack.c.l.b16 %v3708
    %v3844 = vunpack.c.l.b16 %v3709
    %v3845 = vunpack.c.l.b16 %v3710
    %v3846 = vunpack.c.l.b16 %v3711
    %v3847 = vunpack.c.l.b16 %v3712
    %v3848 = vunpack.c.l.b16 %v3713
    %v3849 = vunpack.c.l.b16 %v3714
    %v3850 = vunpack.c.l.b16 %v3715
    %v3851 = vunpack.c.l.b16 %v3716
    %v3852 = vpack.c.b16 %v3789, %v3788
    %v3853 = vpack.c.b16 %v3791, %v3790
    %v3854 = vpack.c.b16 %v3793, %v3792
    %v3855 = vpack.c.b16 %v3795, %v3794
    %v3856 = vpack.c.b16 %v3797, %v3796
    %v3857 = vpack.c.b16 %v3799, %v3798
    %v3858 = vpack.c.b16 %v3801, %v3800
    %v3859 = vpack.c.b16 %v3803, %v3802
    %v3860 = vpack.c.b16 %v3805, %v3804
    %v3861 = vpack.c.b16 %v3807, %v3806
    %v3862 = vpack.c.b16 %v3809, %v3808
    %v3863 = vpack.c.b16 %v3811, %v3810
    %v3864 = vpack.c.b16 %v3813, %v3812
    %v3865 = vpack.c.b16 %v3815, %v3814
    %v3866 = vpack.c.b16 %v3817, %v3816
    %v3867 = vpack.c.b16 %v3819, %v3818
    %v3868 = vpack.c.b16 %v3821, %v3820
    %v3869 = vpack.c.b16 %v3823, %v3822
    %v3870 = vpack.c.b16 %v3825, %v3824
    %v3871 = vpack.c.b16 %v3827, %v3826
    %v3872 = vpack.c.b16 %v3829, %v3828
    %v3873 = vpack.c.b16 %v3831, %v3830
    %v3874 = vpack.c.b16 %v3833, %v3832
    %v3875 = vpack.c.b16 %v3835, %v3834
    %v3876 = vpack.c.b16 %v3837, %v3836
    %v3877 = vpack.c.b16 %v3839, %v3838
    %v3878 = vpack.c.b16 %v3841, %v3840
    %v3879 = vpack.c.b16 %v3843, %v3842
    %v3880 = vpack.c.b16 %v3845, %v3844
    %v3881 = vpack.c.b16 %v3847, %v3846
    %v3882 = vpack.c.b16 %v3849, %v3848
    %v3883 = vpack.c.b16 %v3851, %v3850
    %3916 = vmatprep.subr.bf16.mxu0 0
    %3917 = vmatpush1.bf16.msra.mxu0 %v3859
    %3918 = vmatprep.subr.bf16.mxu0 0
    %3919 = vmatpush1.bf16.msra.mxu0 %v3858
    %3920 = vmatprep.subr.bf16.mxu0 0
    %3921 = vmatpush1.bf16.msra.mxu0 %v3857
    %3922 = vmatprep.subr.bf16.mxu0 0
    %3923 = vmatpush1.bf16.msra.mxu0 %v3856
    %3924 = vmatprep.subr.bf16.mxu0 0
    %3925 = vmatpush1.bf16.msra.mxu0 %v3855
    %3926 = vmatprep.subr.bf16.mxu0 0
    %3927 = vmatpush1.bf16.msra.mxu0 %v3854
    %3928 = vmatprep.subr.bf16.mxu0 0
    %3929 = vmatpush1.bf16.msra.mxu0 %v3853
    %3930 = vmatprep.subr.bf16.mxu0 0
    %3931 = vmatpush1.bf16.msra.mxu0 %v3852
    %3932 = vmatprep.subr.bf16.mxu0 0
    %3933 = vmatpush2.bf16.msra.mxu0 %v3867
    %3934 = vmatprep.subr.bf16.mxu0 0
    %3935 = vmatpush2.bf16.msra.mxu0 %v3866
    %3936 = vmatprep.subr.bf16.mxu0 0
    %3937 = vmatpush2.bf16.msra.mxu0 %v3865
    %3938 = vmatprep.subr.bf16.mxu0 0
    %3939 = vmatpush2.bf16.msra.mxu0 %v3864
    %3940 = vmatprep.subr.bf16.mxu0 0
    %3941 = vmatpush2.bf16.msra.mxu0 %v3863
    %3942 = vmatprep.subr.bf16.mxu0 0
    %3943 = vmatpush2.bf16.msra.mxu0 %v3862
    %3944 = vmatprep.subr.bf16.mxu0 0
    %3945 = vmatpush2.bf16.msra.mxu0 %v3861
    %3946 = vmatprep.subr.bf16.mxu0 0
    %3947 = vmatpush2.bf16.msra.mxu0 %v3860
    %3948 = vmatprep.mubr.bf16.mxu0 %v3307
    %3949 = vmatmul.mubr.bf16.gmra.mxu0 %v3306
    %v3950 = vpop.f32.mrf.mxu0
    %v3951 = vadd.f32 %v3722, %v3950
    %v3952 = vpop.f32.mrf.mxu0
    %v3953 = vpop.f32.mrf.mxu0
    %v3954 = vpop.f32.mrf.mxu0
    %3955 = vdwg.mxu0
    %3956 = vmatprep.subr.bf16.mxu0 0
    %3957 = vmatpush1.bf16.msra.mxu0 %v3875
    %3958 = vmatprep.subr.bf16.mxu0 0
    %3959 = vmatpush1.bf16.msra.mxu0 %v3874
    %3960 = vmatprep.subr.bf16.mxu0 0
    %3961 = vmatpush1.bf16.msra.mxu0 %v3873
    %3962 = vmatprep.subr.bf16.mxu0 0
    %3963 = vmatpush1.bf16.msra.mxu0 %v3872
    %3964 = vmatprep.subr.bf16.mxu0 0
    %3965 = vmatpush1.bf16.msra.mxu0 %v3871
    %3966 = vmatprep.subr.bf16.mxu0 0
    %3967 = vmatpush1.bf16.msra.mxu0 %v3870
    %3968 = vmatprep.subr.bf16.mxu0 0
    %3969 = vmatpush1.bf16.msra.mxu0 %v3869
    %3970 = vmatprep.subr.bf16.mxu0 0
    %3971 = vmatpush1.bf16.msra.mxu0 %v3868
    %3972 = vmatprep.subr.bf16.mxu0 0
    %3973 = vmatpush2.bf16.msra.mxu0 %v3883
    %3974 = vmatprep.subr.bf16.mxu0 0
    %3975 = vmatpush2.bf16.msra.mxu0 %v3882
    %3976 = vmatprep.subr.bf16.mxu0 0
    %3977 = vmatpush2.bf16.msra.mxu0 %v3881
    %3978 = vmatprep.subr.bf16.mxu0 0
    %3979 = vmatpush2.bf16.msra.mxu0 %v3880
    %3980 = vmatprep.subr.bf16.mxu0 0
    %3981 = vmatpush2.bf16.msra.mxu0 %v3879
    %3982 = vmatprep.subr.bf16.mxu0 0
    %3983 = vmatpush2.bf16.msra.mxu0 %v3878
    %3984 = vmatprep.subr.bf16.mxu0 0
    %3985 = vmatpush2.bf16.msra.mxu0 %v3877
    %3986 = vmatprep.subr.bf16.mxu0 0
    %3987 = vmatpush2.bf16.msra.mxu0 %v3876
    %3988 = vmatprep.mubr.bf16.mxu0 %v3309
    %3989 = vmatmul.mubr.bf16.gmra.mxu0 %v3308
    %v3990 = vpop.f32.mrf.mxu0
    %v3991 = vadd.f32 %v3951, %v3990
    %v3992 = vpop.f32.mrf.mxu0
    %v3993 = vpop.f32.mrf.mxu0
    %v3994 = vpop.f32.mrf.mxu0
    %3995 = vdwg.mxu0
    %v3996 = vmax.f32 %v3991, 0.0
    %v3997 = vrsqrt.pop %v3996
    %v3998 = vmul.f32 %v3996, %v3997
    %vm3999 = vcmp.eq.f32.partialorder %v3996, inf
    %v4000 = vsel %vm3999, %v3996, %v3998
    %vm4001 = vcmp.eq.f32.partialorder %v3996, 0.0
    %v4002 = vand.u32 %v3996, 2147483648
    %v4003 = vsel %vm4001, %v4002, %v4000
    %v4004 = vld [vmem:[%s10] sm:$0x3]
    %v4005 = vmul.f32 %v4003, %v4004
    %v4006 = vadd.f32 %v3648, %v4005
    %vm4007 = vcmask 1041408
    %v4008 = vsel %vm4007, %v4006, -inf
    %4009 = vmax.xlane.f32.xlu0 %v4008
    %v4010 = vpop.xlane.xlu0 %4009
    %v4011 = vsub.f32 %v4006, %v4010
    %v4012 = vmul.f32 %v4011, 1.442695
    %v4013 = vpow.pop %v4012
    %v4014 = vsel %vm4007, %v4013, 0.0
    %4015 = vadd.xlane.f32.xlu0 %v4014
    %v4016 = vpop.xlane.xlu0 %4015
    %v4017 = vlog2.pop %v4016
    %v4018 = vmul.f32 %v4017, 0.6931472
    %v4019 = vadd.f32 %v4018, %v4010
    %v4020 = vsub.f32 %v4006, %v4019
    %4021 = vst [vmem:[#allocation13] sm:$0x3] %v4020
    // Predicated region
    $region70: #{tpu_custom_call.1} parent=1 // pred_check
      _
    $region71: #{tpu_custom_call.1} parent=1 // pred_check_branch
      %4023 = sbr.rel (0) target = $region73
    $region72: #{tpu_custom_call.1} parent=1 // pred_region
      %s4025 = ssub.s32 32, 32
      %4026 = vsyncadd [#allocation4], %s4025
      %s4028 = sshll.u32 [#allocation13], 4
      %s4029 = int_to_ptr.vmem [resolvable:$true] %s4028
      %4031 = dma.vmem_to_hbm [thread:$0]  %s4029, 32, %s11, [#allocation4]
    $region73: #{tpu_custom_call.1} parent=1 // pred_fallthru
      _
    // Predicated region
    $region74: #{tpu_custom_call.1} parent=1 // pred_check
      _
    $region75: #{tpu_custom_call.1} parent=1 // pred_check_branch
      %4033 = sbr.rel (0) target = $region77
    $region76: #{tpu_custom_call.1} parent=1 // pred_region
      %4034 = dma.done [#allocation4], 32
    $region77: #{tpu_custom_call.1} parent=1 // pred_fallthru
      _
    %4035 = vsyncpa [#allocation3], 1
    %4036 = vsyncpa [#allocation6], 1
    %4037 = vsyncpa [#allocation9], 1
    %4038 = vsyncpa [#allocation12], 1
    %4039 = vsyncpa [#allocation4], 1

</llo_original>
